<compile_context>
chip_gen: v6e
topology: v6e:2x2x1
jax: 0.10.0
libtpu: 0.0.40
codegen_flags: <defaults>
</compile_context>

<pallas_src>
import jax
import jax.numpy as jnp
from jax import lax
from jax.experimental import pallas as pl
from jax.experimental.pallas import tpu as pltpu

# ---------------- small synthetic configuration ----------------
B = 2            # batch
T = 4            # decode steps (= frames.shape[1] in eval mode)
TC = 2           # decode steps per decoder grid chunk (T % TC == 0)
L = 8            # language sequence length
DHID = 32        # decoder hidden size (== enc feature dim)
DFRAME = 16      # visual feature dim
DEMB = 16        # action embedding dim
VOCAB = 12       # action vocabulary
CIN, C1, C2 = 32, 16, 8      # visual encoder channels (ALFRED: 512,256,64)
H = W = 7
HW = H * W
BHW = B * HW
FVIS = C2 * HW               # flattened visual feature (ALFRED: 64*7*7)
HC, HH, HWm = 8, 7, 7        # MaskDecoder hshape
HDIM = HC * HH * HWm         # 392
PFRAME = 128                 # output mask resolution (ALFRED: 300)
DINP = DHID + DFRAME + DEMB            # 64
DCONT = DHID + DINP                    # 96
# lane-aligned fused-head slab layout (all boundaries are multiples of 128):
SLAB_SG = 0                  # subgoal  -> col 0     (sigmoid block [0,128))
SLAB_PR = 1                  # progress -> col 1
SLAB_LOGIT = 128             # action logits -> cols [128,128+VOCAB)  (identity block)
SLAB_MASK = 256              # mask_dec.d1   -> cols [256,256+HDIM)   (relu block)
NHP = 768                    # slab width (256 + HDIM=392, padded up to 6*128)
EPS = 1e-5
assert T % TC == 0
assert SLAB_MASK + HDIM <= NHP


# ============ Pallas kernel 1: visual encoder 1x1 convs (single block) ============
def vis_conv_kernel(x_ref, w1_ref, b1_ref, w2_ref, b2_ref, o_ref):
    # x: (T*B*H*W, CIN) channels-last pixel rows, already bf16.  Conv bias + BN are
    # pre-folded into (w, b); f32 accumulate, f32 relu, bf16 store (feeds a matmul).
    h = jnp.dot(x_ref[...], w1_ref[...], preferred_element_type=jnp.float32) + b1_ref[...]
    h = jnp.maximum(h, 0.0)
    h = jnp.dot(h.astype(jnp.bfloat16), w2_ref[...],
                preferred_element_type=jnp.float32) + b2_ref[...]
    o_ref[...] = jnp.maximum(h, 0.0).astype(o_ref.dtype)


def vis_encoder_convs(x, p):
    # One block over all T*B*H*W rows (T-grid collapsed away at toy size).
    # TODO(synk): at real ALFRED sizes tile this with a >=2-block "parallel" grid so both
    # v7x TensorCores get work and each block fits the 32 MiB scoped-VMEM default.
    return pl.pallas_call(
        vis_conv_kernel,
        out_shape=jax.ShapeDtypeStruct((T * BHW, C2), jnp.bfloat16),
    )(x, p['conv1_w'], p['conv1_b'], p['conv2_w'], p['conv2_b'])


# ============ Pallas kernel 1b: visual fc + relu (hoisted out of the decoder) ============
def vis_fc_kernel(x_ref, w_ref, b_ref, o_ref):
    h = jnp.dot(x_ref[...], w_ref[...], preferred_element_type=jnp.float32) + b_ref[...]
    o_ref[...] = jnp.maximum(h, 0.0).astype(o_ref.dtype)


def vis_encoder_fc(x, p):
    # One MXU matmul over all T*B rows; the decoder then only sees (T, B, DFRAME).
    return pl.pallas_call(
        vis_fc_kernel,
        out_shape=jax.ShapeDtypeStruct((T * B, DFRAME), jnp.bfloat16),
    )(x, p['vis_fc_w'], p['vis_fc_b'])


# ================= Pallas kernel 2: recurrent decoder (grid over T-chunks) ==============
def decoder_kernel(vis_ref, enc_ref, hfcw_ref, hfcb_ref,
                   lwv_ref, lwl_ref, lwe_ref, lwh_ref, lb_ref,
                   hwh_ref, hwv_ref, hwl_ref, hwe_ref, hb_ref,
                   embw_ref, go_ref, h0_ref, c0_ref,
                   slab_ref, attn_ref, h_out, c_out,
                   e_scr):
    c_idx = pl.program_id(0)

    @pl.when(c_idx == 0)
    def _():
        h_out[...] = h0_ref[...]
        c_out[...] = c0_ref[...]
        e_scr[...] = jnp.broadcast_to(go_ref[...], (B, DEMB))     # go token

    enc = enc_ref[...]                                            # (B, L, DHID) f32
    viota = lax.broadcasted_iota(jnp.int32, (B, VOCAB), 1)

    h_t = h_out[...]
    c_t = c_out[...]
    e_t = e_scr[...]

    for i in range(TC):                                           # fully unrolled chunk
        vis_b = vis_ref[i]                                        # (B, DFRAME) bf16

        # --- DotAttn over the language encoding (f32 VPU/EUP math) ---
        hq = jnp.dot(h_t.astype(jnp.bfloat16), hfcw_ref[...],
                     preferred_element_type=jnp.float32) + hfcb_ref[...]
        raw = jnp.sum(enc * hq[:, None, :], axis=-1)              # (B, L)
        m = jnp.max(raw, axis=-1, keepdims=True)
        pexp = jnp.exp(raw - m)
        denom = jnp.sum(pexp, axis=-1, keepdims=True)
        score = pexp * pl.reciprocal(denom, approx=True)          # softmax scores (B, L)
        weighted = jnp.sum(enc * score[:, :, None], axis=1)       # (B, DHID) f32

        lang_b = weighted.astype(jnp.bfloat16)
        e_b = e_t.astype(jnp.bfloat16)
        h_b = h_t.astype(jnp.bfloat16)

        # --- LSTMCell via split matmuls (no lane concat), gate order i,f,g,o ---
        gates = (jnp.dot(vis_b, lwv_ref[...], preferred_element_type=jnp.float32)
                 + jnp.dot(lang_b, lwl_ref[...], preferred_element_type=jnp.float32)
                 + jnp.dot(e_b, lwe_ref[...], preferred_element_type=jnp.float32)
                 + jnp.dot(h_b, lwh_ref[...], preferred_element_type=jnp.float32)
                 + lb_ref[...])
        i_g = jax.nn.sigmoid(gates[:, 0:DHID])
        f_g = jax.nn.sigmoid(gates[:, DHID:2 * DHID])
        g_g = jnp.tanh(gates[:, 2 * DHID:3 * DHID])
        o_g = jax.nn.sigmoid(gates[:, 3 * DHID:4 * DHID])
        c_t = f_g * c_t + i_g * g_g
        h_t = o_g * jnp.tanh(c_t)

        # --- fused heads over cont = [h | vis | weighted | e] via split matmuls ---
        head = (jnp.dot(h_t.astype(jnp.bfloat16), hwh_ref[...],
                        preferred_element_type=jnp.float32)
                + jnp.dot(vis_b, hwv_ref[...], preferred_element_type=jnp.float32)
                + jnp.dot(lang_b, hwl_ref[...], preferred_element_type=jnp.float32)
                + jnp.dot(e_b, hwe_ref[...], preferred_element_type=jnp.float32)
                + hb_ref[...])                                    # (B, NHP)

        # lane-aligned, unmasked per-region stores (no 504-offset concat):
        #   [0,128)    sigmoid block (subgoal, progress at cols 0,1)
        #   [128,256)  identity block (action logits at cols 128..128+VOCAB)
        #   [256,NHP)  relu block (mask_dec.d1 at cols 256..256+HDIM)
        slab_ref[i, :, 0:SLAB_LOGIT] = jax.nn.sigmoid(head[:, 0:SLAB_LOGIT])
        slab_ref[i, :, SLAB_LOGIT:SLAB_MASK] = head[:, SLAB_LOGIT:SLAB_MASK]
        slab_ref[i, :, SLAB_MASK:NHP] = jnp.maximum(head[:, SLAB_MASK:NHP], 0.0)
        attn_ref[i] = score

        # --- greedy decoding: e_{t+1} = emb[argmax(logits)] via one-hot matmul ---
        logits = head[:, SLAB_LOGIT:SLAB_LOGIT + VOCAB]
        maxv = jnp.max(logits, axis=-1, keepdims=True)
        cand = jnp.where(logits == maxv, viota, VOCAB)
        first_idx = jnp.min(cand, axis=-1, keepdims=True)          # torch first-index tie-break
        onehot = (viota == first_idx).astype(jnp.bfloat16)
        e_t = jnp.dot(onehot, embw_ref[...], preferred_element_type=jnp.float32)

    h_out[...] = h_t
    c_out[...] = c_t
    e_scr[...] = e_t


def _const_spec(shape):
    nd = len(shape)
    return pl.BlockSpec(shape, lambda c, _nd=nd: (0,) * _nd)


def run_decoder(enc, vis_feat, p, h0, c0):
    nchunk = T // TC
    in_specs = [
        pl.BlockSpec((TC, B, DFRAME), lambda c: (c, 0, 0)),       # vis features per chunk
        _const_spec((B, L, DHID)),                                # enc
        _const_spec((DHID, DHID)), _const_spec((1, DHID)),        # h_tm1_fc
        _const_spec((DFRAME, 4 * DHID)), _const_spec((DHID, 4 * DHID)),
        _const_spec((DEMB, 4 * DHID)), _const_spec((DHID, 4 * DHID)),
        _const_spec((1, 4 * DHID)),                               # LSTM (split)
        _const_spec((DHID, NHP)), _const_spec((DFRAME, NHP)),
        _const_spec((DHID, NHP)), _const_spec((DEMB, NHP)),
        _const_spec((1, NHP)),                                    # heads (split)
        _const_spec((VOCAB, DEMB)), _const_spec((1, DEMB)),       # emb, go
        _const_spec((B, DHID)), _const_spec((B, DHID)),           # h0, c0
    ]
    out_specs = [
        pl.BlockSpec((TC, B, NHP), lambda c: (c, 0, 0)),          # head slab streams per chunk
        pl.BlockSpec((TC, B, L), lambda c: (c, 0, 0)),            # attn scores stream per chunk
        _const_spec((B, DHID)),                                   # h_T (resident accumulator)
        _const_spec((B, DHID)),                                   # c_T (resident accumulator)
    ]
    out_shapes = (
        jax.ShapeDtypeStruct((T, B, NHP), jnp.float32),
        jax.ShapeDtypeStruct((T, B, L), jnp.float32),
        jax.ShapeDtypeStruct((B, DHID), jnp.float32),
        jax.ShapeDtypeStruct((B, DHID), jnp.float32),
    )
    return pl.pallas_call(
        decoder_kernel,
        out_shape=out_shapes,
        grid_spec=pltpu.PrefetchScalarGridSpec(
            num_scalar_prefetch=0,
            grid=(nchunk,),
            in_specs=in_specs,
            out_specs=out_specs,
            scratch_shapes=[pltpu.VMEM((B, DEMB), jnp.float32)],  # e_t carry
        ),
        compiler_params=pltpu.CompilerParams(
            dimension_semantics=("arbitrary",)),                  # serial recurrence
    )(vis_feat, enc,
      p['hfc_w'], p['hfc_b'],
      p['lw_v'], p['lw_l'], p['lw_e'], p['lw_h'], p['lstm_b'],
      p['hw_h'], p['hw_v'], p['hw_l'], p['hw_e'], p['head_b'],
      p['emb_w'], p['go'], h0, c0)


# ================= plain-JAX glue: MaskDecoder spatial path =================
def conv_transpose_nchw(x, w, b, stride, padding):
    # PyTorch ConvTranspose2d weight w: (Cin, Cout, k, k)
    k = w.shape[2]
    w_conv = jnp.flip(w, axis=(2, 3)).transpose(1, 0, 2, 3)       # (Cout, Cin, k, k)
    pad = k - 1 - padding
    out = lax.conv_general_dilated(
        x, w_conv, window_strides=(1, 1),
        padding=[(pad, pad), (pad, pad)],
        lhs_dilation=(stride, stride),
        dimension_numbers=('NCHW', 'OIHW', 'NCHW'))
    return out + b.reshape(1, -1, 1, 1)


def mask_decoder_spatial(mask_feat, p):
    # TODO(synk): ConvTranspose2d / nearest-upsample / bilinear resize stay in plain XLA
    # (no clean Pallas equivalent at this size); BN folded into deconv weights at init,
    # d1 + relu already done inside the decoder kernel.
    x = mask_feat.reshape(-1, HC, HH, HWm)
    x = jnp.repeat(jnp.repeat(x, 2, axis=2), 2, axis=3)           # nearest x2
    x = jnp.maximum(conv_transpose_nchw(x, p['dconv3_w'], p['dconv3_b'], 2, 1), 0.0)
    x = jnp.repeat(jnp.repeat(x, 2, axis=2), 2, axis=3)
    x = jnp.maximum(conv_transpose_nchw(x, p['dconv2_w'], p['dconv2_b'], 2, 1), 0.0)
    x = conv_transpose_nchw(x, p['dconv1_w'], p['dconv1_b'], 1, 0)
    x = jax.image.resize(x, (x.shape[0], 1, PFRAME, PFRAME), method='bilinear')
    return x


@jax.jit
def forward(enc, frames, params, state_0):
    """enc: (B,L,DHID); frames: (B,T,CIN,H,W) NCHW per step; state_0: (h0,c0)."""
    # NCHW -> channels-last pixel rows; cast to bf16 in the wrapper (halves the DMA).
    x = jnp.transpose(frames, (1, 0, 3, 4, 2)).reshape(T * BHW, CIN).astype(jnp.bfloat16)
    conv_out = vis_encoder_convs(x, params)                       # (T*B*HW, C2) bf16
    vis_flat = conv_out.reshape(T * B, FVIS)                      # free adjacent-dim merge
    vis_feat = vis_encoder_fc(vis_flat, params).reshape(T, B, DFRAME)
    slab, attn, h_t, c_t = run_decoder(enc, vis_feat, params, state_0[0], state_0[1])
    actions = slab[:, :, SLAB_LOGIT:SLAB_LOGIT + VOCAB]           # (T,B,VOCAB)
    subgoal = slab[:, :, SLAB_SG:SLAB_SG + 1]                     # (T,B,1)
    progress = slab[:, :, SLAB_PR:SLAB_PR + 1]                    # (T,B,1)
    maskfeat = slab[:, :, SLAB_MASK:SLAB_MASK + HDIM]             # (T,B,HDIM)
    masks = mask_decoder_spatial(maskfeat.reshape(T * B, HDIM), params)
    masks = masks.reshape(T, B, 1, PFRAME, PFRAME)
    return {
        'out_action_low': jnp.transpose(actions, (1, 0, 2)),            # (B,T,VOCAB)
        'out_action_low_mask': jnp.transpose(masks, (1, 0, 2, 3, 4)),   # (B,T,1,PF,PF)
        'out_attn_scores': jnp.transpose(attn, (1, 0, 2))[..., None],   # (B,T,L,1)
        'out_subgoal': jnp.transpose(subgoal, (1, 0, 2)),               # (B,T,1)
        'out_progress': jnp.transpose(progress, (1, 0, 2)),             # (B,T,1)
        'state_t': (h_t, c_t),
    }


# ================= deterministic parameter init (host-side folds, bf16 weights) =======
def init_params(key):
    keys = jax.random.split(key, 64)
    kit = iter(keys)

    def rnd(shape, scale=0.1):
        return (scale * jax.random.normal(next(kit), shape)).astype(jnp.float32)

    def bn_fold(gamma, beta):
        mean = jnp.zeros_like(gamma)
        var = jnp.ones_like(gamma)
        scale = gamma / jnp.sqrt(var + EPS)
        shift = beta - mean * scale
        return scale, shift

    p = {}
    emb_w = rnd((VOCAB, DEMB))
    p['emb_w'] = emb_w.astype(jnp.bfloat16)
    p['go'] = jax.random.uniform(next(kit), (1, DEMB), minval=-0.1, maxval=0.1,
                                 dtype=jnp.float32)

    # --- ResnetVisualEncoder: 1x1 convs as (in,out) matmuls, conv bias + BN folded ---
    conv1_w = rnd((C1, CIN)); conv1_b = rnd((C1,))
    s1, sh1 = bn_fold(1.0 + rnd((C1,)), rnd((C1,)))
    p['conv1_w'] = (conv1_w.T * s1[None, :]).astype(jnp.bfloat16)     # (CIN,C1) bf16
    p['conv1_b'] = (conv1_b * s1 + sh1).reshape(1, C1)
    conv2_w = rnd((C2, C1)); conv2_b = rnd((C2,))
    s2, sh2 = bn_fold(1.0 + rnd((C2,)), rnd((C2,)))
    p['conv2_w'] = (conv2_w.T * s2[None, :]).astype(jnp.bfloat16)     # (C1,C2) bf16
    p['conv2_b'] = (conv2_b * s2 + sh2).reshape(1, C2)

    # vis fc: permute rows from channel-major (c*HW+s) to hw-major (s*C2+c) so it
    # directly consumes the conv kernel's channels-last flatten.
    fc_w = rnd((DFRAME, FVIS)).T                                      # (FVIS, DFRAME)
    p['vis_fc_w'] = fc_w.reshape(C2, HW, DFRAME).transpose(1, 0, 2) \
                        .reshape(FVIS, DFRAME).astype(jnp.bfloat16)
    p['vis_fc_b'] = rnd((1, DFRAME))

    # h_tm1_fc
    p['hfc_w'] = rnd((DHID, DHID)).T.astype(jnp.bfloat16)
    p['hfc_b'] = rnd((1, DHID))

    # LSTMCell split by input row-block: inp = [vis | weighted | e_t]; h separate.
    w_ih = rnd((4 * DHID, DINP)); w_hh = rnd((4 * DHID, DHID))
    b_ih = rnd((1, 4 * DHID)); b_hh = rnd((1, 4 * DHID))
    w_ih_t = w_ih.T                                                   # (DINP, 4*DHID)
    p['lw_v'] = w_ih_t[0:DFRAME].astype(jnp.bfloat16)
    p['lw_l'] = w_ih_t[DFRAME:DFRAME + DHID].astype(jnp.bfloat16)
    p['lw_e'] = w_ih_t[DFRAME + DHID:DINP].astype(jnp.bfloat16)
    p['lw_h'] = w_hh.T.astype(jnp.bfloat16)
    p['lstm_b'] = b_ih + b_hh

    # fused output heads in the lane-aligned slab layout:
    #   [0,128)   sigmoid block: subgoal@0, progress@1
    #   [128,256) identity    : action logits (actor@emb^T folded; eval => no dropout)
    #   [256,768) relu        : mask_dec.d1
    actor_w = rnd((DEMB, DCONT)); actor_b = rnd((1, DEMB))
    logits_w = actor_w.T @ emb_w.T                                    # (DCONT, VOCAB)
    logits_b = actor_b @ emb_w.T                                      # (1, VOCAB)
    subgoal_w = rnd((1, DCONT)).T; subgoal_b = rnd((1, 1))
    progress_w = rnd((1, DCONT)).T; progress_b = rnd((1, 1))
    d1_w = rnd((HDIM, DCONT)).T; d1_b = rnd((1, HDIM))

    head_w = jnp.zeros((DCONT, NHP), jnp.float32)
    head_w = head_w.at[:, SLAB_SG:SLAB_SG + 1].set(subgoal_w)
    head_w = head_w.at[:, SLAB_PR:SLAB_PR + 1].set(progress_w)
    head_w = head_w.at[:, SLAB_LOGIT:SLAB_LOGIT + VOCAB].set(logits_w)
    head_w = head_w.at[:, SLAB_MASK:SLAB_MASK + HDIM].set(d1_w)
    head_b = jnp.zeros((1, NHP), jnp.float32)
    head_b = head_b.at[:, SLAB_SG:SLAB_SG + 1].set(subgoal_b)
    head_b = head_b.at[:, SLAB_PR:SLAB_PR + 1].set(progress_b)
    head_b = head_b.at[:, SLAB_LOGIT:SLAB_LOGIT + VOCAB].set(logits_b)
    head_b = head_b.at[:, SLAB_MASK:SLAB_MASK + HDIM].set(d1_b)

    # split by cont rows: cont = [h(DHID) | vis(DFRAME) | weighted(DHID) | e(DEMB)]
    p['hw_h'] = head_w[0:DHID].astype(jnp.bfloat16)
    p['hw_v'] = head_w[DHID:DHID + DFRAME].astype(jnp.bfloat16)
    p['hw_l'] = head_w[DHID + DFRAME:DHID + DFRAME + DHID].astype(jnp.bfloat16)
    p['hw_e'] = head_w[DHID + DFRAME + DHID:DCONT].astype(jnp.bfloat16)
    p['head_b'] = head_b

    # MaskDecoder spatial path (BN folded into the deconv weights/biases)
    dconv3_w = rnd((HC, 4, 4, 4)); dconv3_b = rnd((4,))
    m1s, m1sh = bn_fold(1.0 + rnd((4,)), rnd((4,)))
    p['dconv3_w'] = dconv3_w * m1s[None, :, None, None]
    p['dconv3_b'] = dconv3_b * m1s + m1sh
    dconv2_w = rnd((4, 2, 4, 4)); dconv2_b = rnd((2,))
    m2s, m2sh = bn_fold(1.0 + rnd((2,)), rnd((2,)))
    p['dconv2_w'] = dconv2_w * m2s[None, :, None, None]
    p['dconv2_b'] = dconv2_b * m2s + m2sh
    p['dconv1_w'] = rnd((2, 1, 1, 1))
    p['dconv1_b'] = rnd((1,))
    return p


if __name__ == "__main__":
    key = jax.random.PRNGKey(0)
    kp, ke, kf, kh, kc = jax.random.split(key, 5)
    params = init_params(kp)
    enc = 0.1 * jax.random.normal(ke, (B, L, DHID), dtype=jnp.float32)
    frames = 0.1 * jax.random.normal(kf, (B, T, CIN, H, W), dtype=jnp.float32)
    h0 = 0.1 * jax.random.normal(kh, (B, DHID), dtype=jnp.float32)
    c0 = 0.1 * jax.random.normal(kc, (B, DHID), dtype=jnp.float32)

    results = forward(enc, frames, params, (h0, c0))
    jax.block_until_ready(results)

    assert results['out_action_low'].shape == (B, T, VOCAB)
    assert results['out_action_low_mask'].shape == (B, T, 1, PFRAME, PFRAME)
    assert results['out_attn_scores'].shape == (B, T, L, 1)
    assert results['out_subgoal'].shape == (B, T, 1)
    assert results['out_progress'].shape == (B, T, 1)
    assert results['state_t'][0].shape == (B, DHID)
    assert results['state_t'][1].shape == (B, DHID)
    print("KERNEL_OK")
</pallas_src>

<mosaic_0001>
module attributes {stable_mosaic.version = 11 : i64} {
  func.func @vis_conv_kernel(%arg0: memref<392x32xbf16, #tpu.memory_space<vmem>>, %arg1: memref<32x16xbf16, #tpu.memory_space<vmem>>, %arg2: memref<1x16xf32, #tpu.memory_space<vmem>>, %arg3: memref<16x8xbf16, #tpu.memory_space<vmem>>, %arg4: memref<1x8xf32, #tpu.memory_space<vmem>>, %arg5: memref<392x8xbf16, #tpu.memory_space<vmem>>) attributes {dimension_semantics = [], scalar_prefetch = 0 : i64, scratch_operands = 0 : i64, tpu.core_type = #tpu.core_type<tc>} {
    %c0 = arith.constant 0 : index
    %c0_0 = arith.constant 0 : index
    %0 = vector.load %arg0[%c0, %c0_0] : memref<392x32xbf16, #tpu.memory_space<vmem>>, vector<392x32xbf16>
    %c0_1 = arith.constant 0 : index
    %c0_2 = arith.constant 0 : index
    %1 = vector.load %arg1[%c0_1, %c0_2] : memref<32x16xbf16, #tpu.memory_space<vmem>>, vector<32x16xbf16>
    %cst = arith.constant dense<0.000000e+00> : vector<392x16xf32>
    %2 = tpu.matmul %0, %1, %cst {dimension_numbers = #tpu.dot_dimension_numbers<[1], [0], [0], [1], [0, 0, 1, 1], [], []>} : vector<392x32xbf16>, vector<32x16xbf16>, vector<392x16xf32> -> vector<392x16xf32>
    %c0_3 = arith.constant 0 : index
    %c0_4 = arith.constant 0 : index
    %3 = vector.load %arg2[%c0_3, %c0_4] : memref<1x16xf32, #tpu.memory_space<vmem>>, vector<1x16xf32>
    %4 = vector.broadcast %3 : vector<1x16xf32> to vector<392x16xf32>
    %5 = arith.addf %2, %4 : vector<392x16xf32>
    %cst_5 = arith.constant 0.000000e+00 : f32
    %6 = vector.broadcast %cst_5 : f32 to vector<392x16xf32>
    %7 = arith.maximumf %5, %6 : vector<392x16xf32>
    %8 = arith.truncf %7 : vector<392x16xf32> to vector<392x16xbf16>
    %c0_6 = arith.constant 0 : index
    %c0_7 = arith.constant 0 : index
    %9 = vector.load %arg3[%c0_6, %c0_7] : memref<16x8xbf16, #tpu.memory_space<vmem>>, vector<16x8xbf16>
    %cst_8 = arith.constant dense<0.000000e+00> : vector<392x8xf32>
    %10 = tpu.matmul %8, %9, %cst_8 {dimension_numbers = #tpu.dot_dimension_numbers<[1], [0], [0], [1], [0, 0, 1, 1], [], []>} : vector<392x16xbf16>, vector<16x8xbf16>, vector<392x8xf32> -> vector<392x8xf32>
    %c0_9 = arith.constant 0 : index
    %c0_10 = arith.constant 0 : index
    %11 = vector.load %arg4[%c0_9, %c0_10] : memref<1x8xf32, #tpu.memory_space<vmem>>, vector<1x8xf32>
    %12 = vector.broadcast %11 : vector<1x8xf32> to vector<392x8xf32>
    %13 = arith.addf %10, %12 : vector<392x8xf32>
    %cst_11 = arith.constant 0.000000e+00 : f32
    %14 = vector.broadcast %cst_11 : f32 to vector<392x8xf32>
    %15 = arith.maximumf %13, %14 : vector<392x8xf32>
    %16 = arith.truncf %15 : vector<392x8xf32> to vector<392x8xbf16>
    %c0_12 = arith.constant 0 : index
    %c0_13 = arith.constant 0 : index
    %17 = vector.load %arg5[%c0_12, %c0_13] : memref<392x8xbf16, #tpu.memory_space<vmem>>, vector<392x8xbf16>
    tpu.vector_store %arg5[%c0_12, %c0_13], %16 {strides = array<i32>} : memref<392x8xbf16, #tpu.memory_space<vmem>>, vector<392x8xbf16>,
    return
  }
}

module attributes {stable_mosaic.version = 11 : i64} {
  func.func @vis_fc_kernel(%arg0: memref<8x392xbf16, #tpu.memory_space<vmem>>, %arg1: memref<392x16xbf16, #tpu.memory_space<vmem>>, %arg2: memref<1x16xf32, #tpu.memory_space<vmem>>, %arg3: memref<8x16xbf16, #tpu.memory_space<vmem>>) attributes {dimension_semantics = [], scalar_prefetch = 0 : i64, scratch_operands = 0 : i64, tpu.core_type = #tpu.core_type<tc>} {
    %c0 = arith.constant 0 : index
    %c0_0 = arith.constant 0 : index
    %0 = vector.load %arg0[%c0, %c0_0] : memref<8x392xbf16, #tpu.memory_space<vmem>>, vector<8x392xbf16>
    %c0_1 = arith.constant 0 : index
    %c0_2 = arith.constant 0 : index
    %1 = vector.load %arg1[%c0_1, %c0_2] : memref<392x16xbf16, #tpu.memory_space<vmem>>, vector<392x16xbf16>
    %cst = arith.constant dense<0.000000e+00> : vector<8x16xf32>
    %2 = tpu.matmul %0, %1, %cst {dimension_numbers = #tpu.dot_dimension_numbers<[1], [0], [0], [1], [0, 0, 1, 1], [], []>} : vector<8x392xbf16>, vector<392x16xbf16>, vector<8x16xf32> -> vector<8x16xf32>
    %c0_3 = arith.constant 0 : index
    %c0_4 = arith.constant 0 : index
    %3 = vector.load %arg2[%c0_3, %c0_4] : memref<1x16xf32, #tpu.memory_space<vmem>>, vector<1x16xf32>
    %4 = vector.broadcast %3 : vector<1x16xf32> to vector<8x16xf32>
    %5 = arith.addf %2, %4 : vector<8x16xf32>
    %cst_5 = arith.constant 0.000000e+00 : f32
    %6 = vector.broadcast %cst_5 : f32 to vector<8x16xf32>
    %7 = arith.maximumf %5, %6 : vector<8x16xf32>
    %8 = arith.truncf %7 : vector<8x16xf32> to vector<8x16xbf16>
    %c0_6 = arith.constant 0 : index
    %c0_7 = arith.constant 0 : index
    %9 = vector.load %arg3[%c0_6, %c0_7] : memref<8x16xbf16, #tpu.memory_space<vmem>>, vector<8x16xbf16>
    tpu.vector_store %arg3[%c0_6, %c0_7], %8 {strides = array<i32>} : memref<8x16xbf16, #tpu.memory_space<vmem>>, vector<8x16xbf16>,
    return
  }
}

module attributes {stable_mosaic.version = 11 : i64} {
  func.func @decoder_kernel(%arg0: i32, %arg1: memref<2x2x16xbf16, #tpu.memory_space<vmem>>, %arg2: memref<2x8x32xf32, #tpu.memory_space<vmem>>, %arg3: memref<32x32xbf16, #tpu.memory_space<vmem>>, %arg4: memref<1x32xf32, #tpu.memory_space<vmem>>, %arg5: memref<16x128xbf16, #tpu.memory_space<vmem>>, %arg6: memref<32x128xbf16, #tpu.memory_space<vmem>>, %arg7: memref<16x128xbf16, #tpu.memory_space<vmem>>, %arg8: memref<32x128xbf16, #tpu.memory_space<vmem>>, %arg9: memref<1x128xf32, #tpu.memory_space<vmem>>, %arg10: memref<32x768xbf16, #tpu.memory_space<vmem>>, %arg11: memref<16x768xbf16, #tpu.memory_space<vmem>>, %arg12: memref<32x768xbf16, #tpu.memory_space<vmem>>, %arg13: memref<16x768xbf16, #tpu.memory_space<vmem>>, %arg14: memref<1x768xf32, #tpu.memory_space<vmem>>, %arg15: memref<12x16xbf16, #tpu.memory_space<vmem>>, %arg16: memref<1x16xf32, #tpu.memory_space<vmem>>, %arg17: memref<2x32xf32, #tpu.memory_space<vmem>>, %arg18: memref<2x32xf32, #tpu.memory_space<vmem>>, %arg19: memref<2x2x768xf32, #tpu.memory_space<vmem>>, %arg20: memref<2x2x8xf32, #tpu.memory_space<vmem>>, %arg21: memref<2x32xf32, #tpu.memory_space<vmem>>, %arg22: memref<2x32xf32, #tpu.memory_space<vmem>>, %arg23: memref<2x16xf32, #tpu.memory_space<vmem>>) attributes {dimension_semantics = [#tpu.dimension_semantics<arbitrary>], iteration_bounds = array<i64: 2>, scalar_prefetch = 0 : i64, scratch_operands = 1 : i64, tpu.core_type = #tpu.core_type<tc>, window_params = [{transform_indices = @transform_0, window_bounds = array<i64: 2, 2, 16>}, {pipeline_mode = #tpu.pipeline_mode<synchronous>, transform_indices = @transform_1, window_bounds = array<i64: 2, 8, 32>}, {pipeline_mode = #tpu.pipeline_mode<synchronous>, transform_indices = @transform_2, window_bounds = array<i64: 32, 32>}, {pipeline_mode = #tpu.pipeline_mode<synchronous>, transform_indices = @transform_3, window_bounds = array<i64: 1, 32>}, {pipeline_mode = #tpu.pipeline_mode<synchronous>, transform_indices = @transform_4, window_bounds = array<i64: 16, 128>}, {pipeline_mode = #tpu.pipeline_mode<synchronous>, transform_indices = @transform_5, window_bounds = array<i64: 32, 128>}, {pipeline_mode = #tpu.pipeline_mode<synchronous>, transform_indices = @transform_6, window_bounds = array<i64: 16, 128>}, {pipeline_mode = #tpu.pipeline_mode<synchronous>, transform_indices = @transform_7, window_bounds = array<i64: 32, 128>}, {pipeline_mode = #tpu.pipeline_mode<synchronous>, transform_indices = @transform_8, window_bounds = array<i64: 1, 128>}, {pipeline_mode = #tpu.pipeline_mode<synchronous>, transform_indices = @transform_9, window_bounds = array<i64: 32, 768>}, {pipeline_mode = #tpu.pipeline_mode<synchronous>, transform_indices = @transform_10, window_bounds = array<i64: 16, 768>}, {pipeline_mode = #tpu.pipeline_mode<synchronous>, transform_indices = @transform_11, window_bounds = array<i64: 32, 768>}, {pipeline_mode = #tpu.pipeline_mode<synchronous>, transform_indices = @transform_12, window_bounds = array<i64: 16, 768>}, {pipeline_mode = #tpu.pipeline_mode<synchronous>, transform_indices = @transform_13, window_bounds = array<i64: 1, 768>}, {pipeline_mode = #tpu.pipeline_mode<synchronous>, transform_indices = @transform_14, window_bounds = array<i64: 12, 16>}, {pipeline_mode = #tpu.pipeline_mode<synchronous>, transform_indices = @transform_15, window_bounds = array<i64: 1, 16>}, {pipeline_mode = #tpu.pipeline_mode<synchronous>, transform_indices = @transform_16, window_bounds = array<i64: 2, 32>}, {pipeline_mode = #tpu.pipeline_mode<synchronous>, transform_indices = @transform_17, window_bounds = array<i64: 2, 32>}, {transform_indices = @transform_18, window_bounds = array<i64: 2, 2, 768>}, {transform_indices = @transform_19, window_bounds = array<i64: 2, 2, 8>}, {pipeline_mode = #tpu.pipeline_mode<synchronous>, transform_indices = @transform_20, window_bounds = array<i64: 2, 32>}, {pipeline_mode = #tpu.pipeline_mode<synchronous>, transform_indices = @transform_21, window_bounds = array<i64: 2, 32>}]} {
    %c0_i32 = arith.constant 0 : i32
    %0 = arith.cmpi eq, %arg0, %c0_i32 : i32
    %1 = arith.extui %0 : i1 to i32
    %c0_i32_0 = arith.constant 0 : i32
    %2 = arith.cmpi ne, %1, %c0_i32_0 : i32
    scf.if %2 {
      %c0_136 = arith.constant 0 : index
      %c0_137 = arith.constant 0 : index
      %253 = vector.load %arg17[%c0_136, %c0_137] : memref<2x32xf32, #tpu.memory_space<vmem>>, vector<2x32xf32>
      %c0_138 = arith.constant 0 : index
      %c0_139 = arith.constant 0 : index
      %254 = vector.load %arg21[%c0_138, %c0_139] : memref<2x32xf32, #tpu.memory_space<vmem>>, vector<2x32xf32>
      tpu.vector_store %arg21[%c0_138, %c0_139], %253 {strides = array<i32>} : memref<2x32xf32, #tpu.memory_space<vmem>>, vector<2x32xf32>,
      %c0_140 = arith.constant 0 : index
      %c0_141 = arith.constant 0 : index
      %255 = vector.load %arg18[%c0_140, %c0_141] : memref<2x32xf32, #tpu.memory_space<vmem>>, vector<2x32xf32>
      %c0_142 = arith.constant 0 : index
      %c0_143 = arith.constant 0 : index
      %256 = vector.load %arg22[%c0_142, %c0_143] : memref<2x32xf32, #tpu.memory_space<vmem>>, vector<2x32xf32>
      tpu.vector_store %arg22[%c0_142, %c0_143], %255 {strides = array<i32>} : memref<2x32xf32, #tpu.memory_space<vmem>>, vector<2x32xf32>,
      %c0_144 = arith.constant 0 : index
      %c0_145 = arith.constant 0 : index
      %257 = vector.load %arg16[%c0_144, %c0_145] : memref<1x16xf32, #tpu.memory_space<vmem>>, vector<1x16xf32>
      %258 = vector.shape_cast %257 : vector<1x16xf32> to vector<1x16xf32>
      %259 = vector.broadcast %258 : vector<1x16xf32> to vector<2x16xf32>
      %c0_146 = arith.constant 0 : index
      %c0_147 = arith.constant 0 : index
      %260 = vector.load %arg23[%c0_146, %c0_147] : memref<2x16xf32, #tpu.memory_space<vmem>>, vector<2x16xf32>
      tpu.vector_store %arg23[%c0_146, %c0_147], %259 {strides = array<i32>} : memref<2x16xf32, #tpu.memory_space<vmem>>, vector<2x16xf32>,
    } else {
    }
    %c0 = arith.constant 0 : index
    %c0_1 = arith.constant 0 : index
    %c0_2 = arith.constant 0 : index
    %3 = vector.load %arg2[%c0, %c0_1, %c0_2] : memref<2x8x32xf32, #tpu.memory_space<vmem>>, vector<2x8x32xf32>
    %4 = tpu.iota {dimensions = array<i32: 1>} : vector<2x12xi32>
    %c0_3 = arith.constant 0 : index
    %c0_4 = arith.constant 0 : index
    %5 = vector.load %arg21[%c0_3, %c0_4] : memref<2x32xf32, #tpu.memory_space<vmem>>, vector<2x32xf32>
    %c0_5 = arith.constant 0 : index
    %c0_6 = arith.constant 0 : index
    %6 = vector.load %arg22[%c0_5, %c0_6] : memref<2x32xf32, #tpu.memory_space<vmem>>, vector<2x32xf32>
    %c0_7 = arith.constant 0 : index
    %c0_8 = arith.constant 0 : index
    %7 = vector.load %arg23[%c0_7, %c0_8] : memref<2x16xf32, #tpu.memory_space<vmem>>, vector<2x16xf32>
    %c0_9 = arith.constant 0 : index
    %c0_10 = arith.constant 0 : index
    %c0_11 = arith.constant 0 : index
    %8 = vector.load %arg1[%c0_9, %c0_10, %c0_11] : memref<2x2x16xbf16, #tpu.memory_space<vmem>>, vector<1x2x16xbf16>
    %9 = vector.shape_cast %8 : vector<1x2x16xbf16> to vector<2x16xbf16>
    %10 = arith.truncf %5 : vector<2x32xf32> to vector<2x32xbf16>
    %c0_12 = arith.constant 0 : index
    %c0_13 = arith.constant 0 : index
    %11 = vector.load %arg3[%c0_12, %c0_13] : memref<32x32xbf16, #tpu.memory_space<vmem>>, vector<32x32xbf16>
    %cst = arith.constant dense<0.000000e+00> : vector<2x32xf32>
    %12 = tpu.matmul %10, %11, %cst {dimension_numbers = #tpu.dot_dimension_numbers<[1], [0], [0], [1], [0, 0, 1, 1], [], []>} : vector<2x32xbf16>, vector<32x32xbf16>, vector<2x32xf32> -> vector<2x32xf32>
    %c0_14 = arith.constant 0 : index
    %c0_15 = arith.constant 0 : index
    %13 = vector.load %arg4[%c0_14, %c0_15] : memref<1x32xf32, #tpu.memory_space<vmem>>, vector<1x32xf32>
    %14 = vector.broadcast %13 : vector<1x32xf32> to vector<2x32xf32>
    %15 = arith.addf %12, %14 : vector<2x32xf32>
    %16 = vector.shape_cast %15 : vector<2x32xf32> to vector<2x1x32xf32>
    %17 = vector.broadcast %16 : vector<2x1x32xf32> to vector<2x8x32xf32>
    %18 = arith.mulf %3, %17 : vector<2x8x32xf32>
    %cst_16 = arith.constant dense<0.000000e+00> : vector<2x8xf32>
    %19 = vector.multi_reduction <add>, %18, %cst_16 [2] : vector<2x8x32xf32> to vector<2x8xf32>
    %cst_17 = arith.constant dense<0xFF800000> : vector<2xf32>
    %20 = vector.multi_reduction <maximumf>, %19, %cst_17 [1] : vector<2x8xf32> to vector<2xf32>
    %21 = vector.shape_cast %20 : vector<2xf32> to vector<2x1xf32>
    %22 = vector.broadcast %21 : vector<2x1xf32> to vector<2x8xf32>
    %23 = arith.subf %19, %22 : vector<2x8xf32>
    %24 = math.exp %23 : vector<2x8xf32>
    %cst_18 = arith.constant dense<0.000000e+00> : vector<2xf32>
    %25 = vector.multi_reduction <add>, %24, %cst_18 [1] : vector<2x8xf32> to vector<2xf32>
    %26 = vector.shape_cast %25 : vector<2xf32> to vector<2x1xf32>
    %27 = tpu.reciprocal %26 {approx = true} : vector<2x1xf32> -> vector<2x1xf32>
    %28 = vector.broadcast %27 : vector<2x1xf32> to vector<2x8xf32>
    %29 = arith.mulf %24, %28 : vector<2x8xf32>
    %30 = vector.shape_cast %29 : vector<2x8xf32> to vector<2x8x1xf32>
    %31 = vector.broadcast %30 : vector<2x8x1xf32> to vector<2x8x32xf32>
    %32 = arith.mulf %3, %31 : vector<2x8x32xf32>
    %cst_19 = arith.constant dense<0.000000e+00> : vector<2x32xf32>
    %33 = vector.multi_reduction <add>, %32, %cst_19 [1] : vector<2x8x32xf32> to vector<2x32xf32>
    %34 = arith.truncf %33 : vector<2x32xf32> to vector<2x32xbf16>
    %35 = arith.truncf %7 : vector<2x16xf32> to vector<2x16xbf16>
    %36 = arith.truncf %5 : vector<2x32xf32> to vector<2x32xbf16>
    %c0_20 = arith.constant 0 : index
    %c0_21 = arith.constant 0 : index
    %37 = vector.load %arg5[%c0_20, %c0_21] : memref<16x128xbf16, #tpu.memory_space<vmem>>, vector<16x128xbf16>
    %cst_22 = arith.constant dense<0.000000e+00> : vector<2x128xf32>
    %38 = tpu.matmul %9, %37, %cst_22 {dimension_numbers = #tpu.dot_dimension_numbers<[1], [0], [0], [1], [0, 0, 1, 1], [], []>} : vector<2x16xbf16>, vector<16x128xbf16>, vector<2x128xf32> -> vector<2x128xf32>
    %c0_23 = arith.constant 0 : index
    %c0_24 = arith.constant 0 : index
    %39 = vector.load %arg6[%c0_23, %c0_24] : memref<32x128xbf16, #tpu.memory_space<vmem>>, vector<32x128xbf16>
    %cst_25 = arith.constant dense<0.000000e+00> : vector<2x128xf32>
    %40 = tpu.matmul %34, %39, %cst_25 {dimension_numbers = #tpu.dot_dimension_numbers<[1], [0], [0], [1], [0, 0, 1, 1], [], []>} : vector<2x32xbf16>, vector<32x128xbf16>, vector<2x128xf32> -> vector<2x128xf32>
    %41 = arith.addf %38, %40 : vector<2x128xf32>
    %c0_26 = arith.constant 0 : index
    %c0_27 = arith.constant 0 : index
    %42 = vector.load %arg7[%c0_26, %c0_27] : memref<16x128xbf16, #tpu.memory_space<vmem>>, vector<16x128xbf16>
    %cst_28 = arith.constant dense<0.000000e+00> : vector<2x128xf32>
    %43 = tpu.matmul %35, %42, %cst_28 {dimension_numbers = #tpu.dot_dimension_numbers<[1], [0], [0], [1], [0, 0, 1, 1], [], []>} : vector<2x16xbf16>, vector<16x128xbf16>, vector<2x128xf32> -> vector<2x128xf32>
    %44 = arith.addf %41, %43 : vector<2x128xf32>
    %c0_29 = arith.constant 0 : index
    %c0_30 = arith.constant 0 : index
    %45 = vector.load %arg8[%c0_29, %c0_30] : memref<32x128xbf16, #tpu.memory_space<vmem>>, vector<32x128xbf16>
    %cst_31 = arith.constant dense<0.000000e+00> : vector<2x128xf32>
    %46 = tpu.matmul %36, %45, %cst_31 {dimension_numbers = #tpu.dot_dimension_numbers<[1], [0], [0], [1], [0, 0, 1, 1], [], []>} : vector<2x32xbf16>, vector<32x128xbf16>, vector<2x128xf32> -> vector<2x128xf32>
    %47 = arith.addf %44, %46 : vector<2x128xf32>
    %c0_32 = arith.constant 0 : index
    %c0_33 = arith.constant 0 : index
    %48 = vector.load %arg9[%c0_32, %c0_33] : memref<1x128xf32, #tpu.memory_space<vmem>>, vector<1x128xf32>
    %49 = vector.broadcast %48 : vector<1x128xf32> to vector<2x128xf32>
    %50 = arith.addf %47, %49 : vector<2x128xf32>
    %51 = vector.extract_strided_slice %50 {offsets = [0, 0], sizes = [2, 32], strides = [1, 1]} : vector<2x128xf32> to vector<2x32xf32>
    %52 = arith.negf %51 : vector<2x32xf32>
    %53 = math.exp %52 : vector<2x32xf32>
    %cst_34 = arith.constant 1.000000e+00 : f32
    %54 = vector.broadcast %cst_34 : f32 to vector<2x32xf32>
    %55 = arith.addf %54, %53 : vector<2x32xf32>
    %56 = arith.divf %54, %55 : vector<2x32xf32>
    %57 = vector.extract_strided_slice %50 {offsets = [0, 32], sizes = [2, 32], strides = [1, 1]} : vector<2x128xf32> to vector<2x32xf32>
    %58 = arith.negf %57 : vector<2x32xf32>
    %59 = math.exp %58 : vector<2x32xf32>
    %cst_35 = arith.constant 1.000000e+00 : f32
    %60 = vector.broadcast %cst_35 : f32 to vector<2x32xf32>
    %61 = arith.addf %60, %59 : vector<2x32xf32>
    %62 = arith.divf %60, %61 : vector<2x32xf32>
    %63 = vector.extract_strided_slice %50 {offsets = [0, 64], sizes = [2, 32], strides = [1, 1]} : vector<2x128xf32> to vector<2x32xf32>
    %64 = math.tanh %63 : vector<2x32xf32>
    %65 = vector.extract_strided_slice %50 {offsets = [0, 96], sizes = [2, 32], strides = [1, 1]} : vector<2x128xf32> to vector<2x32xf32>
    %66 = arith.negf %65 : vector<2x32xf32>
    %67 = math.exp %66 : vector<2x32xf32>
    %cst_36 = arith.constant 1.000000e+00 : f32
    %68 = vector.broadcast %cst_36 : f32 to vector<2x32xf32>
    %69 = arith.addf %68, %67 : vector<2x32xf32>
    %70 = arith.divf %68, %69 : vector<2x32xf32>
    %71 = arith.mulf %62, %6 : vector<2x32xf32>
    %72 = arith.mulf %56, %64 : vector<2x32xf32>
    %73 = arith.addf %71, %72 : vector<2x32xf32>
    %74 = math.tanh %73 : vector<2x32xf32>
    %75 = arith.mulf %70, %74 : vector<2x32xf32>
    %76 = arith.truncf %75 : vector<2x32xf32> to vector<2x32xbf16>
    %c0_37 = arith.constant 0 : index
    %c0_38 = arith.constant 0 : index
    %77 = vector.load %arg10[%c0_37, %c0_38] : memref<32x768xbf16, #tpu.memory_space<vmem>>, vector<32x768xbf16>
    %cst_39 = arith.constant dense<0.000000e+00> : vector<2x768xf32>
    %78 = tpu.matmul %76, %77, %cst_39 {dimension_numbers = #tpu.dot_dimension_numbers<[1], [0], [0], [1], [0, 0, 1, 1], [], []>} : vector<2x32xbf16>, vector<32x768xbf16>, vector<2x768xf32> -> vector<2x768xf32>
    %c0_40 = arith.constant 0 : index
    %c0_41 = arith.constant 0 : index
    %79 = vector.load %arg11[%c0_40, %c0_41] : memref<16x768xbf16, #tpu.memory_space<vmem>>, vector<16x768xbf16>
    %cst_42 = arith.constant dense<0.000000e+00> : vector<2x768xf32>
    %80 = tpu.matmul %9, %79, %cst_42 {dimension_numbers = #tpu.dot_dimension_numbers<[1], [0], [0], [1], [0, 0, 1, 1], [], []>} : vector<2x16xbf16>, vector<16x768xbf16>, vector<2x768xf32> -> vector<2x768xf32>
    %81 = arith.addf %78, %80 : vector<2x768xf32>
    %c0_43 = arith.constant 0 : index
    %c0_44 = arith.constant 0 : index
    %82 = vector.load %arg12[%c0_43, %c0_44] : memref<32x768xbf16, #tpu.memory_space<vmem>>, vector<32x768xbf16>
    %cst_45 = arith.constant dense<0.000000e+00> : vector<2x768xf32>
    %83 = tpu.matmul %34, %82, %cst_45 {dimension_numbers = #tpu.dot_dimension_numbers<[1], [0], [0], [1], [0, 0, 1, 1], [], []>} : vector<2x32xbf16>, vector<32x768xbf16>, vector<2x768xf32> -> vector<2x768xf32>
    %84 = arith.addf %81, %83 : vector<2x768xf32>
    %c0_46 = arith.constant 0 : index
    %c0_47 = arith.constant 0 : index
    %85 = vector.load %arg13[%c0_46, %c0_47] : memref<16x768xbf16, #tpu.memory_space<vmem>>, vector<16x768xbf16>
    %cst_48 = arith.constant dense<0.000000e+00> : vector<2x768xf32>
    %86 = tpu.matmul %35, %85, %cst_48 {dimension_numbers = #tpu.dot_dimension_numbers<[1], [0], [0], [1], [0, 0, 1, 1], [], []>} : vector<2x16xbf16>, vector<16x768xbf16>, vector<2x768xf32> -> vector<2x768xf32>
    %87 = arith.addf %84, %86 : vector<2x768xf32>
    %c0_49 = arith.constant 0 : index
    %c0_50 = arith.constant 0 : index
    %88 = vector.load %arg14[%c0_49, %c0_50] : memref<1x768xf32, #tpu.memory_space<vmem>>, vector<1x768xf32>
    %89 = vector.broadcast %88 : vector<1x768xf32> to vector<2x768xf32>
    %90 = arith.addf %87, %89 : vector<2x768xf32>
    %91 = vector.extract_strided_slice %90 {offsets = [0, 0], sizes = [2, 128], strides = [1, 1]} : vector<2x768xf32> to vector<2x128xf32>
    %92 = arith.negf %91 : vector<2x128xf32>
    %93 = math.exp %92 : vector<2x128xf32>
    %cst_51 = arith.constant 1.000000e+00 : f32
    %94 = vector.broadcast %cst_51 : f32 to vector<2x128xf32>
    %95 = arith.addf %94, %93 : vector<2x128xf32>
    %96 = arith.divf %94, %95 : vector<2x128xf32>
    %c0_52 = arith.constant 0 : index
    %c0_53 = arith.constant 0 : index
    %c0_54 = arith.constant 0 : index
    %97 = vector.load %arg19[%c0_52, %c0_53, %c0_54] : memref<2x2x768xf32, #tpu.memory_space<vmem>>, vector<1x2x128xf32>
    %98 = vector.shape_cast %97 : vector<1x2x128xf32> to vector<2x128xf32>
    %99 = vector.shape_cast %96 : vector<2x128xf32> to vector<1x2x128xf32>
    tpu.vector_store %arg19[%c0_52, %c0_53, %c0_54], %99 {strides = array<i32>} : memref<2x2x768xf32, #tpu.memory_space<vmem>>, vector<1x2x128xf32>,
    %100 = vector.extract_strided_slice %90 {offsets = [0, 128], sizes = [2, 128], strides = [1, 1]} : vector<2x768xf32> to vector<2x128xf32>
    %c0_55 = arith.constant 0 : index
    %c0_56 = arith.constant 0 : index
    %c128 = arith.constant 128 : index
    %101 = vector.load %arg19[%c0_55, %c0_56, %c128] : memref<2x2x768xf32, #tpu.memory_space<vmem>>, vector<1x2x128xf32>
    %102 = vector.shape_cast %101 : vector<1x2x128xf32> to vector<2x128xf32>
    %103 = vector.shape_cast %100 : vector<2x128xf32> to vector<1x2x128xf32>
    tpu.vector_store %arg19[%c0_55, %c0_56, %c128], %103 {strides = array<i32>} : memref<2x2x768xf32, #tpu.memory_space<vmem>>, vector<1x2x128xf32>,
    %104 = vector.extract_strided_slice %90 {offsets = [0, 256], sizes = [2, 512], strides = [1, 1]} : vector<2x768xf32> to vector<2x512xf32>
    %cst_57 = arith.constant 0.000000e+00 : f32
    %105 = vector.broadcast %cst_57 : f32 to vector<2x512xf32>
    %106 = arith.maximumf %104, %105 : vector<2x512xf32>
    %c0_58 = arith.constant 0 : index
    %c0_59 = arith.constant 0 : index
    %c256 = arith.constant 256 : index
    %107 = vector.load %arg19[%c0_58, %c0_59, %c256] : memref<2x2x768xf32, #tpu.memory_space<vmem>>, vector<1x2x512xf32>
    %108 = vector.shape_cast %107 : vector<1x2x512xf32> to vector<2x512xf32>
    %109 = vector.shape_cast %106 : vector<2x512xf32> to vector<1x2x512xf32>
    tpu.vector_store %arg19[%c0_58, %c0_59, %c256], %109 {strides = array<i32>} : memref<2x2x768xf32, #tpu.memory_space<vmem>>, vector<1x2x512xf32>,
    %c0_60 = arith.constant 0 : index
    %c0_61 = arith.constant 0 : index
    %c0_62 = arith.constant 0 : index
    %110 = vector.load %arg20[%c0_60, %c0_61, %c0_62] : memref<2x2x8xf32, #tpu.memory_space<vmem>>, vector<1x2x8xf32>
    %111 = vector.shape_cast %110 : vector<1x2x8xf32> to vector<2x8xf32>
    %112 = vector.shape_cast %29 : vector<2x8xf32> to vector<1x2x8xf32>
    tpu.vector_store %arg20[%c0_60, %c0_61, %c0_62], %112 {strides = array<i32>} : memref<2x2x8xf32, #tpu.memory_space<vmem>>, vector<1x2x8xf32>,
    %113 = vector.extract_strided_slice %90 {offsets = [0, 128], sizes = [2, 12], strides = [1, 1]} : vector<2x768xf32> to vector<2x12xf32>
    %cst_63 = arith.constant dense<0xFF800000> : vector<2xf32>
    %114 = vector.multi_reduction <maximumf>, %113, %cst_63 [1] : vector<2x12xf32> to vector<2xf32>
    %115 = vector.shape_cast %114 : vector<2xf32> to vector<2x1xf32>
    %116 = vector.broadcast %115 : vector<2x1xf32> to vector<2x12xf32>
    %117 = arith.cmpf oeq, %113, %116 : vector<2x12xf32>
    %c12_i32 = arith.constant 12 : i32
    %118 = vector.broadcast %c12_i32 : i32 to vector<2x12xi32>
    %119 = arith.select %117, %4, %118 : vector<2x12xi1>, vector<2x12xi32>
    %cst_64 = arith.constant dense<2147483647> : vector<2xi32>
    %120 = vector.multi_reduction <minsi>, %119, %cst_64 [1] : vector<2x12xi32> to vector<2xi32>
    %121 = vector.shape_cast %120 : vector<2xi32> to vector<2x1xi32>
    %122 = vector.broadcast %121 : vector<2x1xi32> to vector<2x12xi32>
    %123 = arith.cmpi eq, %4, %122 : vector<2x12xi32>
    %124 = arith.extui %123 : vector<2x12xi1> to vector<2x12xi32>
    %125 = arith.sitofp %124 : vector<2x12xi32> to vector<2x12xf32>
    %126 = arith.truncf %125 : vector<2x12xf32> to vector<2x12xbf16>
    %c0_65 = arith.constant 0 : index
    %c0_66 = arith.constant 0 : index
    %127 = vector.load %arg15[%c0_65, %c0_66] : memref<12x16xbf16, #tpu.memory_space<vmem>>, vector<12x16xbf16>
    %cst_67 = arith.constant dense<0.000000e+00> : vector<2x16xf32>
    %128 = tpu.matmul %126, %127, %cst_67 {dimension_numbers = #tpu.dot_dimension_numbers<[1], [0], [0], [1], [0, 0, 1, 1], [], []>} : vector<2x12xbf16>, vector<12x16xbf16>, vector<2x16xf32> -> vector<2x16xf32>
    %c1 = arith.constant 1 : index
    %c0_68 = arith.constant 0 : index
    %c0_69 = arith.constant 0 : index
    %129 = vector.load %arg1[%c1, %c0_68, %c0_69] : memref<2x2x16xbf16, #tpu.memory_space<vmem>>, vector<1x2x16xbf16>
    %130 = vector.shape_cast %129 : vector<1x2x16xbf16> to vector<2x16xbf16>
    %131 = arith.truncf %75 : vector<2x32xf32> to vector<2x32xbf16>
    %c0_70 = arith.constant 0 : index
    %c0_71 = arith.constant 0 : index
    %132 = vector.load %arg3[%c0_70, %c0_71] : memref<32x32xbf16, #tpu.memory_space<vmem>>, vector<32x32xbf16>
    %cst_72 = arith.constant dense<0.000000e+00> : vector<2x32xf32>
    %133 = tpu.matmul %131, %132, %cst_72 {dimension_numbers = #tpu.dot_dimension_numbers<[1], [0], [0], [1], [0, 0, 1, 1], [], []>} : vector<2x32xbf16>, vector<32x32xbf16>, vector<2x32xf32> -> vector<2x32xf32>
    %c0_73 = arith.constant 0 : index
    %c0_74 = arith.constant 0 : index
    %134 = vector.load %arg4[%c0_73, %c0_74] : memref<1x32xf32, #tpu.memory_space<vmem>>, vector<1x32xf32>
    %135 = vector.broadcast %134 : vector<1x32xf32> to vector<2x32xf32>
    %136 = arith.addf %133, %135 : vector<2x32xf32>
    %137 = vector.shape_cast %136 : vector<2x32xf32> to vector<2x1x32xf32>
    %138 = vector.broadcast %137 : vector<2x1x32xf32> to vector<2x8x32xf32>
    %139 = arith.mulf %3, %138 : vector<2x8x32xf32>
    %cst_75 = arith.constant dense<0.000000e+00> : vector<2x8xf32>
    %140 = vector.multi_reduction <add>, %139, %cst_75 [2] : vector<2x8x32xf32> to vector<2x8xf32>
    %cst_76 = arith.constant dense<0xFF800000> : vector<2xf32>
    %141 = vector.multi_reduction <maximumf>, %140, %cst_76 [1] : vector<2x8xf32> to vector<2xf32>
    %142 = vector.shape_cast %141 : vector<2xf32> to vector<2x1xf32>
    %143 = vector.broadcast %142 : vector<2x1xf32> to vector<2x8xf32>
    %144 = arith.subf %140, %143 : vector<2x8xf32>
    %145 = math.exp %144 : vector<2x8xf32>
    %cst_77 = arith.constant dense<0.000000e+00> : vector<2xf32>
    %146 = vector.multi_reduction <add>, %145, %cst_77 [1] : vector<2x8xf32> to vector<2xf32>
    %147 = vector.shape_cast %146 : vector<2xf32> to vector<2x1xf32>
    %148 = tpu.reciprocal %147 {approx = true} : vector<2x1xf32> -> vector<2x1xf32>
    %149 = vector.broadcast %148 : vector<2x1xf32> to vector<2x8xf32>
    %150 = arith.mulf %145, %149 : vector<2x8xf32>
    %151 = vector.shape_cast %150 : vector<2x8xf32> to vector<2x8x1xf32>
    %152 = vector.broadcast %151 : vector<2x8x1xf32> to vector<2x8x32xf32>
    %153 = arith.mulf %3, %152 : vector<2x8x32xf32>
    %cst_78 = arith.constant dense<0.000000e+00> : vector<2x32xf32>
    %154 = vector.multi_reduction <add>, %153, %cst_78 [1] : vector<2x8x32xf32> to vector<2x32xf32>
    %155 = arith.truncf %154 : vector<2x32xf32> to vector<2x32xbf16>
    %156 = arith.truncf %128 : vector<2x16xf32> to vector<2x16xbf16>
    %157 = arith.truncf %75 : vector<2x32xf32> to vector<2x32xbf16>
    %c0_79 = arith.constant 0 : index
    %c0_80 = arith.constant 0 : index
    %158 = vector.load %arg5[%c0_79, %c0_80] : memref<16x128xbf16, #tpu.memory_space<vmem>>, vector<16x128xbf16>
    %cst_81 = arith.constant dense<0.000000e+00> : vector<2x128xf32>
    %159 = tpu.matmul %130, %158, %cst_81 {dimension_numbers = #tpu.dot_dimension_numbers<[1], [0], [0], [1], [0, 0, 1, 1], [], []>} : vector<2x16xbf16>, vector<16x128xbf16>, vector<2x128xf32> -> vector<2x128xf32>
    %c0_82 = arith.constant 0 : index
    %c0_83 = arith.constant 0 : index
    %160 = vector.load %arg6[%c0_82, %c0_83] : memref<32x128xbf16, #tpu.memory_space<vmem>>, vector<32x128xbf16>
    %cst_84 = arith.constant dense<0.000000e+00> : vector<2x128xf32>
    %161 = tpu.matmul %155, %160, %cst_84 {dimension_numbers = #tpu.dot_dimension_numbers<[1], [0], [0], [1], [0, 0, 1, 1], [], []>} : vector<2x32xbf16>, vector<32x128xbf16>, vector<2x128xf32> -> vector<2x128xf32>
    %162 = arith.addf %159, %161 : vector<2x128xf32>
    %c0_85 = arith.constant 0 : index
    %c0_86 = arith.constant 0 : index
    %163 = vector.load %arg7[%c0_85, %c0_86] : memref<16x128xbf16, #tpu.memory_space<vmem>>, vector<16x128xbf16>
    %cst_87 = arith.constant dense<0.000000e+00> : vector<2x128xf32>
    %164 = tpu.matmul %156, %163, %cst_87 {dimension_numbers = #tpu.dot_dimension_numbers<[1], [0], [0], [1], [0, 0, 1, 1], [], []>} : vector<2x16xbf16>, vector<16x128xbf16>, vector<2x128xf32> -> vector<2x128xf32>
    %165 = arith.addf %162, %164 : vector<2x128xf32>
    %c0_88 = arith.constant 0 : index
    %c0_89 = arith.constant 0 : index
    %166 = vector.load %arg8[%c0_88, %c0_89] : memref<32x128xbf16, #tpu.memory_space<vmem>>, vector<32x128xbf16>
    %cst_90 = arith.constant dense<0.000000e+00> : vector<2x128xf32>
    %167 = tpu.matmul %157, %166, %cst_90 {dimension_numbers = #tpu.dot_dimension_numbers<[1], [0], [0], [1], [0, 0, 1, 1], [], []>} : vector<2x32xbf16>, vector<32x128xbf16>, vector<2x128xf32> -> vector<2x128xf32>
    %168 = arith.addf %165, %167 : vector<2x128xf32>
    %c0_91 = arith.constant 0 : index
    %c0_92 = arith.constant 0 : index
    %169 = vector.load %arg9[%c0_91, %c0_92] : memref<1x128xf32, #tpu.memory_space<vmem>>, vector<1x128xf32>
    %170 = vector.broadcast %169 : vector<1x128xf32> to vector<2x128xf32>
    %171 = arith.addf %168, %170 : vector<2x128xf32>
    %172 = vector.extract_strided_slice %171 {offsets = [0, 0], sizes = [2, 32], strides = [1, 1]} : vector<2x128xf32> to vector<2x32xf32>
    %173 = arith.negf %172 : vector<2x32xf32>
    %174 = math.exp %173 : vector<2x32xf32>
    %cst_93 = arith.constant 1.000000e+00 : f32
    %175 = vector.broadcast %cst_93 : f32 to vector<2x32xf32>
    %176 = arith.addf %175, %174 : vector<2x32xf32>
    %177 = arith.divf %175, %176 : vector<2x32xf32>
    %178 = vector.extract_strided_slice %171 {offsets = [0, 32], sizes = [2, 32], strides = [1, 1]} : vector<2x128xf32> to vector<2x32xf32>
    %179 = arith.negf %178 : vector<2x32xf32>
    %180 = math.exp %179 : vector<2x32xf32>
    %cst_94 = arith.constant 1.000000e+00 : f32
    %181 = vector.broadcast %cst_94 : f32 to vector<2x32xf32>
    %182 = arith.addf %181, %180 : vector<2x32xf32>
    %183 = arith.divf %181, %182 : vector<2x32xf32>
    %184 = vector.extract_strided_slice %171 {offsets = [0, 64], sizes = [2, 32], strides = [1, 1]} : vector<2x128xf32> to vector<2x32xf32>
    %185 = math.tanh %184 : vector<2x32xf32>
    %186 = vector.extract_strided_slice %171 {offsets = [0, 96], sizes = [2, 32], strides = [1, 1]} : vector<2x128xf32> to vector<2x32xf32>
    %187 = arith.negf %186 : vector<2x32xf32>
    %188 = math.exp %187 : vector<2x32xf32>
    %cst_95 = arith.constant 1.000000e+00 : f32
    %189 = vector.broadcast %cst_95 : f32 to vector<2x32xf32>
    %190 = arith.addf %189, %188 : vector<2x32xf32>
    %191 = arith.divf %189, %190 : vector<2x32xf32>
    %192 = arith.mulf %183, %73 : vector<2x32xf32>
    %193 = arith.mulf %177, %185 : vector<2x32xf32>
    %194 = arith.addf %192, %193 : vector<2x32xf32>
    %195 = math.tanh %194 : vector<2x32xf32>
    %196 = arith.mulf %191, %195 : vector<2x32xf32>
    %197 = arith.truncf %196 : vector<2x32xf32> to vector<2x32xbf16>
    %c0_96 = arith.constant 0 : index
    %c0_97 = arith.constant 0 : index
    %198 = vector.load %arg10[%c0_96, %c0_97] : memref<32x768xbf16, #tpu.memory_space<vmem>>, vector<32x768xbf16>
    %cst_98 = arith.constant dense<0.000000e+00> : vector<2x768xf32>
    %199 = tpu.matmul %197, %198, %cst_98 {dimension_numbers = #tpu.dot_dimension_numbers<[1], [0], [0], [1], [0, 0, 1, 1], [], []>} : vector<2x32xbf16>, vector<32x768xbf16>, vector<2x768xf32> -> vector<2x768xf32>
    %c0_99 = arith.constant 0 : index
    %c0_100 = arith.constant 0 : index
    %200 = vector.load %arg11[%c0_99, %c0_100] : memref<16x768xbf16, #tpu.memory_space<vmem>>, vector<16x768xbf16>
    %cst_101 = arith.constant dense<0.000000e+00> : vector<2x768xf32>
    %201 = tpu.matmul %130, %200, %cst_101 {dimension_numbers = #tpu.dot_dimension_numbers<[1], [0], [0], [1], [0, 0, 1, 1], [], []>} : vector<2x16xbf16>, vector<16x768xbf16>, vector<2x768xf32> -> vector<2x768xf32>
    %202 = arith.addf %199, %201 : vector<2x768xf32>
    %c0_102 = arith.constant 0 : index
    %c0_103 = arith.constant 0 : index
    %203 = vector.load %arg12[%c0_102, %c0_103] : memref<32x768xbf16, #tpu.memory_space<vmem>>, vector<32x768xbf16>
    %cst_104 = arith.constant dense<0.000000e+00> : vector<2x768xf32>
    %204 = tpu.matmul %155, %203, %cst_104 {dimension_numbers = #tpu.dot_dimension_numbers<[1], [0], [0], [1], [0, 0, 1, 1], [], []>} : vector<2x32xbf16>, vector<32x768xbf16>, vector<2x768xf32> -> vector<2x768xf32>
    %205 = arith.addf %202, %204 : vector<2x768xf32>
    %c0_105 = arith.constant 0 : index
    %c0_106 = arith.constant 0 : index
    %206 = vector.load %arg13[%c0_105, %c0_106] : memref<16x768xbf16, #tpu.memory_space<vmem>>, vector<16x768xbf16>
    %cst_107 = arith.constant dense<0.000000e+00> : vector<2x768xf32>
    %207 = tpu.matmul %156, %206, %cst_107 {dimension_numbers = #tpu.dot_dimension_numbers<[1], [0], [0], [1], [0, 0, 1, 1], [], []>} : vector<2x16xbf16>, vector<16x768xbf16>, vector<2x768xf32> -> vector<2x768xf32>
    %208 = arith.addf %205, %207 : vector<2x768xf32>
    %c0_108 = arith.constant 0 : index
    %c0_109 = arith.constant 0 : index
    %209 = vector.load %arg14[%c0_108, %c0_109] : memref<1x768xf32, #tpu.memory_space<vmem>>, vector<1x768xf32>
    %210 = vector.broadcast %209 : vector<1x768xf32> to vector<2x768xf32>
    %211 = arith.addf %208, %210 : vector<2x768xf32>
    %212 = vector.extract_strided_slice %211 {offsets = [0, 0], sizes = [2, 128], strides = [1, 1]} : vector<2x768xf32> to vector<2x128xf32>
    %213 = arith.negf %212 : vector<2x128xf32>
    %214 = math.exp %213 : vector<2x128xf32>
    %cst_110 = arith.constant 1.000000e+00 : f32
    %215 = vector.broadcast %cst_110 : f32 to vector<2x128xf32>
    %216 = arith.addf %215, %214 : vector<2x128xf32>
    %217 = arith.divf %215, %216 : vector<2x128xf32>
    %c1_111 = arith.constant 1 : index
    %c0_112 = arith.constant 0 : index
    %c0_113 = arith.constant 0 : index
    %218 = vector.load %arg19[%c1_111, %c0_112, %c0_113] : memref<2x2x768xf32, #tpu.memory_space<vmem>>, vector<1x2x128xf32>
    %219 = vector.shape_cast %218 : vector<1x2x128xf32> to vector<2x128xf32>
    %220 = vector.shape_cast %217 : vector<2x128xf32> to vector<1x2x128xf32>
    tpu.vector_store %arg19[%c1_111, %c0_112, %c0_113], %220 {strides = array<i32>} : memref<2x2x768xf32, #tpu.memory_space<vmem>>, vector<1x2x128xf32>,
    %221 = vector.extract_strided_slice %211 {offsets = [0, 128], sizes = [2, 128], strides = [1, 1]} : vector<2x768xf32> to vector<2x128xf32>
    %c1_114 = arith.constant 1 : index
    %c0_115 = arith.constant 0 : index
    %c128_116 = arith.constant 128 : index
    %222 = vector.load %arg19[%c1_114, %c0_115, %c128_116] : memref<2x2x768xf32, #tpu.memory_space<vmem>>, vector<1x2x128xf32>
    %223 = vector.shape_cast %222 : vector<1x2x128xf32> to vector<2x128xf32>
    %224 = vector.shape_cast %221 : vector<2x128xf32> to vector<1x2x128xf32>
    tpu.vector_store %arg19[%c1_114, %c0_115, %c128_116], %224 {strides = array<i32>} : memref<2x2x768xf32, #tpu.memory_space<vmem>>, vector<1x2x128xf32>,
    %225 = vector.extract_strided_slice %211 {offsets = [0, 256], sizes = [2, 512], strides = [1, 1]} : vector<2x768xf32> to vector<2x512xf32>
    %cst_117 = arith.constant 0.000000e+00 : f32
    %226 = vector.broadcast %cst_117 : f32 to vector<2x512xf32>
    %227 = arith.maximumf %225, %226 : vector<2x512xf32>
    %c1_118 = arith.constant 1 : index
    %c0_119 = arith.constant 0 : index
    %c256_120 = arith.constant 256 : index
    %228 = vector.load %arg19[%c1_118, %c0_119, %c256_120] : memref<2x2x768xf32, #tpu.memory_space<vmem>>, vector<1x2x512xf32>
    %229 = vector.shape_cast %228 : vector<1x2x512xf32> to vector<2x512xf32>
    %230 = vector.shape_cast %227 : vector<2x512xf32> to vector<1x2x512xf32>
    tpu.vector_store %arg19[%c1_118, %c0_119, %c256_120], %230 {strides = array<i32>} : memref<2x2x768xf32, #tpu.memory_space<vmem>>, vector<1x2x512xf32>,
    %c1_121 = arith.constant 1 : index
    %c0_122 = arith.constant 0 : index
    %c0_123 = arith.constant 0 : index
    %231 = vector.load %arg20[%c1_121, %c0_122, %c0_123] : memref<2x2x8xf32, #tpu.memory_space<vmem>>, vector<1x2x8xf32>
    %232 = vector.shape_cast %231 : vector<1x2x8xf32> to vector<2x8xf32>
    %233 = vector.shape_cast %150 : vector<2x8xf32> to vector<1x2x8xf32>
    tpu.vector_store %arg20[%c1_121, %c0_122, %c0_123], %233 {strides = array<i32>} : memref<2x2x8xf32, #tpu.memory_space<vmem>>, vector<1x2x8xf32>,
    %234 = vector.extract_strided_slice %211 {offsets = [0, 128], sizes = [2, 12], strides = [1, 1]} : vector<2x768xf32> to vector<2x12xf32>
    %cst_124 = arith.constant dense<0xFF800000> : vector<2xf32>
    %235 = vector.multi_reduction <maximumf>, %234, %cst_124 [1] : vector<2x12xf32> to vector<2xf32>
    %236 = vector.shape_cast %235 : vector<2xf32> to vector<2x1xf32>
    %237 = vector.broadcast %236 : vector<2x1xf32> to vector<2x12xf32>
    %238 = arith.cmpf oeq, %234, %237 : vector<2x12xf32>
    %c12_i32_125 = arith.constant 12 : i32
    %239 = vector.broadcast %c12_i32_125 : i32 to vector<2x12xi32>
    %240 = arith.select %238, %4, %239 : vector<2x12xi1>, vector<2x12xi32>
    %cst_126 = arith.constant dense<2147483647> : vector<2xi32>
    %241 = vector.multi_reduction <minsi>, %240, %cst_126 [1] : vector<2x12xi32> to vector<2xi32>
    %242 = vector.shape_cast %241 : vector<2xi32> to vector<2x1xi32>
    %243 = vector.broadcast %242 : vector<2x1xi32> to vector<2x12xi32>
    %244 = arith.cmpi eq, %4, %243 : vector<2x12xi32>
    %245 = arith.extui %244 : vector<2x12xi1> to vector<2x12xi32>
    %246 = arith.sitofp %245 : vector<2x12xi32> to vector<2x12xf32>
    %247 = arith.truncf %246 : vector<2x12xf32> to vector<2x12xbf16>
    %c0_127 = arith.constant 0 : index
    %c0_128 = arith.constant 0 : index
    %248 = vector.load %arg15[%c0_127, %c0_128] : memref<12x16xbf16, #tpu.memory_space<vmem>>, vector<12x16xbf16>
    %cst_129 = arith.constant dense<0.000000e+00> : vector<2x16xf32>
    %249 = tpu.matmul %247, %248, %cst_129 {dimension_numbers = #tpu.dot_dimension_numbers<[1], [0], [0], [1], [0, 0, 1, 1], [], []>} : vector<2x12xbf16>, vector<12x16xbf16>, vector<2x16xf32> -> vector<2x16xf32>
    %c0_130 = arith.constant 0 : index
    %c0_131 = arith.constant 0 : index
    %250 = vector.load %arg21[%c0_130, %c0_131] : memref<2x32xf32, #tpu.memory_space<vmem>>, vector<2x32xf32>
    tpu.vector_store %arg21[%c0_130, %c0_131], %196 {strides = array<i32>} : memref<2x32xf32, #tpu.memory_space<vmem>>, vector<2x32xf32>,
    %c0_132 = arith.constant 0 : index
    %c0_133 = arith.constant 0 : index
    %251 = vector.load %arg22[%c0_132, %c0_133] : memref<2x32xf32, #tpu.memory_space<vmem>>, vector<2x32xf32>
    tpu.vector_store %arg22[%c0_132, %c0_133], %194 {strides = array<i32>} : memref<2x32xf32, #tpu.memory_space<vmem>>, vector<2x32xf32>,
    %c0_134 = arith.constant 0 : index
    %c0_135 = arith.constant 0 : index
    %252 = vector.load %arg23[%c0_134, %c0_135] : memref<2x16xf32, #tpu.memory_space<vmem>>, vector<2x16xf32>
    tpu.vector_store %arg23[%c0_134, %c0_135], %249 {strides = array<i32>} : memref<2x16xf32, #tpu.memory_space<vmem>>, vector<2x16xf32>,
    return
  }
  func.func @transform_0(%arg0: i32) -> (i32, i32, i32) {
    %c0_i32 = arith.constant 0 : i32
    %c0_i32_0 = arith.constant 0 : i32
    %c0_i32_1 = arith.constant 0 : i32
    return %arg0, %c0_i32, %c0_i32_0 : i32, i32, i32
  }
  func.func @transform_1(%arg0: i32) -> (i32, i32, i32) {
    %c0_i32 = arith.constant 0 : i32
    %c0_i32_0 = arith.constant 0 : i32
    %c0_i32_1 = arith.constant 0 : i32
    %c0_i32_2 = arith.constant 0 : i32
    return %c0_i32, %c0_i32_0, %c0_i32_1 : i32, i32, i32
  }
  func.func @transform_2(%arg0: i32) -> (i32, i32) {
    %c0_i32 = arith.constant 0 : i32
    %c0_i32_0 = arith.constant 0 : i32
    %c0_i32_1 = arith.constant 0 : i32
    return %c0_i32, %c0_i32_0 : i32, i32
  }
  func.func @transform_3(%arg0: i32) -> (i32, i32) {
    %c0_i32 = arith.constant 0 : i32
    %c0_i32_0 = arith.constant 0 : i32
    %c0_i32_1 = arith.constant 0 : i32
    return %c0_i32, %c0_i32_0 : i32, i32
  }
  func.func @transform_4(%arg0: i32) -> (i32, i32) {
    %c0_i32 = arith.constant 0 : i32
    %c0_i32_0 = arith.constant 0 : i32
    %c0_i32_1 = arith.constant 0 : i32
    return %c0_i32, %c0_i32_0 : i32, i32
  }
  func.func @transform_5(%arg0: i32) -> (i32, i32) {
    %c0_i32 = arith.constant 0 : i32
    %c0_i32_0 = arith.constant 0 : i32
    %c0_i32_1 = arith.constant 0 : i32
    return %c0_i32, %c0_i32_0 : i32, i32
  }
  func.func @transform_6(%arg0: i32) -> (i32, i32) {
    %c0_i32 = arith.constant 0 : i32
    %c0_i32_0 = arith.constant 0 : i32
    %c0_i32_1 = arith.constant 0 : i32
    return %c0_i32, %c0_i32_0 : i32, i32
  }
  func.func @transform_7(%arg0: i32) -> (i32, i32) {
    %c0_i32 = arith.constant 0 : i32
    %c0_i32_0 = arith.constant 0 : i32
    %c0_i32_1 = arith.constant 0 : i32
    return %c0_i32, %c0_i32_0 : i32, i32
  }
  func.func @transform_8(%arg0: i32) -> (i32, i32) {
    %c0_i32 = arith.constant 0 : i32
    %c0_i32_0 = arith.constant 0 : i32
    %c0_i32_1 = arith.constant 0 : i32
    return %c0_i32, %c0_i32_0 : i32, i32
  }
  func.func @transform_9(%arg0: i32) -> (i32, i32) {
    %c0_i32 = arith.constant 0 : i32
    %c0_i32_0 = arith.constant 0 : i32
    %c0_i32_1 = arith.constant 0 : i32
    return %c0_i32, %c0_i32_0 : i32, i32
  }
  func.func @transform_10(%arg0: i32) -> (i32, i32) {
    %c0_i32 = arith.constant 0 : i32
    %c0_i32_0 = arith.constant 0 : i32
    %c0_i32_1 = arith.constant 0 : i32
    return %c0_i32, %c0_i32_0 : i32, i32
  }
  func.func @transform_11(%arg0: i32) -> (i32, i32) {
    %c0_i32 = arith.constant 0 : i32
    %c0_i32_0 = arith.constant 0 : i32
    %c0_i32_1 = arith.constant 0 : i32
    return %c0_i32, %c0_i32_0 : i32, i32
  }
  func.func @transform_12(%arg0: i32) -> (i32, i32) {
    %c0_i32 = arith.constant 0 : i32
    %c0_i32_0 = arith.constant 0 : i32
    %c0_i32_1 = arith.constant 0 : i32
    return %c0_i32, %c0_i32_0 : i32, i32
  }
  func.func @transform_13(%arg0: i32) -> (i32, i32) {
    %c0_i32 = arith.constant 0 : i32
    %c0_i32_0 = arith.constant 0 : i32
    %c0_i32_1 = arith.constant 0 : i32
    return %c0_i32, %c0_i32_0 : i32, i32
  }
  func.func @transform_14(%arg0: i32) -> (i32, i32) {
    %c0_i32 = arith.constant 0 : i32
    %c0_i32_0 = arith.constant 0 : i32
    %c0_i32_1 = arith.constant 0 : i32
    return %c0_i32, %c0_i32_0 : i32, i32
  }
  func.func @transform_15(%arg0: i32) -> (i32, i32) {
    %c0_i32 = arith.constant 0 : i32
    %c0_i32_0 = arith.constant 0 : i32
    %c0_i32_1 = arith.constant 0 : i32
    return %c0_i32, %c0_i32_0 : i32, i32
  }
  func.func @transform_16(%arg0: i32) -> (i32, i32) {
    %c0_i32 = arith.constant 0 : i32
    %c0_i32_0 = arith.constant 0 : i32
    %c0_i32_1 = arith.constant 0 : i32
    return %c0_i32, %c0_i32_0 : i32, i32
  }
  func.func @transform_17(%arg0: i32) -> (i32, i32) {
    %c0_i32 = arith.constant 0 : i32
    %c0_i32_0 = arith.constant 0 : i32
    %c0_i32_1 = arith.constant 0 : i32
    return %c0_i32, %c0_i32_0 : i32, i32
  }
  func.func @transform_18(%arg0: i32) -> (i32, i32, i32) {
    %c0_i32 = arith.constant 0 : i32
    %c0_i32_0 = arith.constant 0 : i32
    %c0_i32_1 = arith.constant 0 : i32
    return %arg0, %c0_i32, %c0_i32_0 : i32, i32, i32
  }
  func.func @transform_19(%arg0: i32) -> (i32, i32, i32) {
    %c0_i32 = arith.constant 0 : i32
    %c0_i32_0 = arith.constant 0 : i32
    %c0_i32_1 = arith.constant 0 : i32
    return %arg0, %c0_i32, %c0_i32_0 : i32, i32, i32
  }
  func.func @transform_20(%arg0: i32) -> (i32, i32) {
    %c0_i32 = arith.constant 0 : i32
    %c0_i32_0 = arith.constant 0 : i32
    %c0_i32_1 = arith.constant 0 : i32
    return %c0_i32, %c0_i32_0 : i32, i32
  }
  func.func @transform_21(%arg0: i32) -> (i32, i32) {
    %c0_i32 = arith.constant 0 : i32
    %c0_i32_0 = arith.constant 0 : i32
    %c0_i32_1 = arith.constant 0 : i32
    return %c0_i32, %c0_i32_0 : i32, i32
  }
}

</mosaic_0001>

<llo_original>
// kernel: forward.4
$region0: #{forward.4}
  #allocation0 [shape = 'u32[]', space=smem, size = 0x4, offset = 0x4, fixed_abs, tag = 'smem constant byte address 0x4 - core index']
  #allocation1 [shape = 'u32[144,128]{1,0:T(1,128)}', space=vmem, size = 0x12000, scoped, tag = 'internal scratch']
  %s0 = inlined_call_operand.vmem [shape: bf16[8,392], index: 0, kind: input, shape index: {}]
  %s1 = inlined_call_operand.vmem [shape: bf16[392,16], index: 1, kind: input, shape index: {}]
  %s2 = inlined_call_operand.hbm [shape: f32[1,16], index: 2, kind: input, shape index: {}]
  %s3 = inlined_call_operand.vmem [shape: bf16[8,16], index: 3, kind: output, shape index: {}]
  %s4 = sld [smem:[#allocation0]]
  $region26: #{forward.4} parent=0
    _
  %s6 = ssub.s32 1, %s4
  %s7 = scalar_select 0, %s6, %s4
  $region1: #{forward.4} parent=0
    #allocation2 [shape = 'u8[512]{0}', space=vmem, size = 0x400, scoped, tag = 'input window, operand 2, single buffered']
    #allocation3 [shape = 's32[1]{0}', space=sflag, size = 0x4, scoped, tag = 'scoped memory for forward.4']
    %8 = vsyncpa [#allocation3], 0
    // Predicated region
    $region2: #{forward.4} parent=1 // pred_check
      _
    $region3: #{forward.4} parent=1 // pred_check_branch
      %10 = sbr.rel (0) target = $region5
    $region4: #{forward.4} parent=1 // pred_region
      _
    $region5: #{forward.4} parent=1 // pred_fallthru
      _
    // Predicated region
    $region6: #{forward.4} parent=1 // pred_check
      _
    $region7: #{forward.4} parent=1 // pred_check_branch
      %12 = sbr.rel (0) target = $region9
    $region8: #{forward.4} parent=1 // pred_region
      _
    $region9: #{forward.4} parent=1 // pred_fallthru
      _
    // Predicated region
    $region10: #{forward.4} parent=1 // pred_check
      _
    $region11: #{forward.4} parent=1 // pred_check_branch
      %14 = sbr.rel (0) target = $region13
    $region12: #{forward.4} parent=1 // pred_region
      %s16 = ssub.s32 16, 16
      %17 = vsyncadd [#allocation3], %s16
      %s19 = sshll.u32 [#allocation2], 4
      %s20 = int_to_ptr.vmem [resolvable:$true] %s19
      %22 = dma.hbm_to_vmem [thread:$0]  %s2, 16, %s20, [#allocation3]
    $region13: #{forward.4} parent=1 // pred_fallthru
      _
    // Predicated region
    $region14: #{forward.4} parent=1 // pred_check
      _
    $region15: #{forward.4} parent=1 // pred_check_branch
      %24 = sbr.rel (0) target = $region17
    $region16: #{forward.4} parent=1 // pred_region
      %25 = dma.done [#allocation3], 16
    $region17: #{forward.4} parent=1 // pred_fallthru
      _
    %v27 = vld [vmem:[%s0] sm:$0xff]
    %v28 = vld [vmem:[%s0 + $0x8] sm:$0xff]
    %v29 = vld [vmem:[%s1] sm:$0xf]
    %v30 = vld [vmem:[%s1 + $0x4] sm:$0xf]
    %v31 = vld [vmem:[%s1 + $0x8] sm:$0xf]
    %v32 = vld [vmem:[%s1 + $0xc] sm:$0xf]
    %v33 = vld [vmem:[%s1 + $0x10] sm:$0xf]
    %v34 = vld [vmem:[%s1 + $0x14] sm:$0xf]
    %v35 = vld [vmem:[%s1 + $0x18] sm:$0xf]
    %v36 = vld [vmem:[%s1 + $0x1c] sm:$0xf]
    %v37 = vld [vmem:[%s1 + $0x20] sm:$0xf]
    %v38 = vld [vmem:[%s1 + $0x24] sm:$0xf]
    %v39 = vld [vmem:[%s1 + $0x28] sm:$0xf]
    %v40 = vld [vmem:[%s1 + $0x2c] sm:$0xf]
    %v41 = vld [vmem:[%s1 + $0x30] sm:$0xf]
    %v42 = vld [vmem:[%s1 + $0x34] sm:$0xf]
    %v43 = vld [vmem:[%s1 + $0x38] sm:$0xf]
    %v44 = vld [vmem:[%s1 + $0x3c] sm:$0xf]
    %v45 = vld [vmem:[%s1 + $0x40] sm:$0xf]
    %v46 = vld [vmem:[%s1 + $0x44] sm:$0xf]
    %v47 = vld [vmem:[%s1 + $0x48] sm:$0xf]
    %v48 = vld [vmem:[%s1 + $0x4c] sm:$0xf]
    %v49 = vld [vmem:[%s1 + $0x50] sm:$0xf]
    %v50 = vld [vmem:[%s1 + $0x54] sm:$0xf]
    %v51 = vld [vmem:[%s1 + $0x58] sm:$0xf]
    %v52 = vld [vmem:[%s1 + $0x5c] sm:$0xf]
    %v53 = vld [vmem:[%s1 + $0x60] sm:$0xf]
    %v54 = vld [vmem:[%s1 + $0x64] sm:$0xf]
    %v55 = vld [vmem:[%s1 + $0x68] sm:$0xf]
    %v56 = vld [vmem:[%s1 + $0x6c] sm:$0xf]
    %v57 = vld [vmem:[%s1 + $0x70] sm:$0xf]
    %v58 = vld [vmem:[%s1 + $0x74] sm:$0xf]
    %v59 = vld [vmem:[%s1 + $0x78] sm:$0xf]
    %v60 = vld [vmem:[%s1 + $0x7c] sm:$0xf]
    %v61 = vld [vmem:[%s1 + $0x80] sm:$0xf]
    %v62 = vld [vmem:[%s1 + $0x84] sm:$0xf]
    %v63 = vld [vmem:[%s1 + $0x88] sm:$0xf]
    %v64 = vld [vmem:[%s1 + $0x8c] sm:$0xf]
    %v65 = vld [vmem:[%s1 + $0x90] sm:$0xf]
    %v66 = vld [vmem:[%s1 + $0x94] sm:$0xf]
    %v67 = vld [vmem:[%s1 + $0x98] sm:$0xf]
    %v68 = vld [vmem:[%s1 + $0x9c] sm:$0xf]
    %v69 = vld [vmem:[%s1 + $0xa0] sm:$0xf]
    %v70 = vld [vmem:[%s1 + $0xa4] sm:$0xf]
    %v71 = vld [vmem:[%s1 + $0xa8] sm:$0xf]
    %v72 = vld [vmem:[%s1 + $0xac] sm:$0xf]
    %v73 = vld [vmem:[%s1 + $0xb0] sm:$0xf]
    %v74 = vld [vmem:[%s1 + $0xb4] sm:$0xf]
    %v75 = vld [vmem:[%s1 + $0xb8] sm:$0xf]
    %v76 = vld [vmem:[%s1 + $0xbc] sm:$0xf]
    %v77 = vld [vmem:[%s1 + $0xc0] sm:$0xf]
    %v78 = vld [vmem:[#allocation2] sm:$0x1]
    %v80 = vlaneseq
    %v81 = vshrl.u32 %v80, 7
    %v82 = vsub.s32 0, %v81
    %v83 = vrot.slane %v78, %v82
    %v87 = vunpack.c.l.b16 %v27
    %v88 = vunpack.c.h.b16 %v27
    %v89 = vunpack.c.l.b16 %v28
    %v90 = vunpack.c.h.b16 %v28
    %v91 = vpack.c.b16 %v87, %v87
    %v92 = vpack.c.b16 %v88, %v88
    %v93 = vpack.c.b16 %v89, %v89
    %v94 = vpack.c.b16 %v90, %v90
    %v147 = vunpack.c.l.b16 %v29
    %v148 = vunpack.c.l.b16 %v30
    %v149 = vunpack.c.l.b16 %v31
    %v150 = vunpack.c.l.b16 %v32
    %v151 = vunpack.c.l.b16 %v33
    %v152 = vunpack.c.l.b16 %v34
    %v153 = vunpack.c.l.b16 %v35
    %v154 = vunpack.c.l.b16 %v36
    %v155 = vunpack.c.l.b16 %v37
    %v156 = vunpack.c.l.b16 %v38
    %v157 = vunpack.c.l.b16 %v39
    %v158 = vunpack.c.l.b16 %v40
    %v159 = vunpack.c.l.b16 %v41
    %v160 = vunpack.c.l.b16 %v42
    %v161 = vunpack.c.l.b16 %v43
    %v162 = vunpack.c.l.b16 %v44
    %v163 = vunpack.c.l.b16 %v45
    %v164 = vunpack.c.l.b16 %v46
    %v165 = vunpack.c.l.b16 %v47
    %v166 = vunpack.c.l.b16 %v48
    %v167 = vunpack.c.l.b16 %v49
    %v168 = vunpack.c.l.b16 %v50
    %v169 = vunpack.c.l.b16 %v51
    %v170 = vunpack.c.l.b16 %v52
    %v171 = vunpack.c.l.b16 %v53
    %v172 = vunpack.c.l.b16 %v54
    %v173 = vunpack.c.l.b16 %v55
    %v174 = vunpack.c.l.b16 %v56
    %v175 = vunpack.c.l.b16 %v57
    %v176 = vunpack.c.l.b16 %v58
    %v177 = vunpack.c.l.b16 %v59
    %v178 = vunpack.c.l.b16 %v60
    %v179 = vunpack.c.l.b16 %v61
    %v180 = vunpack.c.l.b16 %v62
    %v181 = vunpack.c.l.b16 %v63
    %v182 = vunpack.c.l.b16 %v64
    %v183 = vunpack.c.l.b16 %v65
    %v184 = vunpack.c.l.b16 %v66
    %v185 = vunpack.c.l.b16 %v67
    %v186 = vunpack.c.l.b16 %v68
    %v187 = vunpack.c.l.b16 %v69
    %v188 = vunpack.c.l.b16 %v70
    %v189 = vunpack.c.l.b16 %v71
    %v190 = vunpack.c.l.b16 %v72
    %v191 = vunpack.c.l.b16 %v73
    %v192 = vunpack.c.l.b16 %v74
    %v193 = vunpack.c.l.b16 %v75
    %v194 = vunpack.c.l.b16 %v76
    %v195 = vunpack.c.l.b16 %v77
    %v196 = vpack.c.b16 %v148, %v147
    %v197 = vpack.c.b16 %v150, %v149
    %v198 = vpack.c.b16 %v152, %v151
    %v199 = vpack.c.b16 %v154, %v153
    %v200 = vpack.c.b16 %v156, %v155
    %v201 = vpack.c.b16 %v158, %v157
    %v202 = vpack.c.b16 %v160, %v159
    %v203 = vpack.c.b16 %v162, %v161
    %v204 = vpack.c.b16 %v164, %v163
    %v205 = vpack.c.b16 %v166, %v165
    %v206 = vpack.c.b16 %v168, %v167
    %v207 = vpack.c.b16 %v170, %v169
    %v208 = vpack.c.b16 %v172, %v171
    %v209 = vpack.c.b16 %v174, %v173
    %v210 = vpack.c.b16 %v176, %v175
    %v211 = vpack.c.b16 %v178, %v177
    %v212 = vpack.c.b16 %v180, %v179
    %v213 = vpack.c.b16 %v182, %v181
    %v214 = vpack.c.b16 %v184, %v183
    %v215 = vpack.c.b16 %v186, %v185
    %v216 = vpack.c.b16 %v188, %v187
    %v217 = vpack.c.b16 %v190, %v189
    %v218 = vpack.c.b16 %v192, %v191
    %v219 = vpack.c.b16 %v194, %v193
    %v220 = vpack.c.b16 %v195, %v195
    %vm245 = vcmask 64512
    %v247 = vsel %vm245, %v94, 0
    %vm249 = vcmask 1043456
    %v251 = vsel %vm249, %v220, 0
    %253 = vmatprep.subr.bf16.mxu0 0
    %254 = vmatpush1.bf16.msra.mxu0 %v203
    %255 = vmatprep.subr.bf16.mxu0 0
    %256 = vmatpush1.bf16.msra.mxu0 %v202
    %257 = vmatprep.subr.bf16.mxu0 0
    %258 = vmatpush1.bf16.msra.mxu0 %v201
    %259 = vmatprep.subr.bf16.mxu0 0
    %260 = vmatpush1.bf16.msra.mxu0 %v200
    %261 = vmatprep.subr.bf16.mxu0 0
    %262 = vmatpush1.bf16.msra.mxu0 %v199
    %263 = vmatprep.subr.bf16.mxu0 0
    %264 = vmatpush1.bf16.msra.mxu0 %v198
    %265 = vmatprep.subr.bf16.mxu0 0
    %266 = vmatpush1.bf16.msra.mxu0 %v197
    %267 = vmatprep.subr.bf16.mxu0 0
    %268 = vmatpush1.bf16.msra.mxu0 %v196
    %269 = vmatprep.subr.bf16.mxu0 0
    %270 = vmatpush2.bf16.msra.mxu0 %v211
    %271 = vmatprep.subr.bf16.mxu0 0
    %272 = vmatpush2.bf16.msra.mxu0 %v210
    %273 = vmatprep.subr.bf16.mxu0 0
    %274 = vmatpush2.bf16.msra.mxu0 %v209
    %275 = vmatprep.subr.bf16.mxu0 0
    %276 = vmatpush2.bf16.msra.mxu0 %v208
    %277 = vmatprep.subr.bf16.mxu0 0
    %278 = vmatpush2.bf16.msra.mxu0 %v207
    %279 = vmatprep.subr.bf16.mxu0 0
    %280 = vmatpush2.bf16.msra.mxu0 %v206
    %281 = vmatprep.subr.bf16.mxu0 0
    %282 = vmatpush2.bf16.msra.mxu0 %v205
    %283 = vmatprep.subr.bf16.mxu0 0
    %284 = vmatpush2.bf16.msra.mxu0 %v204
    %285 = vmatprep.mubr.bf16.mxu0 %v92
    %286 = vmatmul.mubr.bf16.gmra.mxu0 %v91
    %v287 = vpop.f32.mrf.mxu0
    %v288 = vadd.f32 %v83, %v287
    %v289 = vpop.f32.mrf.mxu0
    %v290 = vpop.f32.mrf.mxu0
    %v291 = vpop.f32.mrf.mxu0
    %292 = vdwg.mxu0
    %293 = vmatprep.subr.bf16.mxu0 0
    %294 = vmatpush1.bf16.msra.mxu0 %v219
    %295 = vmatprep.subr.bf16.mxu0 0
    %296 = vmatpush1.bf16.msra.mxu0 %v218
    %297 = vmatprep.subr.bf16.mxu0 0
    %298 = vmatpush1.bf16.msra.mxu0 %v217
    %299 = vmatprep.subr.bf16.mxu0 0
    %300 = vmatpush1.bf16.msra.mxu0 %v216
    %301 = vmatprep.subr.bf16.mxu0 0
    %302 = vmatpush1.bf16.msra.mxu0 %v215
    %303 = vmatprep.subr.bf16.mxu0 0
    %304 = vmatpush1.bf16.msra.mxu0 %v214
    %305 = vmatprep.subr.bf16.mxu0 0
    %306 = vmatpush1.bf16.msra.mxu0 %v213
    %307 = vmatprep.subr.bf16.mxu0 0
    %308 = vmatpush1.bf16.msra.mxu0 %v212
    %309 = vmatprep.subr.bf16.mxu0 0
    %310 = vmatpush2.bf16.msra.mxu0 0
    %311 = vmatprep.subr.bf16.mxu0 0
    %312 = vmatpush2.bf16.msra.mxu0 0
    %313 = vmatprep.subr.bf16.mxu0 0
    %314 = vmatpush2.bf16.msra.mxu0 0
    %315 = vmatprep.subr.bf16.mxu0 0
    %316 = vmatpush2.bf16.msra.mxu0 0
    %317 = vmatprep.subr.bf16.mxu0 0
    %318 = vmatpush2.bf16.msra.mxu0 0
    %319 = vmatprep.subr.bf16.mxu0 0
    %320 = vmatpush2.bf16.msra.mxu0 0
    %321 = vmatprep.subr.bf16.mxu0 0
    %322 = vmatpush2.bf16.msra.mxu0 0
    %323 = vmatprep.subr.bf16.mxu0 0
    %324 = vmatpush2.bf16.msra.mxu0 %v251
    %325 = vmatprep.mubr.bf16.mxu0 %v247
    %326 = vmatmul.mubr.bf16.gmra.mxu0 %v93
    %v327 = vpop.f32.mrf.mxu0
    %v328 = vadd.f32 %v288, %v327
    %v329 = vpop.f32.mrf.mxu0
    %v330 = vpop.f32.mrf.mxu0
    %v331 = vpop.f32.mrf.mxu0
    %332 = vdwg.mxu0
    %v333 = vmax.f32 %v328, 0.0
    %v334 = vpack.c.bf16 %v333, %v333
    %vm335 = vcmask 125952
    %336 = vst.msk [vmem:[%s3] sm:$0xf] %vm335, %v334
    // Predicated region
    $region18: #{forward.4} parent=1 // pred_check
      _
    $region19: #{forward.4} parent=1 // pred_check_branch
      %338 = sbr.rel (0) target = $region21
    $region20: #{forward.4} parent=1 // pred_region
      _
    $region21: #{forward.4} parent=1 // pred_fallthru
      _
    // Predicated region
    $region22: #{forward.4} parent=1 // pred_check
      _
    $region23: #{forward.4} parent=1 // pred_check_branch
      %340 = sbr.rel (0) target = $region25
    $region24: #{forward.4} parent=1 // pred_region
      _
    $region25: #{forward.4} parent=1 // pred_fallthru
      _
    %341 = vsyncpa [#allocation3], 1

// kernel: forward.3
$region0: #{forward.3}
  #allocation0 [shape = 'u32[]', space=smem, size = 0x4, offset = 0x4, fixed_abs, tag = 'smem constant byte address 0x4 - core index']
  #allocation1 [shape = 'u32[144,128]{1,0:T(1,128)}', space=vmem, size = 0x12000, scoped, tag = 'internal scratch']
  %s0 = inlined_call_operand.vmem [shape: bf16[392,32], index: 0, kind: input, shape index: {}]
  %s1 = inlined_call_operand.vmem [shape: bf16[32,16], index: 1, kind: input, shape index: {}]
  %s2 = inlined_call_operand.hbm [shape: f32[1,16], index: 2, kind: input, shape index: {}]
  %s3 = inlined_call_operand.vmem [shape: bf16[16,8], index: 3, kind: input, shape index: {}]
  %s4 = inlined_call_operand.hbm [shape: f32[1,8], index: 4, kind: input, shape index: {}]
  %s5 = inlined_call_operand.vmem [shape: bf16[392,8], index: 5, kind: output, shape index: {}]
  %s6 = sld [smem:[#allocation0]]
  $region38: #{forward.3} parent=0
    _
  %s8 = ssub.s32 1, %s6
  %s9 = scalar_select 0, %s8, %s6
  $region1: #{forward.3} parent=0
    #allocation2 [shape = 'u8[512]{0}', space=vmem, size = 0x400, scoped, tag = 'input window, operand 2, single buffered']
    #allocation3 [shape = 's32[1]{0}', space=sflag, size = 0x4, scoped, tag = 'scoped memory for forward.3']
    #allocation4 [shape = 'u8[512]{0}', space=vmem, size = 0x400, scoped, tag = 'input window, operand 4, single buffered']
    #allocation5 [shape = 's32[1]{0}', space=sflag, size = 0x4, scoped, tag = 'scoped memory for forward.3']
    %10 = vsyncpa [#allocation3], 0
    %11 = vsyncpa [#allocation5], 0
    // Predicated region
    $region2: #{forward.3} parent=1 // pred_check
      _
    $region3: #{forward.3} parent=1 // pred_check_branch
      %13 = sbr.rel (0) target = $region5
    $region4: #{forward.3} parent=1 // pred_region
      _
    $region5: #{forward.3} parent=1 // pred_fallthru
      _
    // Predicated region
    $region6: #{forward.3} parent=1 // pred_check
      _
    $region7: #{forward.3} parent=1 // pred_check_branch
      %15 = sbr.rel (0) target = $region9
    $region8: #{forward.3} parent=1 // pred_region
      _
    $region9: #{forward.3} parent=1 // pred_fallthru
      _
    // Predicated region
    $region10: #{forward.3} parent=1 // pred_check
      _
    $region11: #{forward.3} parent=1 // pred_check_branch
      %17 = sbr.rel (0) target = $region13
    $region12: #{forward.3} parent=1 // pred_region
      %s19 = ssub.s32 16, 16
      %20 = vsyncadd [#allocation3], %s19
      %s22 = sshll.u32 [#allocation2], 4
      %s23 = int_to_ptr.vmem [resolvable:$true] %s22
      %25 = dma.hbm_to_vmem [thread:$0]  %s2, 16, %s23, [#allocation3]
    $region13: #{forward.3} parent=1 // pred_fallthru
      _
    // Predicated region
    $region14: #{forward.3} parent=1 // pred_check
      _
    $region15: #{forward.3} parent=1 // pred_check_branch
      %27 = sbr.rel (0) target = $region17
    $region16: #{forward.3} parent=1 // pred_region
      _
    $region17: #{forward.3} parent=1 // pred_fallthru
      _
    // Predicated region
    $region18: #{forward.3} parent=1 // pred_check
      _
    $region19: #{forward.3} parent=1 // pred_check_branch
      %29 = sbr.rel (0) target = $region21
    $region20: #{forward.3} parent=1 // pred_region
      %s31 = ssub.s32 16, 16
      %32 = vsyncadd [#allocation5], %s31
      %s34 = sshll.u32 [#allocation4], 4
      %s35 = int_to_ptr.vmem [resolvable:$true] %s34
      %37 = dma.hbm_to_vmem [thread:$0]  %s4, 16, %s35, [#allocation5]
    $region21: #{forward.3} parent=1 // pred_fallthru
      _
    // Predicated region
    $region22: #{forward.3} parent=1 // pred_check
      _
    $region23: #{forward.3} parent=1 // pred_check_branch
      %39 = sbr.rel (0) target = $region25
    $region24: #{forward.3} parent=1 // pred_region
      %40 = dma.done [#allocation3], 16
    $region25: #{forward.3} parent=1 // pred_fallthru
      _
    // Predicated region
    $region26: #{forward.3} parent=1 // pred_check
      _
    $region27: #{forward.3} parent=1 // pred_check_branch
      %42 = sbr.rel (0) target = $region29
    $region28: #{forward.3} parent=1 // pred_region
      %43 = dma.done [#allocation5], 16
    $region29: #{forward.3} parent=1 // pred_fallthru
      _
    %v45 = vld [vmem:[%s0] sm:$0xf]
    %v46 = vld [vmem:[%s0 + $0x4] sm:$0xf]
    %v47 = vld [vmem:[%s0 + $0x8] sm:$0xf]
    %v48 = vld [vmem:[%s0 + $0xc] sm:$0xf]
    %v49 = vld [vmem:[%s0 + $0x10] sm:$0xf]
    %v50 = vld [vmem:[%s0 + $0x14] sm:$0xf]
    %v51 = vld [vmem:[%s0 + $0x18] sm:$0xf]
    %v52 = vld [vmem:[%s0 + $0x1c] sm:$0xf]
    %v53 = vld [vmem:[%s0 + $0x20] sm:$0xf]
    %v54 = vld [vmem:[%s0 + $0x24] sm:$0xf]
    %v55 = vld [vmem:[%s0 + $0x28] sm:$0xf]
    %v56 = vld [vmem:[%s0 + $0x2c] sm:$0xf]
    %v57 = vld [vmem:[%s0 + $0x30] sm:$0xf]
    %v58 = vld [vmem:[%s0 + $0x34] sm:$0xf]
    %v59 = vld [vmem:[%s0 + $0x38] sm:$0xf]
    %v60 = vld [vmem:[%s0 + $0x3c] sm:$0xf]
    %v61 = vld [vmem:[%s0 + $0x40] sm:$0xf]
    %v62 = vld [vmem:[%s0 + $0x44] sm:$0xf]
    %v63 = vld [vmem:[%s0 + $0x48] sm:$0xf]
    %v64 = vld [vmem:[%s0 + $0x4c] sm:$0xf]
    %v65 = vld [vmem:[%s0 + $0x50] sm:$0xf]
    %v66 = vld [vmem:[%s0 + $0x54] sm:$0xf]
    %v67 = vld [vmem:[%s0 + $0x58] sm:$0xf]
    %v68 = vld [vmem:[%s0 + $0x5c] sm:$0xf]
    %v69 = vld [vmem:[%s0 + $0x60] sm:$0xf]
    %v70 = vld [vmem:[%s0 + $0x64] sm:$0xf]
    %v71 = vld [vmem:[%s0 + $0x68] sm:$0xf]
    %v72 = vld [vmem:[%s0 + $0x6c] sm:$0xf]
    %v73 = vld [vmem:[%s0 + $0x70] sm:$0xf]
    %v74 = vld [vmem:[%s0 + $0x74] sm:$0xf]
    %v75 = vld [vmem:[%s0 + $0x78] sm:$0xf]
    %v76 = vld [vmem:[%s0 + $0x7c] sm:$0xf]
    %v77 = vld [vmem:[%s0 + $0x80] sm:$0xf]
    %v78 = vld [vmem:[%s0 + $0x84] sm:$0xf]
    %v79 = vld [vmem:[%s0 + $0x88] sm:$0xf]
    %v80 = vld [vmem:[%s0 + $0x8c] sm:$0xf]
    %v81 = vld [vmem:[%s0 + $0x90] sm:$0xf]
    %v82 = vld [vmem:[%s0 + $0x94] sm:$0xf]
    %v83 = vld [vmem:[%s0 + $0x98] sm:$0xf]
    %v84 = vld [vmem:[%s0 + $0x9c] sm:$0xf]
    %v85 = vld [vmem:[%s0 + $0xa0] sm:$0xf]
    %v86 = vld [vmem:[%s0 + $0xa4] sm:$0xf]
    %v87 = vld [vmem:[%s0 + $0xa8] sm:$0xf]
    %v88 = vld [vmem:[%s0 + $0xac] sm:$0xf]
    %v89 = vld [vmem:[%s0 + $0xb0] sm:$0xf]
    %v90 = vld [vmem:[%s0 + $0xb4] sm:$0xf]
    %v91 = vld [vmem:[%s0 + $0xb8] sm:$0xf]
    %v92 = vld [vmem:[%s0 + $0xbc] sm:$0xf]
    %v93 = vld [vmem:[%s0 + $0xc0] sm:$0xf]
    %v94 = vld [vmem:[%s1] sm:$0xf]
    %v95 = vld [vmem:[%s1 + $0x4] sm:$0xf]
    %v96 = vld [vmem:[%s1 + $0x8] sm:$0xf]
    %v97 = vld [vmem:[%s1 + $0xc] sm:$0xf]
    %v98 = vld [vmem:[#allocation2] sm:$0x1]
    %v100 = vlaneseq
    %v101 = vshrl.u32 %v100, 7
    %v102 = vsub.s32 0, %v101
    %v103 = vrot.slane %v98, %v102
    %v154 = vunpack.c.l.b16 %v45
    %v155 = vunpack.c.l.b16 %v46
    %v156 = vunpack.c.l.b16 %v47
    %v157 = vunpack.c.l.b16 %v48
    %v158 = vunpack.c.l.b16 %v49
    %v159 = vunpack.c.l.b16 %v50
    %v160 = vunpack.c.l.b16 %v51
    %v161 = vunpack.c.l.b16 %v52
    %v162 = vunpack.c.l.b16 %v53
    %v163 = vunpack.c.l.b16 %v54
    %v164 = vunpack.c.l.b16 %v55
    %v165 = vunpack.c.l.b16 %v56
    %v166 = vunpack.c.l.b16 %v57
    %v167 = vunpack.c.l.b16 %v58
    %v168 = vunpack.c.l.b16 %v59
    %v169 = vunpack.c.l.b16 %v60
    %v170 = vunpack.c.l.b16 %v61
    %v171 = vunpack.c.l.b16 %v62
    %v172 = vunpack.c.l.b16 %v63
    %v173 = vunpack.c.l.b16 %v64
    %v174 = vunpack.c.l.b16 %v65
    %v175 = vunpack.c.l.b16 %v66
    %v176 = vunpack.c.l.b16 %v67
    %v177 = vunpack.c.l.b16 %v68
    %v178 = vunpack.c.l.b16 %v69
    %v179 = vunpack.c.l.b16 %v70
    %v180 = vunpack.c.l.b16 %v71
    %v181 = vunpack.c.l.b16 %v72
    %v182 = vunpack.c.l.b16 %v73
    %v183 = vunpack.c.l.b16 %v74
    %v184 = vunpack.c.l.b16 %v75
    %v185 = vunpack.c.l.b16 %v76
    %v186 = vunpack.c.l.b16 %v77
    %v187 = vunpack.c.l.b16 %v78
    %v188 = vunpack.c.l.b16 %v79
    %v189 = vunpack.c.l.b16 %v80
    %v190 = vunpack.c.l.b16 %v81
    %v191 = vunpack.c.l.b16 %v82
    %v192 = vunpack.c.l.b16 %v83
    %v193 = vunpack.c.l.b16 %v84
    %v194 = vunpack.c.l.b16 %v85
    %v195 = vunpack.c.l.b16 %v86
    %v196 = vunpack.c.l.b16 %v87
    %v197 = vunpack.c.l.b16 %v88
    %v198 = vunpack.c.l.b16 %v89
    %v199 = vunpack.c.l.b16 %v90
    %v200 = vunpack.c.l.b16 %v91
    %v201 = vunpack.c.l.b16 %v92
    %v202 = vunpack.c.l.b16 %v93
    %v203 = vpack.c.b16 %v155, %v154
    %v204 = vpack.c.b16 %v157, %v156
    %v205 = vpack.c.b16 %v159, %v158
    %v206 = vpack.c.b16 %v161, %v160
    %v207 = vpack.c.b16 %v163, %v162
    %v208 = vpack.c.b16 %v165, %v164
    %v209 = vpack.c.b16 %v167, %v166
    %v210 = vpack.c.b16 %v169, %v168
    %v211 = vpack.c.b16 %v171, %v170
    %v212 = vpack.c.b16 %v173, %v172
    %v213 = vpack.c.b16 %v175, %v174
    %v214 = vpack.c.b16 %v177, %v176
    %v215 = vpack.c.b16 %v179, %v178
    %v216 = vpack.c.b16 %v181, %v180
    %v217 = vpack.c.b16 %v183, %v182
    %v218 = vpack.c.b16 %v185, %v184
    %v219 = vpack.c.b16 %v187, %v186
    %v220 = vpack.c.b16 %v189, %v188
    %v221 = vpack.c.b16 %v191, %v190
    %v222 = vpack.c.b16 %v193, %v192
    %v223 = vpack.c.b16 %v195, %v194
    %v224 = vpack.c.b16 %v197, %v196
    %v225 = vpack.c.b16 %v199, %v198
    %v226 = vpack.c.b16 %v201, %v200
    %v227 = vpack.c.b16 %v202, %v202
    %v232 = vunpack.c.l.b16 %v94
    %v233 = vunpack.c.l.b16 %v95
    %v234 = vunpack.c.l.b16 %v96
    %v235 = vunpack.c.l.b16 %v97
    %v236 = vpack.c.b16 %v233, %v232
    %v237 = vpack.c.b16 %v235, %v234
    %vm240 = vcmask 261120
    %v242 = vsel %vm240, %v203, 0
    %v245 = vsel %vm240, %v204, 0
    %v248 = vsel %vm240, %v205, 0
    %v251 = vsel %vm240, %v206, 0
    %v254 = vsel %vm240, %v207, 0
    %v257 = vsel %vm240, %v208, 0
    %v260 = vsel %vm240, %v209, 0
    %v263 = vsel %vm240, %v210, 0
    %v266 = vsel %vm240, %v211, 0
    %v269 = vsel %vm240, %v212, 0
    %v272 = vsel %vm240, %v213, 0
    %v275 = vsel %vm240, %v214, 0
    %v278 = vsel %vm240, %v215, 0
    %v281 = vsel %vm240, %v216, 0
    %v284 = vsel %vm240, %v217, 0
    %v287 = vsel %vm240, %v218, 0
    %v290 = vsel %vm240, %v219, 0
    %v293 = vsel %vm240, %v220, 0
    %v296 = vsel %vm240, %v221, 0
    %v299 = vsel %vm240, %v222, 0
    %v302 = vsel %vm240, %v223, 0
    %v305 = vsel %vm240, %v224, 0
    %v308 = vsel %vm240, %v225, 0
    %v311 = vsel %vm240, %v226, 0
    %v314 = vsel %vm240, %v227, 0
    %316 = vmatprep.subr.bf16.mxu0 0
    %317 = vmatpush1.bf16.msra.mxu0 0
    %318 = vmatprep.subr.bf16.mxu0 0
    %319 = vmatpush1.bf16.msra.mxu0 0
    %320 = vmatprep.subr.bf16.mxu0 0
    %321 = vmatpush1.bf16.msra.mxu0 0
    %322 = vmatprep.subr.bf16.mxu0 0
    %323 = vmatpush1.bf16.msra.mxu0 0
    %324 = vmatprep.subr.bf16.mxu0 0
    %325 = vmatpush1.bf16.msra.mxu0 0
    %326 = vmatprep.subr.bf16.mxu0 0
    %327 = vmatpush1.bf16.msra.mxu0 0
    %328 = vmatprep.subr.bf16.mxu0 0
    %329 = vmatpush1.bf16.msra.mxu0 %v237
    %330 = vmatprep.subr.bf16.mxu0 0
    %331 = vmatpush1.bf16.msra.mxu0 %v236
    %332 = vmatprep.subr.bf16.mxu0 0
    %333 = vmatpush2.bf16.msra.mxu0 0
    %334 = vmatprep.subr.bf16.mxu0 0
    %335 = vmatpush2.bf16.msra.mxu0 0
    %336 = vmatprep.subr.bf16.mxu0 0
    %337 = vmatpush2.bf16.msra.mxu0 0
    %338 = vmatprep.subr.bf16.mxu0 0
    %339 = vmatpush2.bf16.msra.mxu0 0
    %340 = vmatprep.subr.bf16.mxu0 0
    %341 = vmatpush2.bf16.msra.mxu0 0
    %342 = vmatprep.subr.bf16.mxu0 0
    %343 = vmatpush2.bf16.msra.mxu0 0
    %344 = vmatprep.subr.bf16.mxu0 0
    %345 = vmatpush2.bf16.msra.mxu0 0
    %346 = vmatprep.subr.bf16.mxu0 0
    %347 = vmatpush2.bf16.msra.mxu0 0
    %348 = vmatprep.mubr.bf16.mxu0 0
    %349 = vmatmul.mubr.bf16.gmra.mxu0 %v242
    %v350 = vpop.f32.mrf.mxu0
    %v351 = vadd.f32 %v103, %v350
    %v352 = vpop.f32.mrf.mxu0
    %v353 = vpop.f32.mrf.mxu0
    %v354 = vadd.f32 %v103, %v353
    %v355 = vpop.f32.mrf.mxu0
    %356 = vmatprep.mubr.bf16.mxu0 0
    %357 = vmatmul.mubr.bf16.gmra.mxu0 %v245
    %v358 = vpop.f32.mrf.mxu0
    %v359 = vadd.f32 %v103, %v358
    %v360 = vpop.f32.mrf.mxu0
    %v361 = vpop.f32.mrf.mxu0
    %v362 = vadd.f32 %v103, %v361
    %v363 = vpop.f32.mrf.mxu0
    %364 = vmatprep.mubr.bf16.mxu0 0
    %365 = vmatmul.mubr.bf16.gmra.mxu0 %v248
    %v366 = vpop.f32.mrf.mxu0
    %v367 = vadd.f32 %v103, %v366
    %v368 = vpop.f32.mrf.mxu0
    %v369 = vpop.f32.mrf.mxu0
    %v370 = vadd.f32 %v103, %v369
    %v371 = vpop.f32.mrf.mxu0
    %372 = vmatprep.mubr.bf16.mxu0 0
    %373 = vmatmul.mubr.bf16.gmra.mxu0 %v251
    %v374 = vpop.f32.mrf.mxu0
    %v375 = vadd.f32 %v103, %v374
    %v376 = vpop.f32.mrf.mxu0
    %v377 = vpop.f32.mrf.mxu0
    %v378 = vadd.f32 %v103, %v377
    %v379 = vpop.f32.mrf.mxu0
    %380 = vmatprep.mubr.bf16.mxu0 0
    %381 = vmatmul.mubr.bf16.gmra.mxu0 %v254
    %v382 = vpop.f32.mrf.mxu0
    %v383 = vadd.f32 %v103, %v382
    %v384 = vpop.f32.mrf.mxu0
    %v385 = vpop.f32.mrf.mxu0
    %v386 = vadd.f32 %v103, %v385
    %v387 = vpop.f32.mrf.mxu0
    %388 = vmatprep.mubr.bf16.mxu0 0
    %389 = vmatmul.mubr.bf16.gmra.mxu0 %v257
    %v390 = vpop.f32.mrf.mxu0
    %v391 = vadd.f32 %v103, %v390
    %v392 = vpop.f32.mrf.mxu0
    %v393 = vpop.f32.mrf.mxu0
    %v394 = vadd.f32 %v103, %v393
    %v395 = vpop.f32.mrf.mxu0
    %396 = vmatprep.mubr.bf16.mxu0 0
    %397 = vmatmul.mubr.bf16.gmra.mxu0 %v260
    %v398 = vpop.f32.mrf.mxu0
    %v399 = vadd.f32 %v103, %v398
    %v400 = vpop.f32.mrf.mxu0
    %v401 = vpop.f32.mrf.mxu0
    %v402 = vadd.f32 %v103, %v401
    %v403 = vpop.f32.mrf.mxu0
    %404 = vmatprep.mubr.bf16.mxu0 0
    %405 = vmatmul.mubr.bf16.gmra.mxu0 %v263
    %v406 = vpop.f32.mrf.mxu0
    %v407 = vadd.f32 %v103, %v406
    %v408 = vpop.f32.mrf.mxu0
    %v409 = vpop.f32.mrf.mxu0
    %v410 = vadd.f32 %v103, %v409
    %v411 = vpop.f32.mrf.mxu0
    %412 = vmatprep.mubr.bf16.mxu0 0
    %413 = vmatmul.mubr.bf16.gmra.mxu0 %v266
    %v414 = vpop.f32.mrf.mxu0
    %v415 = vadd.f32 %v103, %v414
    %v416 = vpop.f32.mrf.mxu0
    %v417 = vpop.f32.mrf.mxu0
    %v418 = vadd.f32 %v103, %v417
    %v419 = vpop.f32.mrf.mxu0
    %420 = vmatprep.mubr.bf16.mxu0 0
    %421 = vmatmul.mubr.bf16.gmra.mxu0 %v269
    %v422 = vpop.f32.mrf.mxu0
    %v423 = vadd.f32 %v103, %v422
    %v424 = vpop.f32.mrf.mxu0
    %v425 = vpop.f32.mrf.mxu0
    %v426 = vadd.f32 %v103, %v425
    %v427 = vpop.f32.mrf.mxu0
    %428 = vmatprep.mubr.bf16.mxu0 0
    %429 = vmatmul.mubr.bf16.gmra.mxu0 %v272
    %v430 = vpop.f32.mrf.mxu0
    %v431 = vadd.f32 %v103, %v430
    %v432 = vpop.f32.mrf.mxu0
    %v433 = vpop.f32.mrf.mxu0
    %v434 = vadd.f32 %v103, %v433
    %v435 = vpop.f32.mrf.mxu0
    %436 = vmatprep.mubr.bf16.mxu0 0
    %437 = vmatmul.mubr.bf16.gmra.mxu0 %v275
    %v438 = vpop.f32.mrf.mxu0
    %v439 = vadd.f32 %v103, %v438
    %v440 = vpop.f32.mrf.mxu0
    %v441 = vpop.f32.mrf.mxu0
    %v442 = vadd.f32 %v103, %v441
    %v443 = vpop.f32.mrf.mxu0
    %444 = vmatprep.mubr.bf16.mxu0 0
    %445 = vmatmul.mubr.bf16.gmra.mxu0 %v278
    %v446 = vpop.f32.mrf.mxu0
    %v447 = vadd.f32 %v103, %v446
    %v448 = vpop.f32.mrf.mxu0
    %v449 = vpop.f32.mrf.mxu0
    %v450 = vadd.f32 %v103, %v449
    %v451 = vpop.f32.mrf.mxu0
    %452 = vmatprep.mubr.bf16.mxu0 0
    %453 = vmatmul.mubr.bf16.gmra.mxu0 %v281
    %v454 = vpop.f32.mrf.mxu0
    %v455 = vadd.f32 %v103, %v454
    %v456 = vpop.f32.mrf.mxu0
    %v457 = vpop.f32.mrf.mxu0
    %v458 = vadd.f32 %v103, %v457
    %v459 = vpop.f32.mrf.mxu0
    %460 = vmatprep.mubr.bf16.mxu0 0
    %461 = vmatmul.mubr.bf16.gmra.mxu0 %v284
    %v462 = vpop.f32.mrf.mxu0
    %v463 = vadd.f32 %v103, %v462
    %v464 = vpop.f32.mrf.mxu0
    %v465 = vpop.f32.mrf.mxu0
    %v466 = vadd.f32 %v103, %v465
    %v467 = vpop.f32.mrf.mxu0
    %468 = vmatprep.mubr.bf16.mxu0 0
    %469 = vmatmul.mubr.bf16.gmra.mxu0 %v287
    %v470 = vpop.f32.mrf.mxu0
    %v471 = vadd.f32 %v103, %v470
    %v472 = vpop.f32.mrf.mxu0
    %v473 = vpop.f32.mrf.mxu0
    %v474 = vadd.f32 %v103, %v473
    %v475 = vpop.f32.mrf.mxu0
    %476 = vmatprep.mubr.bf16.mxu0 0
    %477 = vmatmul.mubr.bf16.gmra.mxu0 %v290
    %v478 = vpop.f32.mrf.mxu0
    %v479 = vadd.f32 %v103, %v478
    %v480 = vpop.f32.mrf.mxu0
    %v481 = vpop.f32.mrf.mxu0
    %v482 = vadd.f32 %v103, %v481
    %v483 = vpop.f32.mrf.mxu0
    %484 = vmatprep.mubr.bf16.mxu0 0
    %485 = vmatmul.mubr.bf16.gmra.mxu0 %v293
    %v486 = vpop.f32.mrf.mxu0
    %v487 = vadd.f32 %v103, %v486
    %v488 = vpop.f32.mrf.mxu0
    %v489 = vpop.f32.mrf.mxu0
    %v490 = vadd.f32 %v103, %v489
    %v491 = vpop.f32.mrf.mxu0
    %492 = vmatprep.mubr.bf16.mxu0 0
    %493 = vmatmul.mubr.bf16.gmra.mxu0 %v296
    %v494 = vpop.f32.mrf.mxu0
    %v495 = vadd.f32 %v103, %v494
    %v496 = vpop.f32.mrf.mxu0
    %v497 = vpop.f32.mrf.mxu0
    %v498 = vadd.f32 %v103, %v497
    %v499 = vpop.f32.mrf.mxu0
    %500 = vmatprep.mubr.bf16.mxu0 0
    %501 = vmatmul.mubr.bf16.gmra.mxu0 %v299
    %v502 = vpop.f32.mrf.mxu0
    %v503 = vadd.f32 %v103, %v502
    %v504 = vpop.f32.mrf.mxu0
    %v505 = vpop.f32.mrf.mxu0
    %v506 = vadd.f32 %v103, %v505
    %v507 = vpop.f32.mrf.mxu0
    %508 = vmatprep.mubr.bf16.mxu0 0
    %509 = vmatmul.mubr.bf16.gmra.mxu0 %v302
    %v510 = vpop.f32.mrf.mxu0
    %v511 = vadd.f32 %v103, %v510
    %v512 = vpop.f32.mrf.mxu0
    %v513 = vpop.f32.mrf.mxu0
    %v514 = vadd.f32 %v103, %v513
    %v515 = vpop.f32.mrf.mxu0
    %516 = vmatprep.mubr.bf16.mxu0 0
    %517 = vmatmul.mubr.bf16.gmra.mxu0 %v305
    %v518 = vpop.f32.mrf.mxu0
    %v519 = vadd.f32 %v103, %v518
    %v520 = vpop.f32.mrf.mxu0
    %v521 = vpop.f32.mrf.mxu0
    %v522 = vadd.f32 %v103, %v521
    %v523 = vpop.f32.mrf.mxu0
    %524 = vmatprep.mubr.bf16.mxu0 0
    %525 = vmatmul.mubr.bf16.gmra.mxu0 %v308
    %v526 = vpop.f32.mrf.mxu0
    %v527 = vadd.f32 %v103, %v526
    %v528 = vpop.f32.mrf.mxu0
    %v529 = vpop.f32.mrf.mxu0
    %v530 = vadd.f32 %v103, %v529
    %v531 = vpop.f32.mrf.mxu0
    %532 = vmatprep.mubr.bf16.mxu0 0
    %533 = vmatmul.mubr.bf16.gmra.mxu0 %v311
    %v534 = vpop.f32.mrf.mxu0
    %v535 = vadd.f32 %v103, %v534
    %v536 = vpop.f32.mrf.mxu0
    %v537 = vpop.f32.mrf.mxu0
    %v538 = vadd.f32 %v103, %v537
    %v539 = vpop.f32.mrf.mxu0
    %540 = vmatprep.mubr.bf16.mxu0 0
    %541 = vmatmul.mubr.bf16.gmra.mxu0 %v314
    %v542 = vpop.f32.mrf.mxu0
    %v543 = vadd.f32 %v103, %v542
    %v544 = vpop.f32.mrf.mxu0
    %v545 = vpop.f32.mrf.mxu0
    %v546 = vpop.f32.mrf.mxu0
    %547 = vdwg.mxu0
    %v548 = vmax.f32 %v351, 0.0
    %v549 = vmax.f32 %v354, 0.0
    %v550 = vmax.f32 %v359, 0.0
    %v551 = vmax.f32 %v362, 0.0
    %v552 = vmax.f32 %v367, 0.0
    %v553 = vmax.f32 %v370, 0.0
    %v554 = vmax.f32 %v375, 0.0
    %v555 = vmax.f32 %v378, 0.0
    %v556 = vmax.f32 %v383, 0.0
    %v557 = vmax.f32 %v386, 0.0
    %v558 = vmax.f32 %v391, 0.0
    %v559 = vmax.f32 %v394, 0.0
    %v560 = vmax.f32 %v399, 0.0
    %v561 = vmax.f32 %v402, 0.0
    %v562 = vmax.f32 %v407, 0.0
    %v563 = vmax.f32 %v410, 0.0
    %v564 = vmax.f32 %v415, 0.0
    %v565 = vmax.f32 %v418, 0.0
    %v566 = vmax.f32 %v423, 0.0
    %v567 = vmax.f32 %v426, 0.0
    %v568 = vmax.f32 %v431, 0.0
    %v569 = vmax.f32 %v434, 0.0
    %v570 = vmax.f32 %v439, 0.0
    %v571 = vmax.f32 %v442, 0.0
    %v572 = vmax.f32 %v447, 0.0
    %v573 = vmax.f32 %v450, 0.0
    %v574 = vmax.f32 %v455, 0.0
    %v575 = vmax.f32 %v458, 0.0
    %v576 = vmax.f32 %v463, 0.0
    %v577 = vmax.f32 %v466, 0.0
    %v578 = vmax.f32 %v471, 0.0
    %v579 = vmax.f32 %v474, 0.0
    %v580 = vmax.f32 %v479, 0.0
    %v581 = vmax.f32 %v482, 0.0
    %v582 = vmax.f32 %v487, 0.0
    %v583 = vmax.f32 %v490, 0.0
    %v584 = vmax.f32 %v495, 0.0
    %v585 = vmax.f32 %v498, 0.0
    %v586 = vmax.f32 %v503, 0.0
    %v587 = vmax.f32 %v506, 0.0
    %v588 = vmax.f32 %v511, 0.0
    %v589 = vmax.f32 %v514, 0.0
    %v590 = vmax.f32 %v519, 0.0
    %v591 = vmax.f32 %v522, 0.0
    %v592 = vmax.f32 %v527, 0.0
    %v593 = vmax.f32 %v530, 0.0
    %v594 = vmax.f32 %v535, 0.0
    %v595 = vmax.f32 %v538, 0.0
    %v596 = vmax.f32 %v543, 0.0
    %v597 = vpack.c.bf16 %v549, %v548
    %v598 = vpack.c.bf16 %v551, %v550
    %v599 = vpack.c.bf16 %v553, %v552
    %v600 = vpack.c.bf16 %v555, %v554
    %v601 = vpack.c.bf16 %v557, %v556
    %v602 = vpack.c.bf16 %v559, %v558
    %v603 = vpack.c.bf16 %v561, %v560
    %v604 = vpack.c.bf16 %v563, %v562
    %v605 = vpack.c.bf16 %v565, %v564
    %v606 = vpack.c.bf16 %v567, %v566
    %v607 = vpack.c.bf16 %v569, %v568
    %v608 = vpack.c.bf16 %v571, %v570
    %v609 = vpack.c.bf16 %v573, %v572
    %v610 = vpack.c.bf16 %v575, %v574
    %v611 = vpack.c.bf16 %v577, %v576
    %v612 = vpack.c.bf16 %v579, %v578
    %v613 = vpack.c.bf16 %v581, %v580
    %v614 = vpack.c.bf16 %v583, %v582
    %v615 = vpack.c.bf16 %v585, %v584
    %v616 = vpack.c.bf16 %v587, %v586
    %v617 = vpack.c.bf16 %v589, %v588
    %v618 = vpack.c.bf16 %v591, %v590
    %v619 = vpack.c.bf16 %v593, %v592
    %v620 = vpack.c.bf16 %v595, %v594
    %v621 = vpack.c.bf16 %v596, %v596
    %v622 = vld [vmem:[%s3] sm:$0xf]
    %v623 = vld [vmem:[%s3 + $0x4] sm:$0xf]
    %v624 = vld [vmem:[#allocation4] sm:$0x1]
    %v626 = vlaneseq
    %v627 = vshrl.u32 %v626, 7
    %v628 = vsub.s32 0, %v627
    %v629 = vrot.slane %v624, %v628
    %v633 = vunpack.c.l.b16 %v622
    %v634 = vunpack.c.l.b16 %v623
    %v635 = vpack.c.b16 %v634, %v633
    %vm637 = vcmask 130048
    %v639 = vsel %vm637, %v597, 0
    %v642 = vsel %vm637, %v598, 0
    %v645 = vsel %vm637, %v599, 0
    %v648 = vsel %vm637, %v600, 0
    %v651 = vsel %vm637, %v601, 0
    %v654 = vsel %vm637, %v602, 0
    %v657 = vsel %vm637, %v603, 0
    %v660 = vsel %vm637, %v604, 0
    %v663 = vsel %vm637, %v605, 0
    %v666 = vsel %vm637, %v606, 0
    %v669 = vsel %vm637, %v607, 0
    %v672 = vsel %vm637, %v608, 0
    %v675 = vsel %vm637, %v609, 0
    %v678 = vsel %vm637, %v610, 0
    %v681 = vsel %vm637, %v611, 0
    %v684 = vsel %vm637, %v612, 0
    %v687 = vsel %vm637, %v613, 0
    %v690 = vsel %vm637, %v614, 0
    %v693 = vsel %vm637, %v615, 0
    %v696 = vsel %vm637, %v616, 0
    %v699 = vsel %vm637, %v617, 0
    %v702 = vsel %vm637, %v618, 0
    %v705 = vsel %vm637, %v619, 0
    %v708 = vsel %vm637, %v620, 0
    %v711 = vsel %vm637, %v621, 0
    %713 = vmatprep.subr.bf16.mxu0 0
    %714 = vmatpush1.bf16.msra.mxu0 0
    %715 = vmatprep.subr.bf16.mxu0 0
    %716 = vmatpush1.bf16.msra.mxu0 0
    %717 = vmatprep.subr.bf16.mxu0 0
    %718 = vmatpush1.bf16.msra.mxu0 0
    %719 = vmatprep.subr.bf16.mxu0 0
    %720 = vmatpush1.bf16.msra.mxu0 0
    %721 = vmatprep.subr.bf16.mxu0 0
    %722 = vmatpush1.bf16.msra.mxu0 0
    %723 = vmatprep.subr.bf16.mxu0 0
    %724 = vmatpush1.bf16.msra.mxu0 0
    %725 = vmatprep.subr.bf16.mxu0 0
    %726 = vmatpush1.bf16.msra.mxu0 0
    %727 = vmatprep.subr.bf16.mxu0 0
    %728 = vmatpush1.bf16.msra.mxu0 %v635
    %729 = vmatprep.subr.bf16.mxu0 0
    %730 = vmatpush2.bf16.msra.mxu0 0
    %731 = vmatprep.subr.bf16.mxu0 0
    %732 = vmatpush2.bf16.msra.mxu0 0
    %733 = vmatprep.subr.bf16.mxu0 0
    %734 = vmatpush2.bf16.msra.mxu0 0
    %735 = vmatprep.subr.bf16.mxu0 0
    %736 = vmatpush2.bf16.msra.mxu0 0
    %737 = vmatprep.subr.bf16.mxu0 0
    %738 = vmatpush2.bf16.msra.mxu0 0
    %739 = vmatprep.subr.bf16.mxu0 0
    %740 = vmatpush2.bf16.msra.mxu0 0
    %741 = vmatprep.subr.bf16.mxu0 0
    %742 = vmatpush2.bf16.msra.mxu0 0
    %743 = vmatprep.subr.bf16.mxu0 0
    %744 = vmatpush2.bf16.msra.mxu0 0
    %745 = vmatprep.mubr.bf16.mxu0 0
    %746 = vmatmul.mubr.bf16.gmra.mxu0 %v639
    %v747 = vpop.f32.mrf.mxu0
    %v748 = vadd.f32 %v629, %v747
    %v749 = vpop.f32.mrf.mxu0
    %v750 = vpop.f32.mrf.mxu0
    %v751 = vadd.f32 %v629, %v750
    %v752 = vpop.f32.mrf.mxu0
    %753 = vmatprep.mubr.bf16.mxu0 0
    %754 = vmatmul.mubr.bf16.gmra.mxu0 %v642
    %v755 = vpop.f32.mrf.mxu0
    %v756 = vadd.f32 %v629, %v755
    %v757 = vpop.f32.mrf.mxu0
    %v758 = vpop.f32.mrf.mxu0
    %v759 = vadd.f32 %v629, %v758
    %v760 = vpop.f32.mrf.mxu0
    %761 = vmatprep.mubr.bf16.mxu0 0
    %762 = vmatmul.mubr.bf16.gmra.mxu0 %v645
    %v763 = vpop.f32.mrf.mxu0
    %v764 = vadd.f32 %v629, %v763
    %v765 = vpop.f32.mrf.mxu0
    %v766 = vpop.f32.mrf.mxu0
    %v767 = vadd.f32 %v629, %v766
    %v768 = vpop.f32.mrf.mxu0
    %769 = vmatprep.mubr.bf16.mxu0 0
    %770 = vmatmul.mubr.bf16.gmra.mxu0 %v648
    %v771 = vpop.f32.mrf.mxu0
    %v772 = vadd.f32 %v629, %v771
    %v773 = vpop.f32.mrf.mxu0
    %v774 = vpop.f32.mrf.mxu0
    %v775 = vadd.f32 %v629, %v774
    %v776 = vpop.f32.mrf.mxu0
    %777 = vmatprep.mubr.bf16.mxu0 0
    %778 = vmatmul.mubr.bf16.gmra.mxu0 %v651
    %v779 = vpop.f32.mrf.mxu0
    %v780 = vadd.f32 %v629, %v779
    %v781 = vpop.f32.mrf.mxu0
    %v782 = vpop.f32.mrf.mxu0
    %v783 = vadd.f32 %v629, %v782
    %v784 = vpop.f32.mrf.mxu0
    %785 = vmatprep.mubr.bf16.mxu0 0
    %786 = vmatmul.mubr.bf16.gmra.mxu0 %v654
    %v787 = vpop.f32.mrf.mxu0
    %v788 = vadd.f32 %v629, %v787
    %v789 = vpop.f32.mrf.mxu0
    %v790 = vpop.f32.mrf.mxu0
    %v791 = vadd.f32 %v629, %v790
    %v792 = vpop.f32.mrf.mxu0
    %793 = vmatprep.mubr.bf16.mxu0 0
    %794 = vmatmul.mubr.bf16.gmra.mxu0 %v657
    %v795 = vpop.f32.mrf.mxu0
    %v796 = vadd.f32 %v629, %v795
    %v797 = vpop.f32.mrf.mxu0
    %v798 = vpop.f32.mrf.mxu0
    %v799 = vadd.f32 %v629, %v798
    %v800 = vpop.f32.mrf.mxu0
    %801 = vmatprep.mubr.bf16.mxu0 0
    %802 = vmatmul.mubr.bf16.gmra.mxu0 %v660
    %v803 = vpop.f32.mrf.mxu0
    %v804 = vadd.f32 %v629, %v803
    %v805 = vpop.f32.mrf.mxu0
    %v806 = vpop.f32.mrf.mxu0
    %v807 = vadd.f32 %v629, %v806
    %v808 = vpop.f32.mrf.mxu0
    %809 = vmatprep.mubr.bf16.mxu0 0
    %810 = vmatmul.mubr.bf16.gmra.mxu0 %v663
    %v811 = vpop.f32.mrf.mxu0
    %v812 = vadd.f32 %v629, %v811
    %v813 = vpop.f32.mrf.mxu0
    %v814 = vpop.f32.mrf.mxu0
    %v815 = vadd.f32 %v629, %v814
    %v816 = vpop.f32.mrf.mxu0
    %817 = vmatprep.mubr.bf16.mxu0 0
    %818 = vmatmul.mubr.bf16.gmra.mxu0 %v666
    %v819 = vpop.f32.mrf.mxu0
    %v820 = vadd.f32 %v629, %v819
    %v821 = vpop.f32.mrf.mxu0
    %v822 = vpop.f32.mrf.mxu0
    %v823 = vadd.f32 %v629, %v822
    %v824 = vpop.f32.mrf.mxu0
    %825 = vmatprep.mubr.bf16.mxu0 0
    %826 = vmatmul.mubr.bf16.gmra.mxu0 %v669
    %v827 = vpop.f32.mrf.mxu0
    %v828 = vadd.f32 %v629, %v827
    %v829 = vpop.f32.mrf.mxu0
    %v830 = vpop.f32.mrf.mxu0
    %v831 = vadd.f32 %v629, %v830
    %v832 = vpop.f32.mrf.mxu0
    %833 = vmatprep.mubr.bf16.mxu0 0
    %834 = vmatmul.mubr.bf16.gmra.mxu0 %v672
    %v835 = vpop.f32.mrf.mxu0
    %v836 = vadd.f32 %v629, %v835
    %v837 = vpop.f32.mrf.mxu0
    %v838 = vpop.f32.mrf.mxu0
    %v839 = vadd.f32 %v629, %v838
    %v840 = vpop.f32.mrf.mxu0
    %841 = vmatprep.mubr.bf16.mxu0 0
    %842 = vmatmul.mubr.bf16.gmra.mxu0 %v675
    %v843 = vpop.f32.mrf.mxu0
    %v844 = vadd.f32 %v629, %v843
    %v845 = vpop.f32.mrf.mxu0
    %v846 = vpop.f32.mrf.mxu0
    %v847 = vadd.f32 %v629, %v846
    %v848 = vpop.f32.mrf.mxu0
    %849 = vmatprep.mubr.bf16.mxu0 0
    %850 = vmatmul.mubr.bf16.gmra.mxu0 %v678
    %v851 = vpop.f32.mrf.mxu0
    %v852 = vadd.f32 %v629, %v851
    %v853 = vpop.f32.mrf.mxu0
    %v854 = vpop.f32.mrf.mxu0
    %v855 = vadd.f32 %v629, %v854
    %v856 = vpop.f32.mrf.mxu0
    %857 = vmatprep.mubr.bf16.mxu0 0
    %858 = vmatmul.mubr.bf16.gmra.mxu0 %v681
    %v859 = vpop.f32.mrf.mxu0
    %v860 = vadd.f32 %v629, %v859
    %v861 = vpop.f32.mrf.mxu0
    %v862 = vpop.f32.mrf.mxu0
    %v863 = vadd.f32 %v629, %v862
    %v864 = vpop.f32.mrf.mxu0
    %865 = vmatprep.mubr.bf16.mxu0 0
    %866 = vmatmul.mubr.bf16.gmra.mxu0 %v684
    %v867 = vpop.f32.mrf.mxu0
    %v868 = vadd.f32 %v629, %v867
    %v869 = vpop.f32.mrf.mxu0
    %v870 = vpop.f32.mrf.mxu0
    %v871 = vadd.f32 %v629, %v870
    %v872 = vpop.f32.mrf.mxu0
    %873 = vmatprep.mubr.bf16.mxu0 0
    %874 = vmatmul.mubr.bf16.gmra.mxu0 %v687
    %v875 = vpop.f32.mrf.mxu0
    %v876 = vadd.f32 %v629, %v875
    %v877 = vpop.f32.mrf.mxu0
    %v878 = vpop.f32.mrf.mxu0
    %v879 = vadd.f32 %v629, %v878
    %v880 = vpop.f32.mrf.mxu0
    %881 = vmatprep.mubr.bf16.mxu0 0
    %882 = vmatmul.mubr.bf16.gmra.mxu0 %v690
    %v883 = vpop.f32.mrf.mxu0
    %v884 = vadd.f32 %v629, %v883
    %v885 = vpop.f32.mrf.mxu0
    %v886 = vpop.f32.mrf.mxu0
    %v887 = vadd.f32 %v629, %v886
    %v888 = vpop.f32.mrf.mxu0
    %889 = vmatprep.mubr.bf16.mxu0 0
    %890 = vmatmul.mubr.bf16.gmra.mxu0 %v693
    %v891 = vpop.f32.mrf.mxu0
    %v892 = vadd.f32 %v629, %v891
    %v893 = vpop.f32.mrf.mxu0
    %v894 = vpop.f32.mrf.mxu0
    %v895 = vadd.f32 %v629, %v894
    %v896 = vpop.f32.mrf.mxu0
    %897 = vmatprep.mubr.bf16.mxu0 0
    %898 = vmatmul.mubr.bf16.gmra.mxu0 %v696
    %v899 = vpop.f32.mrf.mxu0
    %v900 = vadd.f32 %v629, %v899
    %v901 = vpop.f32.mrf.mxu0
    %v902 = vpop.f32.mrf.mxu0
    %v903 = vadd.f32 %v629, %v902
    %v904 = vpop.f32.mrf.mxu0
    %905 = vmatprep.mubr.bf16.mxu0 0
    %906 = vmatmul.mubr.bf16.gmra.mxu0 %v699
    %v907 = vpop.f32.mrf.mxu0
    %v908 = vadd.f32 %v629, %v907
    %v909 = vpop.f32.mrf.mxu0
    %v910 = vpop.f32.mrf.mxu0
    %v911 = vadd.f32 %v629, %v910
    %v912 = vpop.f32.mrf.mxu0
    %913 = vmatprep.mubr.bf16.mxu0 0
    %914 = vmatmul.mubr.bf16.gmra.mxu0 %v702
    %v915 = vpop.f32.mrf.mxu0
    %v916 = vadd.f32 %v629, %v915
    %v917 = vpop.f32.mrf.mxu0
    %v918 = vpop.f32.mrf.mxu0
    %v919 = vadd.f32 %v629, %v918
    %v920 = vpop.f32.mrf.mxu0
    %921 = vmatprep.mubr.bf16.mxu0 0
    %922 = vmatmul.mubr.bf16.gmra.mxu0 %v705
    %v923 = vpop.f32.mrf.mxu0
    %v924 = vadd.f32 %v629, %v923
    %v925 = vpop.f32.mrf.mxu0
    %v926 = vpop.f32.mrf.mxu0
    %v927 = vadd.f32 %v629, %v926
    %v928 = vpop.f32.mrf.mxu0
    %929 = vmatprep.mubr.bf16.mxu0 0
    %930 = vmatmul.mubr.bf16.gmra.mxu0 %v708
    %v931 = vpop.f32.mrf.mxu0
    %v932 = vadd.f32 %v629, %v931
    %v933 = vpop.f32.mrf.mxu0
    %v934 = vpop.f32.mrf.mxu0
    %v935 = vadd.f32 %v629, %v934
    %v936 = vpop.f32.mrf.mxu0
    %937 = vmatprep.mubr.bf16.mxu0 0
    %938 = vmatmul.mubr.bf16.gmra.mxu0 %v711
    %v939 = vpop.f32.mrf.mxu0
    %v940 = vadd.f32 %v629, %v939
    %v941 = vpop.f32.mrf.mxu0
    %v942 = vpop.f32.mrf.mxu0
    %v943 = vpop.f32.mrf.mxu0
    %944 = vdwg.mxu0
    %v945 = vmax.f32 %v748, 0.0
    %v946 = vmax.f32 %v751, 0.0
    %v947 = vmax.f32 %v756, 0.0
    %v948 = vmax.f32 %v759, 0.0
    %v949 = vmax.f32 %v764, 0.0
    %v950 = vmax.f32 %v767, 0.0
    %v951 = vmax.f32 %v772, 0.0
    %v952 = vmax.f32 %v775, 0.0
    %v953 = vmax.f32 %v780, 0.0
    %v954 = vmax.f32 %v783, 0.0
    %v955 = vmax.f32 %v788, 0.0
    %v956 = vmax.f32 %v791, 0.0
    %v957 = vmax.f32 %v796, 0.0
    %v958 = vmax.f32 %v799, 0.0
    %v959 = vmax.f32 %v804, 0.0
    %v960 = vmax.f32 %v807, 0.0
    %v961 = vmax.f32 %v812, 0.0
    %v962 = vmax.f32 %v815, 0.0
    %v963 = vmax.f32 %v820, 0.0
    %v964 = vmax.f32 %v823, 0.0
    %v965 = vmax.f32 %v828, 0.0
    %v966 = vmax.f32 %v831, 0.0
    %v967 = vmax.f32 %v836, 0.0
    %v968 = vmax.f32 %v839, 0.0
    %v969 = vmax.f32 %v844, 0.0
    %v970 = vmax.f32 %v847, 0.0
    %v971 = vmax.f32 %v852, 0.0
    %v972 = vmax.f32 %v855, 0.0
    %v973 = vmax.f32 %v860, 0.0
    %v974 = vmax.f32 %v863, 0.0
    %v975 = vmax.f32 %v868, 0.0
    %v976 = vmax.f32 %v871, 0.0
    %v977 = vmax.f32 %v876, 0.0
    %v978 = vmax.f32 %v879, 0.0
    %v979 = vmax.f32 %v884, 0.0
    %v980 = vmax.f32 %v887, 0.0
    %v981 = vmax.f32 %v892, 0.0
    %v982 = vmax.f32 %v895, 0.0
    %v983 = vmax.f32 %v900, 0.0
    %v984 = vmax.f32 %v903, 0.0
    %v985 = vmax.f32 %v908, 0.0
    %v986 = vmax.f32 %v911, 0.0
    %v987 = vmax.f32 %v916, 0.0
    %v988 = vmax.f32 %v919, 0.0
    %v989 = vmax.f32 %v924, 0.0
    %v990 = vmax.f32 %v927, 0.0
    %v991 = vmax.f32 %v932, 0.0
    %v992 = vmax.f32 %v935, 0.0
    %v993 = vmax.f32 %v940, 0.0
    %v994 = vpack.c.bf16 %v946, %v945
    %v995 = vpack.c.bf16 %v948, %v947
    %v996 = vpack.c.bf16 %v950, %v949
    %v997 = vpack.c.bf16 %v952, %v951
    %v998 = vpack.c.bf16 %v954, %v953
    %v999 = vpack.c.bf16 %v956, %v955
    %v1000 = vpack.c.bf16 %v958, %v957
    %v1001 = vpack.c.bf16 %v960, %v959
    %v1002 = vpack.c.bf16 %v962, %v961
    %v1003 = vpack.c.bf16 %v964, %v963
    %v1004 = vpack.c.bf16 %v966, %v965
    %v1005 = vpack.c.bf16 %v968, %v967
    %v1006 = vpack.c.bf16 %v970, %v969
    %v1007 = vpack.c.bf16 %v972, %v971
    %v1008 = vpack.c.bf16 %v974, %v973
    %v1009 = vpack.c.bf16 %v976, %v975
    %v1010 = vpack.c.bf16 %v978, %v977
    %v1011 = vpack.c.bf16 %v980, %v979
    %v1012 = vpack.c.bf16 %v982, %v981
    %v1013 = vpack.c.bf16 %v984, %v983
    %v1014 = vpack.c.bf16 %v986, %v985
    %v1015 = vpack.c.bf16 %v988, %v987
    %v1016 = vpack.c.bf16 %v990, %v989
    %v1017 = vpack.c.bf16 %v992, %v991
    %v1018 = vpack.c.bf16 %v993, %v993
    %v1044 = vunpack.c.l.b16 %v994
    %v1045 = vunpack.c.h.b16 %v994
    %v1046 = vunpack.c.l.b16 %v995
    %v1047 = vunpack.c.h.b16 %v995
    %v1048 = vunpack.c.l.b16 %v996
    %v1049 = vunpack.c.h.b16 %v996
    %v1050 = vunpack.c.l.b16 %v997
    %v1051 = vunpack.c.h.b16 %v997
    %v1052 = vunpack.c.l.b16 %v998
    %v1053 = vunpack.c.h.b16 %v998
    %v1054 = vunpack.c.l.b16 %v999
    %v1055 = vunpack.c.h.b16 %v999
    %v1056 = vunpack.c.l.b16 %v1000
    %v1057 = vunpack.c.h.b16 %v1000
    %v1058 = vunpack.c.l.b16 %v1001
    %v1059 = vunpack.c.h.b16 %v1001
    %v1060 = vunpack.c.l.b16 %v1002
    %v1061 = vunpack.c.h.b16 %v1002
    %v1062 = vunpack.c.l.b16 %v1003
    %v1063 = vunpack.c.h.b16 %v1003
    %v1064 = vunpack.c.l.b16 %v1004
    %v1065 = vunpack.c.h.b16 %v1004
    %v1066 = vunpack.c.l.b16 %v1005
    %v1067 = vunpack.c.h.b16 %v1005
    %v1068 = vunpack.c.l.b16 %v1006
    %v1069 = vunpack.c.h.b16 %v1006
    %v1070 = vunpack.c.l.b16 %v1007
    %v1071 = vunpack.c.h.b16 %v1007
    %v1072 = vunpack.c.l.b16 %v1008
    %v1073 = vunpack.c.h.b16 %v1008
    %v1074 = vunpack.c.l.b16 %v1009
    %v1075 = vunpack.c.h.b16 %v1009
    %v1076 = vunpack.c.l.b16 %v1010
    %v1077 = vunpack.c.h.b16 %v1010
    %v1078 = vunpack.c.l.b16 %v1011
    %v1079 = vunpack.c.h.b16 %v1011
    %v1080 = vunpack.c.l.b16 %v1012
    %v1081 = vunpack.c.h.b16 %v1012
    %v1082 = vunpack.c.l.b16 %v1013
    %v1083 = vunpack.c.h.b16 %v1013
    %v1084 = vunpack.c.l.b16 %v1014
    %v1085 = vunpack.c.h.b16 %v1014
    %v1086 = vunpack.c.l.b16 %v1015
    %v1087 = vunpack.c.h.b16 %v1015
    %v1088 = vunpack.c.l.b16 %v1016
    %v1089 = vunpack.c.h.b16 %v1016
    %v1090 = vunpack.c.l.b16 %v1017
    %v1091 = vunpack.c.h.b16 %v1017
    %v1092 = vunpack.c.l.b16 %v1018
    %v1093 = vpack.c.b16 %v1044, %v1044
    %v1094 = vpack.c.b16 %v1045, %v1045
    %v1095 = vpack.c.b16 %v1046, %v1046
    %v1096 = vpack.c.b16 %v1047, %v1047
    %v1097 = vpack.c.b16 %v1048, %v1048
    %v1098 = vpack.c.b16 %v1049, %v1049
    %v1099 = vpack.c.b16 %v1050, %v1050
    %v1100 = vpack.c.b16 %v1051, %v1051
    %v1101 = vpack.c.b16 %v1052, %v1052
    %v1102 = vpack.c.b16 %v1053, %v1053
    %v1103 = vpack.c.b16 %v1054, %v1054
    %v1104 = vpack.c.b16 %v1055, %v1055
    %v1105 = vpack.c.b16 %v1056, %v1056
    %v1106 = vpack.c.b16 %v1057, %v1057
    %v1107 = vpack.c.b16 %v1058, %v1058
    %v1108 = vpack.c.b16 %v1059, %v1059
    %v1109 = vpack.c.b16 %v1060, %v1060
    %v1110 = vpack.c.b16 %v1061, %v1061
    %v1111 = vpack.c.b16 %v1062, %v1062
    %v1112 = vpack.c.b16 %v1063, %v1063
    %v1113 = vpack.c.b16 %v1064, %v1064
    %v1114 = vpack.c.b16 %v1065, %v1065
    %v1115 = vpack.c.b16 %v1066, %v1066
    %v1116 = vpack.c.b16 %v1067, %v1067
    %v1117 = vpack.c.b16 %v1068, %v1068
    %v1118 = vpack.c.b16 %v1069, %v1069
    %v1119 = vpack.c.b16 %v1070, %v1070
    %v1120 = vpack.c.b16 %v1071, %v1071
    %v1121 = vpack.c.b16 %v1072, %v1072
    %v1122 = vpack.c.b16 %v1073, %v1073
    %v1123 = vpack.c.b16 %v1074, %v1074
    %v1124 = vpack.c.b16 %v1075, %v1075
    %v1125 = vpack.c.b16 %v1076, %v1076
    %v1126 = vpack.c.b16 %v1077, %v1077
    %v1127 = vpack.c.b16 %v1078, %v1078
    %v1128 = vpack.c.b16 %v1079, %v1079
    %v1129 = vpack.c.b16 %v1080, %v1080
    %v1130 = vpack.c.b16 %v1081, %v1081
    %v1131 = vpack.c.b16 %v1082, %v1082
    %v1132 = vpack.c.b16 %v1083, %v1083
    %v1133 = vpack.c.b16 %v1084, %v1084
    %v1134 = vpack.c.b16 %v1085, %v1085
    %v1135 = vpack.c.b16 %v1086, %v1086
    %v1136 = vpack.c.b16 %v1087, %v1087
    %v1137 = vpack.c.b16 %v1088, %v1088
    %v1138 = vpack.c.b16 %v1089, %v1089
    %v1139 = vpack.c.b16 %v1090, %v1090
    %v1140 = vpack.c.b16 %v1091, %v1091
    %v1141 = vpack.c.b16 %v1092, %v1092
    %vm1191 = vcmask 60416
    %1192 = vst.msk [vmem:[%s5] sm:$0xf] %vm1191, %v1093
    %1193 = vst.msk [vmem:[%s5 + $0x4] sm:$0xf] %vm1191, %v1094
    %1194 = vst.msk [vmem:[%s5 + $0x8] sm:$0xf] %vm1191, %v1095
    %1195 = vst.msk [vmem:[%s5 + $0xc] sm:$0xf] %vm1191, %v1096
    %1196 = vst.msk [vmem:[%s5 + $0x10] sm:$0xf] %vm1191, %v1097
    %1197 = vst.msk [vmem:[%s5 + $0x14] sm:$0xf] %vm1191, %v1098
    %1198 = vst.msk [vmem:[%s5 + $0x18] sm:$0xf] %vm1191, %v1099
    %1199 = vst.msk [vmem:[%s5 + $0x1c] sm:$0xf] %vm1191, %v1100
    %1200 = vst.msk [vmem:[%s5 + $0x20] sm:$0xf] %vm1191, %v1101
    %1201 = vst.msk [vmem:[%s5 + $0x24] sm:$0xf] %vm1191, %v1102
    %1202 = vst.msk [vmem:[%s5 + $0x28] sm:$0xf] %vm1191, %v1103
    %1203 = vst.msk [vmem:[%s5 + $0x2c] sm:$0xf] %vm1191, %v1104
    %1204 = vst.msk [vmem:[%s5 + $0x30] sm:$0xf] %vm1191, %v1105
    %1205 = vst.msk [vmem:[%s5 + $0x34] sm:$0xf] %vm1191, %v1106
    %1206 = vst.msk [vmem:[%s5 + $0x38] sm:$0xf] %vm1191, %v1107
    %1207 = vst.msk [vmem:[%s5 + $0x3c] sm:$0xf] %vm1191, %v1108
    %1208 = vst.msk [vmem:[%s5 + $0x40] sm:$0xf] %vm1191, %v1109
    %1209 = vst.msk [vmem:[%s5 + $0x44] sm:$0xf] %vm1191, %v1110
    %1210 = vst.msk [vmem:[%s5 + $0x48] sm:$0xf] %vm1191, %v1111
    %1211 = vst.msk [vmem:[%s5 + $0x4c] sm:$0xf] %vm1191, %v1112
    %1212 = vst.msk [vmem:[%s5 + $0x50] sm:$0xf] %vm1191, %v1113
    %1213 = vst.msk [vmem:[%s5 + $0x54] sm:$0xf] %vm1191, %v1114
    %1214 = vst.msk [vmem:[%s5 + $0x58] sm:$0xf] %vm1191, %v1115
    %1215 = vst.msk [vmem:[%s5 + $0x5c] sm:$0xf] %vm1191, %v1116
    %1216 = vst.msk [vmem:[%s5 + $0x60] sm:$0xf] %vm1191, %v1117
    %1217 = vst.msk [vmem:[%s5 + $0x64] sm:$0xf] %vm1191, %v1118
    %1218 = vst.msk [vmem:[%s5 + $0x68] sm:$0xf] %vm1191, %v1119
    %1219 = vst.msk [vmem:[%s5 + $0x6c] sm:$0xf] %vm1191, %v1120
    %1220 = vst.msk [vmem:[%s5 + $0x70] sm:$0xf] %vm1191, %v1121
    %1221 = vst.msk [vmem:[%s5 + $0x74] sm:$0xf] %vm1191, %v1122
    %1222 = vst.msk [vmem:[%s5 + $0x78] sm:$0xf] %vm1191, %v1123
    %1223 = vst.msk [vmem:[%s5 + $0x7c] sm:$0xf] %vm1191, %v1124
    %1224 = vst.msk [vmem:[%s5 + $0x80] sm:$0xf] %vm1191, %v1125
    %1225 = vst.msk [vmem:[%s5 + $0x84] sm:$0xf] %vm1191, %v1126
    %1226 = vst.msk [vmem:[%s5 + $0x88] sm:$0xf] %vm1191, %v1127
    %1227 = vst.msk [vmem:[%s5 + $0x8c] sm:$0xf] %vm1191, %v1128
    %1228 = vst.msk [vmem:[%s5 + $0x90] sm:$0xf] %vm1191, %v1129
    %1229 = vst.msk [vmem:[%s5 + $0x94] sm:$0xf] %vm1191, %v1130
    %1230 = vst.msk [vmem:[%s5 + $0x98] sm:$0xf] %vm1191, %v1131
    %1231 = vst.msk [vmem:[%s5 + $0x9c] sm:$0xf] %vm1191, %v1132
    %1232 = vst.msk [vmem:[%s5 + $0xa0] sm:$0xf] %vm1191, %v1133
    %1233 = vst.msk [vmem:[%s5 + $0xa4] sm:$0xf] %vm1191, %v1134
    %1234 = vst.msk [vmem:[%s5 + $0xa8] sm:$0xf] %vm1191, %v1135
    %1235 = vst.msk [vmem:[%s5 + $0xac] sm:$0xf] %vm1191, %v1136
    %1236 = vst.msk [vmem:[%s5 + $0xb0] sm:$0xf] %vm1191, %v1137
    %1237 = vst.msk [vmem:[%s5 + $0xb4] sm:$0xf] %vm1191, %v1138
    %1238 = vst.msk [vmem:[%s5 + $0xb8] sm:$0xf] %vm1191, %v1139
    %1239 = vst.msk [vmem:[%s5 + $0xbc] sm:$0xf] %vm1191, %v1140
    %1240 = vst.msk [vmem:[%s5 + $0xc0] sm:$0xf] %vm1191, %v1141
    // Predicated region
    $region30: #{forward.3} parent=1 // pred_check
      _
    $region31: #{forward.3} parent=1 // pred_check_branch
      %1242 = sbr.rel (0) target = $region33
    $region32: #{forward.3} parent=1 // pred_region
      _
    $region33: #{forward.3} parent=1 // pred_fallthru
      _
    // Predicated region
    $region34: #{forward.3} parent=1 // pred_check
      _
    $region35: #{forward.3} parent=1 // pred_check_branch
      %1244 = sbr.rel (0) target = $region37
    $region36: #{forward.3} parent=1 // pred_region
      _
    $region37: #{forward.3} parent=1 // pred_fallthru
      _
    %1245 = vsyncpa [#allocation3], 1
    %1246 = vsyncpa [#allocation5], 1

// kernel: forward.5
$region0: #{forward.5}
  #allocation0 [shape = 'u32[]', space=smem, size = 0x4, offset = 0x4, fixed_abs, tag = 'smem constant byte address 0x4 - core index']
  #allocation1 [shape = 'u32[144,128]{1,0:T(1,128)}', space=vmem, size = 0x12000, scoped, tag = 'internal scratch']
  #allocation2 [shape = 'f32[2,16]{1,0:T(2,128)}', space=vmem, size = 0x400, scoped, tag = 'scratch operand']
  %s0 = inlined_call_operand.vmem [shape: bf16[4,2,16], index: 0, kind: input, shape index: {}]
  %s1 = inlined_call_operand.hbm [shape: f32[2,8,32], index: 1, kind: input, shape index: {}]
  %s2 = inlined_call_operand.hbm [shape: bf16[32,32], index: 2, kind: input, shape index: {}]
  %s3 = inlined_call_operand.hbm [shape: f32[1,32], index: 3, kind: input, shape index: {}]
  %s4 = inlined_call_operand.hbm [shape: bf16[16,128], index: 4, kind: input, shape index: {}]
  %s5 = inlined_call_operand.hbm [shape: bf16[32,128], index: 5, kind: input, shape index: {}]
  %s6 = inlined_call_operand.hbm [shape: bf16[16,128], index: 6, kind: input, shape index: {}]
  %s7 = inlined_call_operand.hbm [shape: bf16[32,128], index: 7, kind: input, shape index: {}]
  %s8 = inlined_call_operand.hbm [shape: f32[1,128], index: 8, kind: input, shape index: {}]
  %s9 = inlined_call_operand.hbm [shape: bf16[32,768], index: 9, kind: input, shape index: {}]
  %s10 = inlined_call_operand.hbm [shape: bf16[16,768], index: 10, kind: input, shape index: {}]
  %s11 = inlined_call_operand.hbm [shape: bf16[32,768], index: 11, kind: input, shape index: {}]
  %s12 = inlined_call_operand.hbm [shape: bf16[16,768], index: 12, kind: input, shape index: {}]
  %s13 = inlined_call_operand.hbm [shape: f32[1,768], index: 13, kind: input, shape index: {}]
  %s14 = inlined_call_operand.hbm [shape: bf16[12,16], index: 14, kind: input, shape index: {}]
  %s15 = inlined_call_operand.hbm [shape: f32[1,16], index: 15, kind: input, shape index: {}]
  %s16 = inlined_call_operand.hbm [shape: f32[2,32], index: 16, kind: input, shape index: {}]
  %s17 = inlined_call_operand.hbm [shape: f32[2,32], index: 17, kind: input, shape index: {}]
  %s18 = inlined_call_operand.vmem [shape: f32[4,2,768], index: 18, kind: output, shape index: {0}]
  %s19 = inlined_call_operand.vmem [shape: f32[4,2,8], index: 19, kind: output, shape index: {1}]
  %s20 = inlined_call_operand.hbm [shape: f32[2,32], index: 20, kind: output, shape index: {2}]
  %s21 = inlined_call_operand.hbm [shape: f32[2,32], index: 21, kind: output, shape index: {3}]
  %22 = xla_tuple %s18, %s19, %s20, %s21
  %s23 = sld [smem:[#allocation0]]
  $region201: #{forward.5} parent=0
    _
  %s25 = ssub.s32 1, %s23
  %s26 = scalar_select 0, %s25, %s23
  $region1: #{forward.5} parent=0
    #allocation3 [shape = 'u8[8192]{0}', space=vmem, size = 0x2000, scoped, tag = 'input window, operand 1, single buffered']
    #allocation4 [shape = 's32[2]{0}', space=sflag, size = 0x8, scoped, tag = 'scoped memory for forward.5']
    #allocation5 [shape = 's32[2]{0}', space=sflag, size = 0x8, scoped, tag = 'scoped memory for forward.5']
    #allocation6 [shape = 'u8[8192]{0}', space=vmem, size = 0x2000, scoped, tag = 'input window, operand 2, single buffered']
    #allocation7 [shape = 's32[1]{0}', space=sflag, size = 0x4, scoped, tag = 'scoped memory for forward.5']
    #allocation8 [shape = 'u8[512]{0}', space=vmem, size = 0x400, scoped, tag = 'input window, operand 3, single buffered']
    #allocation9 [shape = 'u8[4096]{0}', space=vmem, size = 0x1000, scoped, tag = 'input window, operand 4, single buffered']
    #allocation10 [shape = 's32[1]{0}', space=sflag, size = 0x4, scoped, tag = 'scoped memory for forward.5']
    #allocation11 [shape = 'u8[8192]{0}', space=vmem, size = 0x2000, scoped, tag = 'input window, operand 5, single buffered']
    #allocation12 [shape = 'u8[4096]{0}', space=vmem, size = 0x1000, scoped, tag = 'input window, operand 6, single buffered']
    #allocation13 [shape = 's32[1]{0}', space=sflag, size = 0x4, scoped, tag = 'scoped memory for forward.5']
    #allocation14 [shape = 'u8[8192]{0}', space=vmem, size = 0x2000, scoped, tag = 'input window, operand 7, single buffered']
    #allocation15 [shape = 'u8[512]{0}', space=vmem, size = 0x400, scoped, tag = 'input window, operand 8, single buffered']
    #allocation16 [shape = 's32[1]{0}', space=sflag, size = 0x4, scoped, tag = 'scoped memory for forward.5']
    #allocation17 [shape = 'u8[49152]{0}', space=vmem, size = 0xc000, scoped, tag = 'input window, operand 9, single buffered']
    #allocation18 [shape = 'u8[24576]{0}', space=vmem, size = 0x6000, scoped, tag = 'input window, operand 10, single buffered']
    #allocation19 [shape = 's32[1]{0}', space=sflag, size = 0x4, scoped, tag = 'scoped memory for forward.5']
    #allocation20 [shape = 'u8[49152]{0}', space=vmem, size = 0xc000, scoped, tag = 'input window, operand 11, single buffered']
    #allocation21 [shape = 'u8[24576]{0}', space=vmem, size = 0x6000, scoped, tag = 'input window, operand 12, single buffered']
    #allocation22 [shape = 's32[1]{0}', space=sflag, size = 0x4, scoped, tag = 'scoped memory for forward.5']
    #allocation23 [shape = 'u8[3072]{0}', space=vmem, size = 0xc00, scoped, tag = 'input window, operand 13, single buffered']
    #allocation24 [shape = 'u8[4096]{0}', space=vmem, size = 0x1000, scoped, tag = 'input window, operand 14, single buffered']
    #allocation25 [shape = 's32[1]{0}', space=sflag, size = 0x4, scoped, tag = 'scoped memory for forward.5']
    #allocation26 [shape = 'u8[512]{0}', space=vmem, size = 0x400, scoped, tag = 'input window, operand 15, single buffered']
    #allocation27 [shape = 'u8[1024]{0}', space=vmem, size = 0x400, scoped, tag = 'input window, operand 16, single buffered']
    #allocation28 [shape = 's32[1]{0}', space=sflag, size = 0x4, scoped, tag = 'scoped memory for forward.5']
    #allocation29 [shape = 'u8[1024]{0}', space=vmem, size = 0x400, scoped, tag = 'input window, operand 17, single buffered']
    #allocation30 [shape = 'u8[1024]{0}', space=vmem, size = 0x400, scoped, tag = 'output window, operand 2, single buffered']
    #allocation31 [shape = 'u8[1024]{0}', space=vmem, size = 0x400, scoped, tag = 'output window, operand 3, single buffered']
    #allocation32 [shape = 's32[1]{0}', space=sflag, size = 0x4, scoped, tag = 'scoped memory for forward.5']
    %27 = vsyncpa [#allocation4], 0
    %28 = vsyncpa [#allocation7], 0
    %29 = vsyncpa [#allocation10], 0
    %30 = vsyncpa [#allocation13], 0
    %31 = vsyncpa [#allocation16], 0
    %32 = vsyncpa [#allocation19], 0
    %33 = vsyncpa [#allocation22], 0
    %34 = vsyncpa [#allocation25], 0
    %35 = vsyncpa [#allocation28], 0
    %36 = vsyncpa [#allocation5], 0
    %37 = vsyncpa [#allocation32], 0
    loop: start=0, step=1, limit=4
    $region2: #{forward.5} parent=1 // loop_pre_header
      _
    $region3: #{forward.5} parent=1 // loop_header
      %s39 = sphi 0, %s43
      %p40 = scmp.ge.s32.totalorder %s39, 4
      %s49 = sphi 0, %s51
      %s52 = sphi 0, %s49
      %s53 = sphi 0, %s52
      %s69 = sphi 0, %s53
      %s73 = sphi 0, %s73
      %s75 = sphi 0, %s73
      %s76 = sphi 0, %s75
      %s90 = sphi 0, %s76
      %s94 = sphi 0, %s94
      %s96 = sphi 0, %s94
      %s97 = sphi 0, %s96
      %s111 = sphi 0, %s97
      %s115 = sphi 0, %s115
      %s117 = sphi 0, %s115
      %s118 = sphi 0, %s117
      %s132 = sphi 0, %s118
      %s136 = sphi 0, %s136
      %s138 = sphi 0, %s136
      %s139 = sphi 0, %s138
      %s153 = sphi 0, %s139
      %s157 = sphi 0, %s157
      %s159 = sphi 0, %s157
      %s160 = sphi 0, %s159
      %s174 = sphi 0, %s160
      %s178 = sphi 0, %s178
      %s180 = sphi 0, %s178
      %s181 = sphi 0, %s180
      %s195 = sphi 0, %s181
      %s199 = sphi 0, %s199
      %s201 = sphi 0, %s199
      %s202 = sphi 0, %s201
      %s216 = sphi 0, %s202
      %s220 = sphi 0, %s220
      %s222 = sphi 0, %s220
      %s223 = sphi 0, %s222
      %s237 = sphi 0, %s223
      %s241 = sphi 0, %s241
      %s243 = sphi 0, %s241
      %s244 = sphi 0, %s243
      %s258 = sphi 0, %s244
      %s262 = sphi 0, %s262
      %s264 = sphi 0, %s262
      %s265 = sphi 0, %s264
      %s279 = sphi 0, %s265
      %s283 = sphi 0, %s283
      %s285 = sphi 0, %s283
      %s286 = sphi 0, %s285
      %s300 = sphi 0, %s286
      %s304 = sphi 0, %s304
      %s306 = sphi 0, %s304
      %s307 = sphi 0, %s306
      %s321 = sphi 0, %s307
      %s325 = sphi 0, %s325
      %s327 = sphi 0, %s325
      %s328 = sphi 0, %s327
      %s342 = sphi 0, %s328
      %s346 = sphi 0, %s346
      %s348 = sphi 0, %s346
      %s349 = sphi 0, %s348
      %s363 = sphi 0, %s349
      %s367 = sphi 0, %s367
      %s369 = sphi 0, %s367
      %s370 = sphi 0, %s369
      %s384 = sphi 0, %s370
      %s388 = sphi 0, %s388
      %s390 = sphi 0, %s388
      %s391 = sphi 0, %s390
      %s405 = sphi 0, %s391
      %s409 = sphi 0, %s409
      %s411 = sphi 0, %s409
      %s412 = sphi 0, %s411
      %s426 = sphi 0, %s412
      %s432 = sphi 0, %s434
      %s435 = sphi 0, %s432
      %s436 = sphi 0, %s435
      %s452 = sphi 0, %s436
      %s458 = sphi 0, %s460
      %s461 = sphi 0, %s458
      %s462 = sphi 0, %s461
      %s478 = sphi 0, %s462
      %s482 = sphi 0, %s482
      %s484 = sphi 0, %s482
      %s485 = sphi 0, %s484
      %s499 = sphi 0, %s485
      %s503 = sphi 0, %s503
      %s505 = sphi 0, %s503
      %s506 = sphi 0, %s505
      %s520 = sphi 0, %s506
    $region4: #{forward.5} parent=1 // loop_header_branch
      %42 = sbr.rel (%p40) target = $region8
    $region5: #{forward.5} parent=1 // loop_body
      %s44 = ssub.s32 %s39, 1
      %s45 = ssub.s32 %s39, 2
      %s46 = sadd.s32 %s39, 1
      %s47 = ssub.s32 %s39, %s46
      %p48 = scmp.eq.s32.totalorder %s47, 0
      %s50 = sadd.s32 %s49, 1
      %s51 = scalar_select %p48, %s49, %s50
      %p54 = pneg %p48
      %p55 = scmp.eq.s32.totalorder %s39, 1
      %p56 = por %p54, %p55
      %p57 = scmp.ne.s32.totalorder %s49, %s52
      %p58 = scmp.eq.s32.totalorder %s39, 0
      %p59 = por %p57, %p58
      %p60 = scmp.ne.s32.totalorder %s49, %s52
      %p61 = scmp.eq.s32.totalorder %s44, 1
      %p62 = por %p60, %p61
      %p63 = scmp.ne.s32.totalorder %s52, %s53
      %p64 = scmp.eq.s32.totalorder %s44, 0
      %p65 = por %p63, %p64
      %p66 = scmp.ne.s32.totalorder %s52, %s53
      %p67 = scmp.eq.s32.totalorder %s45, 1
      %p68 = por %p66, %p67
      %p70 = scmp.ne.s32.totalorder %s53, %s69
      %p71 = scmp.eq.s32.totalorder %s45, 0
      %p72 = por %p70, %p71
      %s74 = sadd.s32 %s73, 1
      %p77 = scmp.eq.s32.totalorder %s39, 1
      %p78 = scmp.ne.s32.totalorder %s73, %s75
      %p79 = scmp.eq.s32.totalorder %s39, 0
      %p80 = por %p78, %p79
      %p81 = scmp.ne.s32.totalorder %s73, %s75
      %p82 = scmp.eq.s32.totalorder %s44, 1
      %p83 = por %p81, %p82
      %p84 = scmp.ne.s32.totalorder %s75, %s76
      %p85 = scmp.eq.s32.totalorder %s44, 0
      %p86 = por %p84, %p85
      %p87 = scmp.ne.s32.totalorder %s75, %s76
      %p88 = scmp.eq.s32.totalorder %s45, 1
      %p89 = por %p87, %p88
      %p91 = scmp.ne.s32.totalorder %s76, %s90
      %p92 = scmp.eq.s32.totalorder %s45, 0
      %p93 = por %p91, %p92
      %s95 = sadd.s32 %s94, 1
      %p98 = scmp.eq.s32.totalorder %s39, 1
      %p99 = scmp.ne.s32.totalorder %s94, %s96
      %p100 = scmp.eq.s32.totalorder %s39, 0
      %p101 = por %p99, %p100
      %p102 = scmp.ne.s32.totalorder %s94, %s96
      %p103 = scmp.eq.s32.totalorder %s44, 1
      %p104 = por %p102, %p103
      %p105 = scmp.ne.s32.totalorder %s96, %s97
      %p106 = scmp.eq.s32.totalorder %s44, 0
      %p107 = por %p105, %p106
      %p108 = scmp.ne.s32.totalorder %s96, %s97
      %p109 = scmp.eq.s32.totalorder %s45, 1
      %p110 = por %p108, %p109
      %p112 = scmp.ne.s32.totalorder %s97, %s111
      %p113 = scmp.eq.s32.totalorder %s45, 0
      %p114 = por %p112, %p113
      %s116 = sadd.s32 %s115, 1
      %p119 = scmp.eq.s32.totalorder %s39, 1
      %p120 = scmp.ne.s32.totalorder %s115, %s117
      %p121 = scmp.eq.s32.totalorder %s39, 0
      %p122 = por %p120, %p121
      %p123 = scmp.ne.s32.totalorder %s115, %s117
      %p124 = scmp.eq.s32.totalorder %s44, 1
      %p125 = por %p123, %p124
      %p126 = scmp.ne.s32.totalorder %s117, %s118
      %p127 = scmp.eq.s32.totalorder %s44, 0
      %p128 = por %p126, %p127
      %p129 = scmp.ne.s32.totalorder %s117, %s118
      %p130 = scmp.eq.s32.totalorder %s45, 1
      %p131 = por %p129, %p130
      %p133 = scmp.ne.s32.totalorder %s118, %s132
      %p134 = scmp.eq.s32.totalorder %s45, 0
      %p135 = por %p133, %p134
      %s137 = sadd.s32 %s136, 1
      %p140 = scmp.eq.s32.totalorder %s39, 1
      %p141 = scmp.ne.s32.totalorder %s136, %s138
      %p142 = scmp.eq.s32.totalorder %s39, 0
      %p143 = por %p141, %p142
      %p144 = scmp.ne.s32.totalorder %s136, %s138
      %p145 = scmp.eq.s32.totalorder %s44, 1
      %p146 = por %p144, %p145
      %p147 = scmp.ne.s32.totalorder %s138, %s139
      %p148 = scmp.eq.s32.totalorder %s44, 0
      %p149 = por %p147, %p148
      %p150 = scmp.ne.s32.totalorder %s138, %s139
      %p151 = scmp.eq.s32.totalorder %s45, 1
      %p152 = por %p150, %p151
      %p154 = scmp.ne.s32.totalorder %s139, %s153
      %p155 = scmp.eq.s32.totalorder %s45, 0
      %p156 = por %p154, %p155
      %s158 = sadd.s32 %s157, 1
      %p161 = scmp.eq.s32.totalorder %s39, 1
      %p162 = scmp.ne.s32.totalorder %s157, %s159
      %p163 = scmp.eq.s32.totalorder %s39, 0
      %p164 = por %p162, %p163
      %p165 = scmp.ne.s32.totalorder %s157, %s159
      %p166 = scmp.eq.s32.totalorder %s44, 1
      %p167 = por %p165, %p166
      %p168 = scmp.ne.s32.totalorder %s159, %s160
      %p169 = scmp.eq.s32.totalorder %s44, 0
      %p170 = por %p168, %p169
      %p171 = scmp.ne.s32.totalorder %s159, %s160
      %p172 = scmp.eq.s32.totalorder %s45, 1
      %p173 = por %p171, %p172
      %p175 = scmp.ne.s32.totalorder %s160, %s174
      %p176 = scmp.eq.s32.totalorder %s45, 0
      %p177 = por %p175, %p176
      %s179 = sadd.s32 %s178, 1
      %p182 = scmp.eq.s32.totalorder %s39, 1
      %p183 = scmp.ne.s32.totalorder %s178, %s180
      %p184 = scmp.eq.s32.totalorder %s39, 0
      %p185 = por %p183, %p184
      %p186 = scmp.ne.s32.totalorder %s178, %s180
      %p187 = scmp.eq.s32.totalorder %s44, 1
      %p188 = por %p186, %p187
      %p189 = scmp.ne.s32.totalorder %s180, %s181
      %p190 = scmp.eq.s32.totalorder %s44, 0
      %p191 = por %p189, %p190
      %p192 = scmp.ne.s32.totalorder %s180, %s181
      %p193 = scmp.eq.s32.totalorder %s45, 1
      %p194 = por %p192, %p193
      %p196 = scmp.ne.s32.totalorder %s181, %s195
      %p197 = scmp.eq.s32.totalorder %s45, 0
      %p198 = por %p196, %p197
      %s200 = sadd.s32 %s199, 1
      %p203 = scmp.eq.s32.totalorder %s39, 1
      %p204 = scmp.ne.s32.totalorder %s199, %s201
      %p205 = scmp.eq.s32.totalorder %s39, 0
      %p206 = por %p204, %p205
      %p207 = scmp.ne.s32.totalorder %s199, %s201
      %p208 = scmp.eq.s32.totalorder %s44, 1
      %p209 = por %p207, %p208
      %p210 = scmp.ne.s32.totalorder %s201, %s202
      %p211 = scmp.eq.s32.totalorder %s44, 0
      %p212 = por %p210, %p211
      %p213 = scmp.ne.s32.totalorder %s201, %s202
      %p214 = scmp.eq.s32.totalorder %s45, 1
      %p215 = por %p213, %p214
      %p217 = scmp.ne.s32.totalorder %s202, %s216
      %p218 = scmp.eq.s32.totalorder %s45, 0
      %p219 = por %p217, %p218
      %s221 = sadd.s32 %s220, 1
      %p224 = scmp.eq.s32.totalorder %s39, 1
      %p225 = scmp.ne.s32.totalorder %s220, %s222
      %p226 = scmp.eq.s32.totalorder %s39, 0
      %p227 = por %p225, %p226
      %p228 = scmp.ne.s32.totalorder %s220, %s222
      %p229 = scmp.eq.s32.totalorder %s44, 1
      %p230 = por %p228, %p229
      %p231 = scmp.ne.s32.totalorder %s222, %s223
      %p232 = scmp.eq.s32.totalorder %s44, 0
      %p233 = por %p231, %p232
      %p234 = scmp.ne.s32.totalorder %s222, %s223
      %p235 = scmp.eq.s32.totalorder %s45, 1
      %p236 = por %p234, %p235
      %p238 = scmp.ne.s32.totalorder %s223, %s237
      %p239 = scmp.eq.s32.totalorder %s45, 0
      %p240 = por %p238, %p239
      %s242 = sadd.s32 %s241, 1
      %p245 = scmp.eq.s32.totalorder %s39, 1
      %p246 = scmp.ne.s32.totalorder %s241, %s243
      %p247 = scmp.eq.s32.totalorder %s39, 0
      %p248 = por %p246, %p247
      %p249 = scmp.ne.s32.totalorder %s241, %s243
      %p250 = scmp.eq.s32.totalorder %s44, 1
      %p251 = por %p249, %p250
      %p252 = scmp.ne.s32.totalorder %s243, %s244
      %p253 = scmp.eq.s32.totalorder %s44, 0
      %p254 = por %p252, %p253
      %p255 = scmp.ne.s32.totalorder %s243, %s244
      %p256 = scmp.eq.s32.totalorder %s45, 1
      %p257 = por %p255, %p256
      %p259 = scmp.ne.s32.totalorder %s244, %s258
      %p260 = scmp.eq.s32.totalorder %s45, 0
      %p261 = por %p259, %p260
      %s263 = sadd.s32 %s262, 1
      %p266 = scmp.eq.s32.totalorder %s39, 1
      %p267 = scmp.ne.s32.totalorder %s262, %s264
      %p268 = scmp.eq.s32.totalorder %s39, 0
      %p269 = por %p267, %p268
      %p270 = scmp.ne.s32.totalorder %s262, %s264
      %p271 = scmp.eq.s32.totalorder %s44, 1
      %p272 = por %p270, %p271
      %p273 = scmp.ne.s32.totalorder %s264, %s265
      %p274 = scmp.eq.s32.totalorder %s44, 0
      %p275 = por %p273, %p274
      %p276 = scmp.ne.s32.totalorder %s264, %s265
      %p277 = scmp.eq.s32.totalorder %s45, 1
      %p278 = por %p276, %p277
      %p280 = scmp.ne.s32.totalorder %s265, %s279
      %p281 = scmp.eq.s32.totalorder %s45, 0
      %p282 = por %p280, %p281
      %s284 = sadd.s32 %s283, 1
      %p287 = scmp.eq.s32.totalorder %s39, 1
      %p288 = scmp.ne.s32.totalorder %s283, %s285
      %p289 = scmp.eq.s32.totalorder %s39, 0
      %p290 = por %p288, %p289
      %p291 = scmp.ne.s32.totalorder %s283, %s285
      %p292 = scmp.eq.s32.totalorder %s44, 1
      %p293 = por %p291, %p292
      %p294 = scmp.ne.s32.totalorder %s285, %s286
      %p295 = scmp.eq.s32.totalorder %s44, 0
      %p296 = por %p294, %p295
      %p297 = scmp.ne.s32.totalorder %s285, %s286
      %p298 = scmp.eq.s32.totalorder %s45, 1
      %p299 = por %p297, %p298
      %p301 = scmp.ne.s32.totalorder %s286, %s300
      %p302 = scmp.eq.s32.totalorder %s45, 0
      %p303 = por %p301, %p302
      %s305 = sadd.s32 %s304, 1
      %p308 = scmp.eq.s32.totalorder %s39, 1
      %p309 = scmp.ne.s32.totalorder %s304, %s306
      %p310 = scmp.eq.s32.totalorder %s39, 0
      %p311 = por %p309, %p310
      %p312 = scmp.ne.s32.totalorder %s304, %s306
      %p313 = scmp.eq.s32.totalorder %s44, 1
      %p314 = por %p312, %p313
      %p315 = scmp.ne.s32.totalorder %s306, %s307
      %p316 = scmp.eq.s32.totalorder %s44, 0
      %p317 = por %p315, %p316
      %p318 = scmp.ne.s32.totalorder %s306, %s307
      %p319 = scmp.eq.s32.totalorder %s45, 1
      %p320 = por %p318, %p319
      %p322 = scmp.ne.s32.totalorder %s307, %s321
      %p323 = scmp.eq.s32.totalorder %s45, 0
      %p324 = por %p322, %p323
      %s326 = sadd.s32 %s325, 1
      %p329 = scmp.eq.s32.totalorder %s39, 1
      %p330 = scmp.ne.s32.totalorder %s325, %s327
      %p331 = scmp.eq.s32.totalorder %s39, 0
      %p332 = por %p330, %p331
      %p333 = scmp.ne.s32.totalorder %s325, %s327
      %p334 = scmp.eq.s32.totalorder %s44, 1
      %p335 = por %p333, %p334
      %p336 = scmp.ne.s32.totalorder %s327, %s328
      %p337 = scmp.eq.s32.totalorder %s44, 0
      %p338 = por %p336, %p337
      %p339 = scmp.ne.s32.totalorder %s327, %s328
      %p340 = scmp.eq.s32.totalorder %s45, 1
      %p341 = por %p339, %p340
      %p343 = scmp.ne.s32.totalorder %s328, %s342
      %p344 = scmp.eq.s32.totalorder %s45, 0
      %p345 = por %p343, %p344
      %s347 = sadd.s32 %s346, 1
      %p350 = scmp.eq.s32.totalorder %s39, 1
      %p351 = scmp.ne.s32.totalorder %s346, %s348
      %p352 = scmp.eq.s32.totalorder %s39, 0
      %p353 = por %p351, %p352
      %p354 = scmp.ne.s32.totalorder %s346, %s348
      %p355 = scmp.eq.s32.totalorder %s44, 1
      %p356 = por %p354, %p355
      %p357 = scmp.ne.s32.totalorder %s348, %s349
      %p358 = scmp.eq.s32.totalorder %s44, 0
      %p359 = por %p357, %p358
      %p360 = scmp.ne.s32.totalorder %s348, %s349
      %p361 = scmp.eq.s32.totalorder %s45, 1
      %p362 = por %p360, %p361
      %p364 = scmp.ne.s32.totalorder %s349, %s363
      %p365 = scmp.eq.s32.totalorder %s45, 0
      %p366 = por %p364, %p365
      %s368 = sadd.s32 %s367, 1
      %p371 = scmp.eq.s32.totalorder %s39, 1
      %p372 = scmp.ne.s32.totalorder %s367, %s369
      %p373 = scmp.eq.s32.totalorder %s39, 0
      %p374 = por %p372, %p373
      %p375 = scmp.ne.s32.totalorder %s367, %s369
      %p376 = scmp.eq.s32.totalorder %s44, 1
      %p377 = por %p375, %p376
      %p378 = scmp.ne.s32.totalorder %s369, %s370
      %p379 = scmp.eq.s32.totalorder %s44, 0
      %p380 = por %p378, %p379
      %p381 = scmp.ne.s32.totalorder %s369, %s370
      %p382 = scmp.eq.s32.totalorder %s45, 1
      %p383 = por %p381, %p382
      %p385 = scmp.ne.s32.totalorder %s370, %s384
      %p386 = scmp.eq.s32.totalorder %s45, 0
      %p387 = por %p385, %p386
      %s389 = sadd.s32 %s388, 1
      %p392 = scmp.eq.s32.totalorder %s39, 1
      %p393 = scmp.ne.s32.totalorder %s388, %s390
      %p394 = scmp.eq.s32.totalorder %s39, 0
      %p395 = por %p393, %p394
      %p396 = scmp.ne.s32.totalorder %s388, %s390
      %p397 = scmp.eq.s32.totalorder %s44, 1
      %p398 = por %p396, %p397
      %p399 = scmp.ne.s32.totalorder %s390, %s391
      %p400 = scmp.eq.s32.totalorder %s44, 0
      %p401 = por %p399, %p400
      %p402 = scmp.ne.s32.totalorder %s390, %s391
      %p403 = scmp.eq.s32.totalorder %s45, 1
      %p404 = por %p402, %p403
      %p406 = scmp.ne.s32.totalorder %s391, %s405
      %p407 = scmp.eq.s32.totalorder %s45, 0
      %p408 = por %p406, %p407
      %s410 = sadd.s32 %s409, 1
      %p413 = scmp.eq.s32.totalorder %s39, 1
      %p414 = scmp.ne.s32.totalorder %s409, %s411
      %p415 = scmp.eq.s32.totalorder %s39, 0
      %p416 = por %p414, %p415
      %p417 = scmp.ne.s32.totalorder %s409, %s411
      %p418 = scmp.eq.s32.totalorder %s44, 1
      %p419 = por %p417, %p418
      %p420 = scmp.ne.s32.totalorder %s411, %s412
      %p421 = scmp.eq.s32.totalorder %s44, 0
      %p422 = por %p420, %p421
      %p423 = scmp.ne.s32.totalorder %s411, %s412
      %p424 = scmp.eq.s32.totalorder %s45, 1
      %p425 = por %p423, %p424
      %p427 = scmp.ne.s32.totalorder %s412, %s426
      %p428 = scmp.eq.s32.totalorder %s45, 0
      %p429 = por %p427, %p428
      %s430 = ssub.s32 %s39, %s46
      %p431 = scmp.eq.s32.totalorder %s430, 0
      %s433 = sadd.s32 %s432, 1
      %s434 = scalar_select %p431, %s432, %s433
      %p437 = pneg %p431
      %p438 = scmp.eq.s32.totalorder %s39, 1
      %p439 = por %p437, %p438
      %p440 = scmp.ne.s32.totalorder %s432, %s435
      %p441 = scmp.eq.s32.totalorder %s39, 0
      %p442 = por %p440, %p441
      %p443 = scmp.ne.s32.totalorder %s432, %s435
      %p444 = scmp.eq.s32.totalorder %s44, 1
      %p445 = por %p443, %p444
      %p446 = scmp.ne.s32.totalorder %s435, %s436
      %p447 = scmp.eq.s32.totalorder %s44, 0
      %p448 = por %p446, %p447
      %p449 = scmp.ne.s32.totalorder %s435, %s436
      %p450 = scmp.eq.s32.totalorder %s45, 1
      %p451 = por %p449, %p450
      %p453 = scmp.ne.s32.totalorder %s436, %s452
      %p454 = scmp.eq.s32.totalorder %s45, 0
      %p455 = por %p453, %p454
      %s456 = ssub.s32 %s39, %s46
      %p457 = scmp.eq.s32.totalorder %s456, 0
      %s459 = sadd.s32 %s458, 1
      %s460 = scalar_select %p457, %s458, %s459
      %p463 = pneg %p457
      %p464 = scmp.eq.s32.totalorder %s39, 1
      %p465 = por %p463, %p464
      %p466 = scmp.ne.s32.totalorder %s458, %s461
      %p467 = scmp.eq.s32.totalorder %s39, 0
      %p468 = por %p466, %p467
      %p469 = scmp.ne.s32.totalorder %s458, %s461
      %p470 = scmp.eq.s32.totalorder %s44, 1
      %p471 = por %p469, %p470
      %p472 = scmp.ne.s32.totalorder %s461, %s462
      %p473 = scmp.eq.s32.totalorder %s44, 0
      %p474 = por %p472, %p473
      %p475 = scmp.ne.s32.totalorder %s461, %s462
      %p476 = scmp.eq.s32.totalorder %s45, 1
      %p477 = por %p475, %p476
      %p479 = scmp.ne.s32.totalorder %s462, %s478
      %p480 = scmp.eq.s32.totalorder %s45, 0
      %p481 = por %p479, %p480
      %s483 = sadd.s32 %s482, 1
      %p486 = scmp.eq.s32.totalorder %s39, 1
      %p487 = scmp.ne.s32.totalorder %s482, %s484
      %p488 = scmp.eq.s32.totalorder %s39, 0
      %p489 = por %p487, %p488
      %p490 = scmp.ne.s32.totalorder %s482, %s484
      %p491 = scmp.eq.s32.totalorder %s44, 1
      %p492 = por %p490, %p491
      %p493 = scmp.ne.s32.totalorder %s484, %s485
      %p494 = scmp.eq.s32.totalorder %s44, 0
      %p495 = por %p493, %p494
      %p496 = scmp.ne.s32.totalorder %s484, %s485
      %p497 = scmp.eq.s32.totalorder %s45, 1
      %p498 = por %p496, %p497
      %p500 = scmp.ne.s32.totalorder %s485, %s499
      %p501 = scmp.eq.s32.totalorder %s45, 0
      %p502 = por %p500, %p501
      %s504 = sadd.s32 %s503, 1
      %p507 = scmp.eq.s32.totalorder %s39, 1
      %p508 = scmp.ne.s32.totalorder %s503, %s505
      %p509 = scmp.eq.s32.totalorder %s39, 0
      %p510 = por %p508, %p509
      %p511 = scmp.ne.s32.totalorder %s503, %s505
      %p512 = scmp.eq.s32.totalorder %s44, 1
      %p513 = por %p511, %p512
      %p514 = scmp.ne.s32.totalorder %s505, %s506
      %p515 = scmp.eq.s32.totalorder %s44, 0
      %p516 = por %p514, %p515
      %p517 = scmp.ne.s32.totalorder %s505, %s506
      %p518 = scmp.eq.s32.totalorder %s45, 1
      %p519 = por %p517, %p518
      %p521 = scmp.ne.s32.totalorder %s506, %s520
      %p522 = scmp.eq.s32.totalorder %s45, 0
      %p523 = por %p521, %p522
      %p524 = scmp.le.s32.totalorder 1, %s39
      %p525 = scmp.lt.s32.totalorder %s39, 3
      %p526 = pnand %p524, %p525
      %p527 = pneg %p526
      // Predicated region
      $region9: #{forward.5} parent=5 // pred_check
        _
      $region10: #{forward.5} parent=5 // pred_check_branch
        %529 = sbr.rel (%p526) target = $region12
      $region11: #{forward.5} parent=5 // pred_region
        %s530 = ssub.s32 %s39, 1
        // Predicated region
        $region13: #{forward.5} parent=11 // pred_check
          %p531 = pneg %p86
        $region14: #{forward.5} parent=11 // pred_check_branch
          %533 = sbr.rel (%p531) target = $region16
        $region15: #{forward.5} parent=11 // pred_region
          %s535 = ssub.s32 256, 256
          %536 = vsyncadd [#allocation4], %s535
          %s537 = sshll.u32 [#allocation3], 4
          %s538 = int_to_ptr.vmem [resolvable:$true] %s537
          %543 = dma.hbm_to_vmem [thread:$0]  %s1, 256, %s538, [#allocation4], 128, 128, 8
        $region16: #{forward.5} parent=11 // pred_fallthru
          _
        // Predicated region
        $region17: #{forward.5} parent=11 // pred_check
          %p544 = pneg %p107
        $region18: #{forward.5} parent=11 // pred_check_branch
          %546 = sbr.rel (%p544) target = $region20
        $region19: #{forward.5} parent=11 // pred_region
          %s548 = ssub.s32 256, 256
          %549 = vsyncadd [#allocation7], %s548
          %s550 = sshll.u32 [#allocation6], 4
          %s551 = int_to_ptr.vmem [resolvable:$true] %s550
          %556 = dma.hbm_to_vmem [thread:$0]  %s2, 256, %s551, [#allocation7], 64, 64, 4
        $region20: #{forward.5} parent=11 // pred_fallthru
          _
        // Predicated region
        $region21: #{forward.5} parent=11 // pred_check
          %p557 = pneg %p128
        $region22: #{forward.5} parent=11 // pred_check_branch
          %559 = sbr.rel (%p557) target = $region24
        $region23: #{forward.5} parent=11 // pred_region
          %s561 = ssub.s32 16, 16
          %562 = vsyncadd [#allocation7], %s561
          %s564 = sshll.u32 [#allocation8], 4
          %s565 = int_to_ptr.vmem [resolvable:$true] %s564
          %567 = dma.hbm_to_vmem [thread:$0]  %s3, 16, %s565, [#allocation7]
        $region24: #{forward.5} parent=11 // pred_fallthru
          _
        // Predicated region
        $region25: #{forward.5} parent=11 // pred_check
          %p568 = pneg %p149
        $region26: #{forward.5} parent=11 // pred_check_branch
          %570 = sbr.rel (%p568) target = $region28
        $region27: #{forward.5} parent=11 // pred_region
          %s572 = ssub.s32 128, 128
          %573 = vsyncadd [#allocation10], %s572
          %s574 = sshll.u32 [#allocation9], 4
          %s575 = int_to_ptr.vmem [resolvable:$true] %s574
          %580 = dma.hbm_to_vmem [thread:$0]  %s4, 128, %s575, [#allocation10], 64, 64, 4
        $region28: #{forward.5} parent=11 // pred_fallthru
          _
        // Predicated region
        $region29: #{forward.5} parent=11 // pred_check
          %p581 = pneg %p170
        $region30: #{forward.5} parent=11 // pred_check_branch
          %583 = sbr.rel (%p581) target = $region32
        $region31: #{forward.5} parent=11 // pred_region
          %s585 = ssub.s32 256, 256
          %586 = vsyncadd [#allocation10], %s585
          %s587 = sshll.u32 [#allocation11], 4
          %s588 = int_to_ptr.vmem [resolvable:$true] %s587
          %593 = dma.hbm_to_vmem [thread:$0]  %s5, 256, %s588, [#allocation10], 64, 64, 4
        $region32: #{forward.5} parent=11 // pred_fallthru
          _
        // Predicated region
        $region33: #{forward.5} parent=11 // pred_check
          %p594 = pneg %p191
        $region34: #{forward.5} parent=11 // pred_check_branch
          %596 = sbr.rel (%p594) target = $region36
        $region35: #{forward.5} parent=11 // pred_region
          %s598 = ssub.s32 128, 128
          %599 = vsyncadd [#allocation13], %s598
          %s600 = sshll.u32 [#allocation12], 4
          %s601 = int_to_ptr.vmem [resolvable:$true] %s600
          %606 = dma.hbm_to_vmem [thread:$0]  %s6, 128, %s601, [#allocation13], 64, 64, 4
        $region36: #{forward.5} parent=11 // pred_fallthru
          _
        // Predicated region
        $region37: #{forward.5} parent=11 // pred_check
          %p607 = pneg %p212
        $region38: #{forward.5} parent=11 // pred_check_branch
          %609 = sbr.rel (%p607) target = $region40
        $region39: #{forward.5} parent=11 // pred_region
          %s611 = ssub.s32 256, 256
          %612 = vsyncadd [#allocation13], %s611
          %s613 = sshll.u32 [#allocation14], 4
          %s614 = int_to_ptr.vmem [resolvable:$true] %s613
          %619 = dma.hbm_to_vmem [thread:$0]  %s7, 256, %s614, [#allocation13], 64, 64, 4
        $region40: #{forward.5} parent=11 // pred_fallthru
          _
        // Predicated region
        $region41: #{forward.5} parent=11 // pred_check
          %p620 = pneg %p233
        $region42: #{forward.5} parent=11 // pred_check_branch
          %622 = sbr.rel (%p620) target = $region44
        $region43: #{forward.5} parent=11 // pred_region
          %s624 = ssub.s32 16, 16
          %625 = vsyncadd [#allocation16], %s624
          %s627 = sshll.u32 [#allocation15], 4
          %s628 = int_to_ptr.vmem [resolvable:$true] %s627
          %630 = dma.hbm_to_vmem [thread:$0]  %s8, 16, %s628, [#allocation16]
        $region44: #{forward.5} parent=11 // pred_fallthru
          _
        // Predicated region
        $region45: #{forward.5} parent=11 // pred_check
          %p631 = pneg %p254
        $region46: #{forward.5} parent=11 // pred_check_branch
          %633 = sbr.rel (%p631) target = $region48
        $region47: #{forward.5} parent=11 // pred_region
          %s635 = ssub.s32 1536, 1536
          %636 = vsyncadd [#allocation16], %s635
          %s637 = sshll.u32 [#allocation17], 4
          %s638 = int_to_ptr.vmem [resolvable:$true] %s637
          %643 = dma.hbm_to_vmem [thread:$0]  %s9, 1536, %s638, [#allocation16], 384, 384, 24
        $region48: #{forward.5} parent=11 // pred_fallthru
          _
        // Predicated region
        $region49: #{forward.5} parent=11 // pred_check
          %p644 = pneg %p275
        $region50: #{forward.5} parent=11 // pred_check_branch
          %646 = sbr.rel (%p644) target = $region52
        $region51: #{forward.5} parent=11 // pred_region
          %s648 = ssub.s32 768, 768
          %649 = vsyncadd [#allocation19], %s648
          %s650 = sshll.u32 [#allocation18], 4
          %s651 = int_to_ptr.vmem [resolvable:$true] %s650
          %656 = dma.hbm_to_vmem [thread:$0]  %s10, 768, %s651, [#allocation19], 384, 384, 24
        $region52: #{forward.5} parent=11 // pred_fallthru
          _
        // Predicated region
        $region53: #{forward.5} parent=11 // pred_check
          %p657 = pneg %p296
        $region54: #{forward.5} parent=11 // pred_check_branch
          %659 = sbr.rel (%p657) target = $region56
        $region55: #{forward.5} parent=11 // pred_region
          %s661 = ssub.s32 1536, 1536
          %662 = vsyncadd [#allocation19], %s661
          %s663 = sshll.u32 [#allocation20], 4
          %s664 = int_to_ptr.vmem [resolvable:$true] %s663
          %669 = dma.hbm_to_vmem [thread:$0]  %s11, 1536, %s664, [#allocation19], 384, 384, 24
        $region56: #{forward.5} parent=11 // pred_fallthru
          _
        // Predicated region
        $region57: #{forward.5} parent=11 // pred_check
          %p670 = pneg %p317
        $region58: #{forward.5} parent=11 // pred_check_branch
          %672 = sbr.rel (%p670) target = $region60
        $region59: #{forward.5} parent=11 // pred_region
          %s674 = ssub.s32 768, 768
          %675 = vsyncadd [#allocation22], %s674
          %s676 = sshll.u32 [#allocation21], 4
          %s677 = int_to_ptr.vmem [resolvable:$true] %s676
          %682 = dma.hbm_to_vmem [thread:$0]  %s12, 768, %s677, [#allocation22], 384, 384, 24
        $region60: #{forward.5} parent=11 // pred_fallthru
          _
        // Predicated region
        $region61: #{forward.5} parent=11 // pred_check
          %p683 = pneg %p338
        $region62: #{forward.5} parent=11 // pred_check_branch
          %685 = sbr.rel (%p683) target = $region64
        $region63: #{forward.5} parent=11 // pred_region
          %s687 = ssub.s32 96, 96
          %688 = vsyncadd [#allocation22], %s687
          %s690 = sshll.u32 [#allocation23], 4
          %s691 = int_to_ptr.vmem [resolvable:$true] %s690
          %693 = dma.hbm_to_vmem [thread:$0]  %s13, 96, %s691, [#allocation22]
        $region64: #{forward.5} parent=11 // pred_fallthru
          _
        // Predicated region
        $region65: #{forward.5} parent=11 // pred_check
          %p694 = pneg %p359
        $region66: #{forward.5} parent=11 // pred_check_branch
          %696 = sbr.rel (%p694) target = $region68
        $region67: #{forward.5} parent=11 // pred_region
          %s698 = ssub.s32 128, 128
          %699 = vsyncadd [#allocation25], %s698
          %s700 = sshll.u32 [#allocation24], 4
          %s701 = int_to_ptr.vmem [resolvable:$true] %s700
          %706 = dma.hbm_to_vmem [thread:$0]  %s14, 128, %s701, [#allocation25], 64, 64, 4
        $region68: #{forward.5} parent=11 // pred_fallthru
          _
        // Predicated region
        $region69: #{forward.5} parent=11 // pred_check
          %p707 = pneg %p380
        $region70: #{forward.5} parent=11 // pred_check_branch
          %709 = sbr.rel (%p707) target = $region72
        $region71: #{forward.5} parent=11 // pred_region
          %s711 = ssub.s32 16, 16
          %712 = vsyncadd [#allocation25], %s711
          %s714 = sshll.u32 [#allocation26], 4
          %s715 = int_to_ptr.vmem [resolvable:$true] %s714
          %717 = dma.hbm_to_vmem [thread:$0]  %s15, 16, %s715, [#allocation25]
        $region72: #{forward.5} parent=11 // pred_fallthru
          _
        // Predicated region
        $region73: #{forward.5} parent=11 // pred_check
          %p718 = pneg %p401
        $region74: #{forward.5} parent=11 // pred_check_branch
          %720 = sbr.rel (%p718) target = $region76
        $region75: #{forward.5} parent=11 // pred_region
          %s722 = ssub.s32 32, 32
          %723 = vsyncadd [#allocation28], %s722
          %s725 = sshll.u32 [#allocation27], 4
          %s726 = int_to_ptr.vmem [resolvable:$true] %s725
          %728 = dma.hbm_to_vmem [thread:$0]  %s16, 32, %s726, [#allocation28]
        $region76: #{forward.5} parent=11 // pred_fallthru
          _
        // Predicated region
        $region77: #{forward.5} parent=11 // pred_check
          %p729 = pneg %p422
        $region78: #{forward.5} parent=11 // pred_check_branch
          %731 = sbr.rel (%p729) target = $region80
        $region79: #{forward.5} parent=11 // pred_region
          %s733 = ssub.s32 32, 32
          %734 = vsyncadd [#allocation28], %s733
          %s736 = sshll.u32 [#allocation29], 4
          %s737 = int_to_ptr.vmem [resolvable:$true] %s736
          %739 = dma.hbm_to_vmem [thread:$0]  %s17, 32, %s737, [#allocation28]
        $region80: #{forward.5} parent=11 // pred_fallthru
          _
      $region12: #{forward.5} parent=5 // pred_fallthru
        _
      %p740 = scmp.lt.s32.totalorder %s39, 2
      // Predicated region
      $region81: #{forward.5} parent=5 // pred_check
        %p741 = pneg %p740
      $region82: #{forward.5} parent=5 // pred_check_branch
        %743 = sbr.rel (%p741) target = $region84
      $region83: #{forward.5} parent=5 // pred_region
        // Predicated region
        $region85: #{forward.5} parent=83 // pred_check
          %p744 = pneg %p59
        $region86: #{forward.5} parent=83 // pred_check_branch
          %746 = sbr.rel (%p744) target = $region88
        $region87: #{forward.5} parent=83 // pred_region
          %s747 = smul.u32 2, %s39
          %p748 = scmp.lt.s32.totalorder %s747, 3
          %s749 = scalar_select %p748, %s747, 3
          %s750 = scalar_lea.vmem %s0, %s749
          %s751 = smul.u32 2, %s39
        $region88: #{forward.5} parent=83 // pred_fallthru
          _
      $region84: #{forward.5} parent=5 // pred_fallthru
        _
      %p752 = scmp.le.s32.totalorder 1, %s39
      %p753 = scmp.lt.s32.totalorder %s39, 3
      %p754 = pnand %p752, %p753
      %p755 = pneg %p754
      // Predicated region
      $region89: #{forward.5} parent=5 // pred_check
        _
      $region90: #{forward.5} parent=5 // pred_check_branch
        %757 = sbr.rel (%p754) target = $region92
      $region91: #{forward.5} parent=5 // pred_region
        %s758 = ssub.s32 %s39, 1
        // Predicated region
        $region93: #{forward.5} parent=91 // pred_check
          %p759 = pneg %p86
        $region94: #{forward.5} parent=91 // pred_check_branch
          %761 = sbr.rel (%p759) target = $region96
        $region95: #{forward.5} parent=91 // pred_region
          %762 = dma.done [#allocation4], 256
        $region96: #{forward.5} parent=91 // pred_fallthru
          _
        // Predicated region
        $region97: #{forward.5} parent=91 // pred_check
          %p763 = pneg %p107
        $region98: #{forward.5} parent=91 // pred_check_branch
          %765 = sbr.rel (%p763) target = $region100
        $region99: #{forward.5} parent=91 // pred_region
          %766 = dma.done [#allocation7], 256
        $region100: #{forward.5} parent=91 // pred_fallthru
          _
        // Predicated region
        $region101: #{forward.5} parent=91 // pred_check
          %p767 = pneg %p128
        $region102: #{forward.5} parent=91 // pred_check_branch
          %769 = sbr.rel (%p767) target = $region104
        $region103: #{forward.5} parent=91 // pred_region
          %770 = dma.done [#allocation7], 16
        $region104: #{forward.5} parent=91 // pred_fallthru
          _
        // Predicated region
        $region105: #{forward.5} parent=91 // pred_check
          %p771 = pneg %p149
        $region106: #{forward.5} parent=91 // pred_check_branch
          %773 = sbr.rel (%p771) target = $region108
        $region107: #{forward.5} parent=91 // pred_region
          %774 = dma.done [#allocation10], 128
        $region108: #{forward.5} parent=91 // pred_fallthru
          _
        // Predicated region
        $region109: #{forward.5} parent=91 // pred_check
          %p775 = pneg %p170
        $region110: #{forward.5} parent=91 // pred_check_branch
          %777 = sbr.rel (%p775) target = $region112
        $region111: #{forward.5} parent=91 // pred_region
          %778 = dma.done [#allocation10], 256
        $region112: #{forward.5} parent=91 // pred_fallthru
          _
        // Predicated region
        $region113: #{forward.5} parent=91 // pred_check
          %p779 = pneg %p191
        $region114: #{forward.5} parent=91 // pred_check_branch
          %781 = sbr.rel (%p779) target = $region116
        $region115: #{forward.5} parent=91 // pred_region
          %782 = dma.done [#allocation13], 128
        $region116: #{forward.5} parent=91 // pred_fallthru
          _
        // Predicated region
        $region117: #{forward.5} parent=91 // pred_check
          %p783 = pneg %p212
        $region118: #{forward.5} parent=91 // pred_check_branch
          %785 = sbr.rel (%p783) target = $region120
        $region119: #{forward.5} parent=91 // pred_region
          %786 = dma.done [#allocation13], 256
        $region120: #{forward.5} parent=91 // pred_fallthru
          _
        // Predicated region
        $region121: #{forward.5} parent=91 // pred_check
          %p787 = pneg %p233
        $region122: #{forward.5} parent=91 // pred_check_branch
          %789 = sbr.rel (%p787) target = $region124
        $region123: #{forward.5} parent=91 // pred_region
          %790 = dma.done [#allocation16], 16
        $region124: #{forward.5} parent=91 // pred_fallthru
          _
        // Predicated region
        $region125: #{forward.5} parent=91 // pred_check
          %p791 = pneg %p254
        $region126: #{forward.5} parent=91 // pred_check_branch
          %793 = sbr.rel (%p791) target = $region128
        $region127: #{forward.5} parent=91 // pred_region
          %794 = dma.done [#allocation16], 1536
        $region128: #{forward.5} parent=91 // pred_fallthru
          _
        // Predicated region
        $region129: #{forward.5} parent=91 // pred_check
          %p795 = pneg %p275
        $region130: #{forward.5} parent=91 // pred_check_branch
          %797 = sbr.rel (%p795) target = $region132
        $region131: #{forward.5} parent=91 // pred_region
          %798 = dma.done [#allocation19], 768
        $region132: #{forward.5} parent=91 // pred_fallthru
          _
        // Predicated region
        $region133: #{forward.5} parent=91 // pred_check
          %p799 = pneg %p296
        $region134: #{forward.5} parent=91 // pred_check_branch
          %801 = sbr.rel (%p799) target = $region136
        $region135: #{forward.5} parent=91 // pred_region
          %802 = dma.done [#allocation19], 1536
        $region136: #{forward.5} parent=91 // pred_fallthru
          _
        // Predicated region
        $region137: #{forward.5} parent=91 // pred_check
          %p803 = pneg %p317
        $region138: #{forward.5} parent=91 // pred_check_branch
          %805 = sbr.rel (%p803) target = $region140
        $region139: #{forward.5} parent=91 // pred_region
          %806 = dma.done [#allocation22], 768
        $region140: #{forward.5} parent=91 // pred_fallthru
          _
        // Predicated region
        $region141: #{forward.5} parent=91 // pred_check
          %p807 = pneg %p338
        $region142: #{forward.5} parent=91 // pred_check_branch
          %809 = sbr.rel (%p807) target = $region144
        $region143: #{forward.5} parent=91 // pred_region
          %810 = dma.done [#allocation22], 96
        $region144: #{forward.5} parent=91 // pred_fallthru
          _
        // Predicated region
        $region145: #{forward.5} parent=91 // pred_check
          %p811 = pneg %p359
        $region146: #{forward.5} parent=91 // pred_check_branch
          %813 = sbr.rel (%p811) target = $region148
        $region147: #{forward.5} parent=91 // pred_region
          %814 = dma.done [#allocation25], 128
        $region148: #{forward.5} parent=91 // pred_fallthru
          _
        // Predicated region
        $region149: #{forward.5} parent=91 // pred_check
          %p815 = pneg %p380
        $region150: #{forward.5} parent=91 // pred_check_branch
          %817 = sbr.rel (%p815) target = $region152
        $region151: #{forward.5} parent=91 // pred_region
          %818 = dma.done [#allocation25], 16
        $region152: #{forward.5} parent=91 // pred_fallthru
          _
        // Predicated region
        $region153: #{forward.5} parent=91 // pred_check
          %p819 = pneg %p401
        $region154: #{forward.5} parent=91 // pred_check_branch
          %821 = sbr.rel (%p819) target = $region156
        $region155: #{forward.5} parent=91 // pred_region
          %822 = dma.done [#allocation28], 32
        $region156: #{forward.5} parent=91 // pred_fallthru
          _
        // Predicated region
        $region157: #{forward.5} parent=91 // pred_check
          %p823 = pneg %p422
        $region158: #{forward.5} parent=91 // pred_check_branch
          %825 = sbr.rel (%p823) target = $region160
        $region159: #{forward.5} parent=91 // pred_region
          %826 = dma.done [#allocation28], 32
        $region160: #{forward.5} parent=91 // pred_fallthru
          _
        %s827 = smul.u32 2, %s44
        %p828 = scmp.lt.s32.totalorder %s827, 3
        %s829 = scalar_select %p828, %s827, 3
        %s830 = scalar_lea.vmem %s0, %s829
        %p831 = pneg %p65
        %p832 = pneg %p62
        %p833 = pneg %p86
        %p834 = pneg %p83
        %p835 = pneg %p107
        %p836 = pneg %p104
        %p837 = pneg %p128
        %p838 = pneg %p125
        %p839 = pneg %p149
        %p840 = pneg %p146
        %p841 = pneg %p170
        %p842 = pneg %p167
        %p843 = pneg %p191
        %p844 = pneg %p188
        %p845 = pneg %p212
        %p846 = pneg %p209
        %p847 = pneg %p233
        %p848 = pneg %p230
        %p849 = pneg %p254
        %p850 = pneg %p251
        %p851 = pneg %p275
        %p852 = pneg %p272
        %p853 = pneg %p296
        %p854 = pneg %p293
        %p855 = pneg %p317
        %p856 = pneg %p314
        %p857 = pneg %p338
        %p858 = pneg %p335
        %p859 = pneg %p359
        %p860 = pneg %p356
        %p861 = pneg %p380
        %p862 = pneg %p377
        %p863 = pneg %p401
        %p864 = pneg %p398
        %p865 = pneg %p422
        %p866 = pneg %p419
        %p867 = pneg %p448
        %p868 = pneg %p445
        %s869 = smul.u32 2, %s44
        %p870 = scmp.lt.s32.totalorder %s869, 3
        %s871 = scalar_select %p870, %s869, 3
        %s872 = smul.addr %s871, 6
        %s873 = smul.addr %s872, 2
        %s874 = scalar_lea.vmem %s18, %s873
        %p875 = pneg %p474
        %p876 = pneg %p471
        %s877 = smul.u32 2, %s44
        %p878 = scmp.lt.s32.totalorder %s877, 3
        %s879 = scalar_select %p878, %s877, 3
        %s880 = smul.addr %s879, 2
        %s881 = scalar_lea.vmem %s19, %s880
        %p882 = pneg %p495
        %p883 = pneg %p492
        %p884 = pneg %p516
        %p885 = pneg %p513
        %s886 = smul.u32 2, %s44
        %p887 = scmp.lt.s32.totalorder %s886, 3
        %s888 = scalar_select %p887, %s886, 3
        %s889 = scalar_lea.vmem %s0, %s888
        %s890 = smul.u32 2, %s44
        %s891 = smul.u32 2, %s44
        %p892 = scmp.lt.s32.totalorder %s891, 3
        %s893 = scalar_select %p892, %s891, 3
        %s894 = smul.addr %s893, 6
        %s895 = smul.addr %s894, 2
        %s896 = scalar_lea.vmem %s18, %s895
        %s897 = smul.u32 2, %s44
        %s898 = smul.u32 2, %s44
        %p899 = scmp.lt.s32.totalorder %s898, 3
        %s900 = scalar_select %p899, %s898, 3
        %s901 = smul.addr %s900, 2
        %s902 = scalar_lea.vmem %s19, %s901
        %s903 = smul.u32 2, %s44
        %p905 = scmp.eq.s32.totalorder %s44, 0
        // Predicated region
        $region161: #{forward.5} parent=91 // pred_check
          %p906 = pneg %p905
        $region162: #{forward.5} parent=91 // pred_check_branch
          %908 = sbr.rel (%p906) target = $region164
        $region163: #{forward.5} parent=91 // pred_region
          %v909 = vld [vmem:[#allocation27] sm:$0x3]
          %vm910 = vcmask 254976
          %911 = vst.msk [vmem:[#allocation30] sm:$0x3] %vm910, %v909
          %v912 = vld [vmem:[#allocation29] sm:$0x3]
          %913 = vst.msk [vmem:[#allocation31] sm:$0x3] %vm910, %v912
          %v914 = vld [vmem:[#allocation26] sm:$0x1]
          %v916 = vlaneseq
          %v917 = vshrl.u32 %v916, 7
          %v918 = vsub.s32 0, %v917
          %v919 = vrot.slane %v914, %v918
          %vm921 = vcmask 123904
          %922 = vst.msk [vmem:[#allocation2] sm:$0x3] %vm921, %v919
        $region164: #{forward.5} parent=91 // pred_fallthru
          _
        %v923 = vld [vmem:[#allocation3] sm:$0xff]
        %v924 = vld [vmem:[#allocation3 + $0x8] sm:$0xff]
        %v925 = vlaneseq
        %v926 = vand.u32 %v925, 127
        %v927 = vld [vmem:[#allocation30] sm:$0x3]
        %v928 = vld [vmem:[#allocation31] sm:$0x3]
        %v929 = vld [vmem:[#allocation2] sm:$0x3]
        %v930 = vld [vmem:[%s889] sm:$0x1]
        %v931 = vpack.c.bf16 %v927, %v927
        %v932 = vld [vmem:[#allocation6] sm:$0xf]
        %v933 = vld [vmem:[#allocation6 + $0x4] sm:$0xf]
        %v934 = vld [vmem:[#allocation6 + $0x8] sm:$0xf]
        %v935 = vld [vmem:[#allocation6 + $0xc] sm:$0xf]
        %v936 = vld [vmem:[#allocation8] sm:$0x1]
        %v938 = vlaneseq
        %v939 = vshrl.u32 %v938, 7
        %v940 = vsub.s32 0, %v939
        %v941 = vrot.slane %v936, %v940
        %v947 = vunpack.c.l.b16 %v932
        %v948 = vunpack.c.l.b16 %v933
        %v949 = vunpack.c.l.b16 %v934
        %v950 = vunpack.c.l.b16 %v935
        %v951 = vpack.c.b16 %v948, %v947
        %v952 = vpack.c.b16 %v950, %v949
        %vm955 = vcmask 261120
        %v957 = vsel %vm955, %v931, 0
        %959 = vmatprep.subr.bf16.mxu0 0
        %960 = vmatpush1.bf16.msra.mxu0 0
        %961 = vmatprep.subr.bf16.mxu0 0
        %962 = vmatpush1.bf16.msra.mxu0 0
        %963 = vmatprep.subr.bf16.mxu0 0
        %964 = vmatpush1.bf16.msra.mxu0 0
        %965 = vmatprep.subr.bf16.mxu0 0
        %966 = vmatpush1.bf16.msra.mxu0 0
        %967 = vmatprep.subr.bf16.mxu0 0
        %968 = vmatpush1.bf16.msra.mxu0 0
        %969 = vmatprep.subr.bf16.mxu0 0
        %970 = vmatpush1.bf16.msra.mxu0 0
        %971 = vmatprep.subr.bf16.mxu0 0
        %972 = vmatpush1.bf16.msra.mxu0 %v952
        %973 = vmatprep.subr.bf16.mxu0 0
        %974 = vmatpush1.bf16.msra.mxu0 %v951
        %975 = vmatprep.subr.bf16.mxu0 0
        %976 = vmatpush2.bf16.msra.mxu0 0
        %977 = vmatprep.subr.bf16.mxu0 0
        %978 = vmatpush2.bf16.msra.mxu0 0
        %979 = vmatprep.subr.bf16.mxu0 0
        %980 = vmatpush2.bf16.msra.mxu0 0
        %981 = vmatprep.subr.bf16.mxu0 0
        %982 = vmatpush2.bf16.msra.mxu0 0
        %983 = vmatprep.subr.bf16.mxu0 0
        %984 = vmatpush2.bf16.msra.mxu0 0
        %985 = vmatprep.subr.bf16.mxu0 0
        %986 = vmatpush2.bf16.msra.mxu0 0
        %987 = vmatprep.subr.bf16.mxu0 0
        %988 = vmatpush2.bf16.msra.mxu0 0
        %989 = vmatprep.subr.bf16.mxu0 0
        %990 = vmatpush2.bf16.msra.mxu0 0
        %991 = vmatprep.mubr.bf16.mxu0 0
        %992 = vmatmul.mubr.bf16.gmra.mxu0 %v957
        %v993 = vpop.f32.mrf.mxu0
        %v994 = vadd.f32 %v941, %v993
        %v995 = vpop.f32.mrf.mxu0
        %v996 = vpop.f32.mrf.mxu0
        %v997 = vpop.f32.mrf.mxu0
        %998 = vdwg.mxu0
        %v1001 = vunpack.c.l.s4 1966171168
        %v1002 = vunpack.c.0.s8 %v1001
        %v1003 = vlaneseq
        %v1004 = vshrl.u32 %v1003, 7
        %v1005 = vsub.s32 %v1002, %v1004
        %v1006 = vrot.slane %v994, %v1005
        %v1007 = vcombine.high %v1006, %v1006
        %v1009 = vunpack.c.l.s4 1966171168
        %v1010 = vunpack.c.0.s8 %v1009
        %v1011 = vlaneseq
        %v1012 = vshrl.u32 %v1011, 7
        %v1013 = vsub.s32 %v1010, %v1012
        %v1014 = vrot.slane %v1006, %v1013
        %v1016 = vunpack.c.l.s4 1966171168
        %v1017 = vunpack.c.0.s8 %v1016
        %v1018 = vlaneseq
        %v1019 = vshrl.u32 %v1018, 7
        %v1020 = vsub.s32 %v1017, %v1019
        %v1021 = vrot.slane %v1007, %v1020
        %v1022 = vlaneseq
        %v1023 = vshrl.u32 %v1022, 7
        %v1024 = vsub.s32 0, %v1023
        %v1025 = vrot.slane %v1014, %v1024
        %v1026 = vlaneseq
        %v1027 = vshrl.u32 %v1026, 7
        %v1028 = vsub.s32 0, %v1027
        %v1029 = vrot.slane %v1021, %v1028
        %v1032 = vmul.f32 %v923, %v1025
        %v1033 = vmul.f32 %v924, %v1029
        %v1034 = vsel %vm955, %v1032, 0.0
        %1035 = vadd.xlane.f32.xlu0 %v1034
        %v1036 = vpop.xlane.xlu0 %1035
        %v1037 = vsel %vm955, %v1033, 0.0
        %1038 = vadd.xlane.f32.xlu0 %v1037
        %v1039 = vpop.xlane.xlu0 %1038
        %v1042 = vlaneseq
        %v1043 = vshrl.u32 %v1042, 7
        %v1044 = vsub.s32 %v926, %v1043
        %v1045 = vrot.slane %v1036, %v1044
        %v1046 = vlaneseq
        %v1047 = vshrl.u32 %v1046, 7
        %v1048 = vsub.s32 %v926, %v1047
        %v1049 = vrot.slane %v1039, %v1048
        %vm1050 = vcmask 1041409
        %v1051 = vsel %vm1050, %v1049, %v1045
        %vm1053 = vcmask 58368
        %v1054 = vsel %vm1053, %v1051, -inf
        %1055 = vmax.xlane.f32.xlu0 %v1054
        %v1056 = vpop.xlane.xlu0 %1055
        %v1058 = vlaneseq
        %v1059 = vshrl.u32 %v1058, 7
        %v1060 = vsub.s32 0, %v1059
        %v1061 = vrot.slane %v1056, %v1060
        %v1062 = vlaneseq
        %v1063 = vshrl.u32 %v1062, 7
        %v1064 = vsub.s32 1, %v1063
        %v1065 = vrot.slane %v1056, %v1064
        %v1068 = vsub.f32 %v1036, %v1061
        %v1069 = vsub.f32 %v1039, %v1065
        %v1070 = vmul.f32 %v1068, 1.442695
        %v1071 = vpow.pop %v1070
        %v1072 = vmul.f32 %v1069, 1.442695
        %v1073 = vpow.pop %v1072
        %1076 = vset.pattern.permute.xlu0 0
        %1077 = vperm.xlu0 %1076, %v1071
        %v1078 = vpop.permute.xlu0 %1077
        %1079 = vset.pattern.permute.xlu0 0
        %1080 = vperm.xlu0 %1079, %v1073
        %v1081 = vpop.permute.xlu0 %1080
        %v1082 = vlaneseq
        %v1083 = vshrl.u32 %v1082, 7
        %v1084 = vsub.s32 %v926, %v1083
        %v1085 = vrot.slane %v1078, %v1084
        %v1086 = vlaneseq
        %v1087 = vshrl.u32 %v1086, 7
        %v1088 = vsub.s32 %v926, %v1087
        %v1089 = vrot.slane %v1081, %v1088
        %v1090 = vsel %vm1050, %v1089, %v1085
        %v1092 = vsel %vm1053, %v1090, 0.0
        %1093 = vadd.xlane.f32.xlu0 %v1092
        %v1094 = vpop.xlane.xlu0 %1093
        %v1095 = vrcp.pop %v1094
        %v1097 = vlaneseq
        %v1098 = vshrl.u32 %v1097, 7
        %v1099 = vsub.s32 0, %v1098
        %v1100 = vrot.slane %v1095, %v1099
        %v1101 = vlaneseq
        %v1102 = vshrl.u32 %v1101, 7
        %v1103 = vsub.s32 1, %v1102
        %v1104 = vrot.slane %v1095, %v1103
        %v1107 = vmul.f32 %v1071, %v1100
        %v1108 = vmul.f32 %v1073, %v1104
        %1110 = vset.pattern.permute.xlu0 0
        %1111 = vperm.xlu0 %1110, %v1107
        %v1112 = vpop.permute.xlu0 %1111
        %1115 = vset.pattern.permute.xlu0 0
        %1116 = vperm.xlu0 %1115, %v1108
        %v1117 = vpop.permute.xlu0 %1116
        %v1119 = vmul.f32 %v923, %v1112
        %v1120 = vmul.f32 %v924, %v1117
        %v1121 = vsel %vm955, %v1119, 0.0
        %v1122 = vrot.slane %v1121, 4
        %v1123 = vadd.f32 %v1121, %v1122
        %v1124 = vrot.slane %v1123, 2
        %v1125 = vadd.f32 %v1123, %v1124
        %v1126 = vrot.slane %v1125, 1
        %v1127 = vadd.f32 %v1125, %v1126
        %v1128 = vsel %vm955, %v1120, 0.0
        %v1129 = vrot.slane %v1128, 4
        %v1130 = vadd.f32 %v1128, %v1129
        %v1131 = vrot.slane %v1130, 2
        %v1132 = vadd.f32 %v1130, %v1131
        %v1133 = vrot.slane %v1132, 1
        %v1134 = vadd.f32 %v1132, %v1133
        %v1135 = vpack.c.bf16 %v1127, %v1127
        %v1136 = vpack.c.bf16 %v1134, %v1134
        %v1137 = vpack.c.bf16 %v929, %v929
        %v1138 = vld [vmem:[#allocation9] sm:$0xf]
        %v1139 = vld [vmem:[#allocation9 + $0x4] sm:$0xf]
        %v1140 = vld [vmem:[#allocation11] sm:$0xf]
        %v1141 = vld [vmem:[#allocation11 + $0x4] sm:$0xf]
        %v1142 = vld [vmem:[#allocation11 + $0x8] sm:$0xf]
        %v1143 = vld [vmem:[#allocation11 + $0xc] sm:$0xf]
        %v1146 = vunpack.c.l.b16 %v1135
        %v1147 = vunpack.c.l.b16 %v1136
        %v1148 = vsel %vm1050, %v1147, %v1146
        %v1149 = vpack.c.b16 %v1148, %v1148
        %v1154 = vunpack.c.l.b16 %v1140
        %v1155 = vunpack.c.l.b16 %v1141
        %v1156 = vunpack.c.l.b16 %v1142
        %v1157 = vunpack.c.l.b16 %v1143
        %v1158 = vpack.c.b16 %v1155, %v1154
        %v1159 = vpack.c.b16 %v1157, %v1156
        %v1163 = vsel %vm955, %v1149, 0
        %1165 = vmatprep.subr.bf16.mxu0 0
        %1166 = vmatpush1.bf16.msra.mxu0 0
        %1167 = vmatprep.subr.bf16.mxu0 0
        %1168 = vmatpush1.bf16.msra.mxu0 0
        %1169 = vmatprep.subr.bf16.mxu0 0
        %1170 = vmatpush1.bf16.msra.mxu0 0
        %1171 = vmatprep.subr.bf16.mxu0 0
        %1172 = vmatpush1.bf16.msra.mxu0 0
        %1173 = vmatprep.subr.bf16.mxu0 0
        %1174 = vmatpush1.bf16.msra.mxu0 0
        %1175 = vmatprep.subr.bf16.mxu0 0
        %1176 = vmatpush1.bf16.msra.mxu0 0
        %1177 = vmatprep.subr.bf16.mxu0 0
        %1178 = vmatpush1.bf16.msra.mxu0 %v1159
        %1179 = vmatprep.subr.bf16.mxu0 0
        %1180 = vmatpush1.bf16.msra.mxu0 %v1158
        %1181 = vmatprep.subr.bf16.mxu0 0
        %1182 = vmatpush2.bf16.msra.mxu0 0
        %1183 = vmatprep.subr.bf16.mxu0 0
        %1184 = vmatpush2.bf16.msra.mxu0 0
        %1185 = vmatprep.subr.bf16.mxu0 0
        %1186 = vmatpush2.bf16.msra.mxu0 0
        %1187 = vmatprep.subr.bf16.mxu0 0
        %1188 = vmatpush2.bf16.msra.mxu0 0
        %1189 = vmatprep.subr.bf16.mxu0 0
        %1190 = vmatpush2.bf16.msra.mxu0 0
        %1191 = vmatprep.subr.bf16.mxu0 0
        %1192 = vmatpush2.bf16.msra.mxu0 0
        %1193 = vmatprep.subr.bf16.mxu0 0
        %1194 = vmatpush2.bf16.msra.mxu0 0
        %1195 = vmatprep.subr.bf16.mxu0 0
        %1196 = vmatpush2.bf16.msra.mxu0 0
        %1197 = vmatprep.mubr.bf16.mxu0 0
        %1198 = vmatmul.mubr.bf16.gmra.mxu0 %v1163
        %v1199 = vpop.f32.mrf.mxu0
        %v1200 = vadd.f32 0.0, %v1199
        %v1201 = vpop.f32.mrf.mxu0
        %v1202 = vpop.f32.mrf.mxu0
        %v1203 = vpop.f32.mrf.mxu0
        %1204 = vdwg.mxu0
        %v1207 = vunpack.c.l.b16 %v1138
        %v1208 = vunpack.c.l.b16 %v1139
        %v1209 = vpack.c.b16 %v1208, %v1207
        %vm1211 = vcmask 130048
        %v1213 = vsel %vm1211, %v930, 0
        %1215 = vmatprep.subr.bf16.mxu0 0
        %1216 = vmatpush1.bf16.msra.mxu0 0
        %1217 = vmatprep.subr.bf16.mxu0 0
        %1218 = vmatpush1.bf16.msra.mxu0 0
        %1219 = vmatprep.subr.bf16.mxu0 0
        %1220 = vmatpush1.bf16.msra.mxu0 0
        %1221 = vmatprep.subr.bf16.mxu0 0
        %1222 = vmatpush1.bf16.msra.mxu0 0
        %1223 = vmatprep.subr.bf16.mxu0 0
        %1224 = vmatpush1.bf16.msra.mxu0 0
        %1225 = vmatprep.subr.bf16.mxu0 0
        %1226 = vmatpush1.bf16.msra.mxu0 0
        %1227 = vmatprep.subr.bf16.mxu0 0
        %1228 = vmatpush1.bf16.msra.mxu0 0
        %1229 = vmatprep.subr.bf16.mxu0 0
        %1230 = vmatpush1.bf16.msra.mxu0 %v1209
        %1231 = vmatprep.subr.bf16.mxu0 0
        %1232 = vmatpush2.bf16.msra.mxu0 0
        %1233 = vmatprep.subr.bf16.mxu0 0
        %1234 = vmatpush2.bf16.msra.mxu0 0
        %1235 = vmatprep.subr.bf16.mxu0 0
        %1236 = vmatpush2.bf16.msra.mxu0 0
        %1237 = vmatprep.subr.bf16.mxu0 0
        %1238 = vmatpush2.bf16.msra.mxu0 0
        %1239 = vmatprep.subr.bf16.mxu0 0
        %1240 = vmatpush2.bf16.msra.mxu0 0
        %1241 = vmatprep.subr.bf16.mxu0 0
        %1242 = vmatpush2.bf16.msra.mxu0 0
        %1243 = vmatprep.subr.bf16.mxu0 0
        %1244 = vmatpush2.bf16.msra.mxu0 0
        %1245 = vmatprep.subr.bf16.mxu0 0
        %1246 = vmatpush2.bf16.msra.mxu0 0
        %1247 = vmatprep.mubr.bf16.mxu0 0
        %1248 = vmatmul.mubr.bf16.gmra.mxu0 %v1213
        %v1249 = vpop.f32.mrf.mxu0
        %v1250 = vadd.f32 %v1200, %v1249
        %v1251 = vpop.f32.mrf.mxu0
        %v1252 = vpop.f32.mrf.mxu0
        %v1253 = vpop.f32.mrf.mxu0
        %1254 = vdwg.mxu0
        %v1255 = vld [vmem:[#allocation12] sm:$0xf]
        %v1256 = vld [vmem:[#allocation12 + $0x4] sm:$0xf]
        %v1259 = vunpack.c.l.b16 %v1255
        %v1260 = vunpack.c.l.b16 %v1256
        %v1261 = vpack.c.b16 %v1260, %v1259
        %v1264 = vsel %vm1211, %v1137, 0
        %1266 = vmatprep.subr.bf16.mxu0 0
        %1267 = vmatpush1.bf16.msra.mxu0 0
        %1268 = vmatprep.subr.bf16.mxu0 0
        %1269 = vmatpush1.bf16.msra.mxu0 0
        %1270 = vmatprep.subr.bf16.mxu0 0
        %1271 = vmatpush1.bf16.msra.mxu0 0
        %1272 = vmatprep.subr.bf16.mxu0 0
        %1273 = vmatpush1.bf16.msra.mxu0 0
        %1274 = vmatprep.subr.bf16.mxu0 0
        %1275 = vmatpush1.bf16.msra.mxu0 0
        %1276 = vmatprep.subr.bf16.mxu0 0
        %1277 = vmatpush1.bf16.msra.mxu0 0
        %1278 = vmatprep.subr.bf16.mxu0 0
        %1279 = vmatpush1.bf16.msra.mxu0 0
        %1280 = vmatprep.subr.bf16.mxu0 0
        %1281 = vmatpush1.bf16.msra.mxu0 %v1261
        %1282 = vmatprep.subr.bf16.mxu0 0
        %1283 = vmatpush2.bf16.msra.mxu0 0
        %1284 = vmatprep.subr.bf16.mxu0 0
        %1285 = vmatpush2.bf16.msra.mxu0 0
        %1286 = vmatprep.subr.bf16.mxu0 0
        %1287 = vmatpush2.bf16.msra.mxu0 0
        %1288 = vmatprep.subr.bf16.mxu0 0
        %1289 = vmatpush2.bf16.msra.mxu0 0
        %1290 = vmatprep.subr.bf16.mxu0 0
        %1291 = vmatpush2.bf16.msra.mxu0 0
        %1292 = vmatprep.subr.bf16.mxu0 0
        %1293 = vmatpush2.bf16.msra.mxu0 0
        %1294 = vmatprep.subr.bf16.mxu0 0
        %1295 = vmatpush2.bf16.msra.mxu0 0
        %1296 = vmatprep.subr.bf16.mxu0 0
        %1297 = vmatpush2.bf16.msra.mxu0 0
        %1298 = vmatprep.mubr.bf16.mxu0 0
        %1299 = vmatmul.mubr.bf16.gmra.mxu0 %v1264
        %v1300 = vpop.f32.mrf.mxu0
        %v1301 = vadd.f32 0.0, %v1300
        %v1302 = vpop.f32.mrf.mxu0
        %v1303 = vpop.f32.mrf.mxu0
        %v1304 = vpop.f32.mrf.mxu0
        %1305 = vdwg.mxu0
        %v1306 = vadd.f32 %v1250, %v1301
        %v1307 = vld [vmem:[#allocation14] sm:$0xf]
        %v1308 = vld [vmem:[#allocation14 + $0x4] sm:$0xf]
        %v1309 = vld [vmem:[#allocation14 + $0x8] sm:$0xf]
        %v1310 = vld [vmem:[#allocation14 + $0xc] sm:$0xf]
        %v1315 = vunpack.c.l.b16 %v1307
        %v1316 = vunpack.c.l.b16 %v1308
        %v1317 = vunpack.c.l.b16 %v1309
        %v1318 = vunpack.c.l.b16 %v1310
        %v1319 = vpack.c.b16 %v1316, %v1315
        %v1320 = vpack.c.b16 %v1318, %v1317
        %1323 = vmatprep.subr.bf16.mxu0 0
        %1324 = vmatpush1.bf16.msra.mxu0 0
        %1325 = vmatprep.subr.bf16.mxu0 0
        %1326 = vmatpush1.bf16.msra.mxu0 0
        %1327 = vmatprep.subr.bf16.mxu0 0
        %1328 = vmatpush1.bf16.msra.mxu0 0
        %1329 = vmatprep.subr.bf16.mxu0 0
        %1330 = vmatpush1.bf16.msra.mxu0 0
        %1331 = vmatprep.subr.bf16.mxu0 0
        %1332 = vmatpush1.bf16.msra.mxu0 0
        %1333 = vmatprep.subr.bf16.mxu0 0
        %1334 = vmatpush1.bf16.msra.mxu0 0
        %1335 = vmatprep.subr.bf16.mxu0 0
        %1336 = vmatpush1.bf16.msra.mxu0 %v1320
        %1337 = vmatprep.subr.bf16.mxu0 0
        %1338 = vmatpush1.bf16.msra.mxu0 %v1319
        %1339 = vmatprep.subr.bf16.mxu0 0
        %1340 = vmatpush2.bf16.msra.mxu0 0
        %1341 = vmatprep.subr.bf16.mxu0 0
        %1342 = vmatpush2.bf16.msra.mxu0 0
        %1343 = vmatprep.subr.bf16.mxu0 0
        %1344 = vmatpush2.bf16.msra.mxu0 0
        %1345 = vmatprep.subr.bf16.mxu0 0
        %1346 = vmatpush2.bf16.msra.mxu0 0
        %1347 = vmatprep.subr.bf16.mxu0 0
        %1348 = vmatpush2.bf16.msra.mxu0 0
        %1349 = vmatprep.subr.bf16.mxu0 0
        %1350 = vmatpush2.bf16.msra.mxu0 0
        %1351 = vmatprep.subr.bf16.mxu0 0
        %1352 = vmatpush2.bf16.msra.mxu0 0
        %1353 = vmatprep.subr.bf16.mxu0 0
        %1354 = vmatpush2.bf16.msra.mxu0 0
        %1355 = vmatprep.mubr.bf16.mxu0 0
        %1356 = vmatmul.mubr.bf16.gmra.mxu0 %v957
        %v1357 = vpop.f32.mrf.mxu0
        %v1358 = vadd.f32 0.0, %v1357
        %v1359 = vpop.f32.mrf.mxu0
        %v1360 = vpop.f32.mrf.mxu0
        %v1361 = vpop.f32.mrf.mxu0
        %1362 = vdwg.mxu0
        %v1363 = vadd.f32 %v1306, %v1358
        %v1364 = vld [vmem:[#allocation15] sm:$0x1]
        %v1366 = vlaneseq
        %v1367 = vshrl.u32 %v1366, 7
        %v1368 = vsub.s32 0, %v1367
        %v1369 = vrot.slane %v1364, %v1368
        %v1371 = vadd.f32 %v1363, %v1369
        %v1372 = vxor.u32 %v1371, 2147483648
        %v1373 = vmul.f32 %v1372, 1.442695
        %v1374 = vpow.pop %v1373
        %v1375 = vadd.f32 %v1374, 1.0
        %v1376 = vrcp.pop %v1375
        %v1377 = vmul.f32 1.0, %v1376
        %v1378 = vtanh.pop %v1371
        %1380 = vrot.lane.b32.xlu0 %v928, 32
        %v1381 = vpop.permute.xlu0 %1380
        %v1383 = vmul.f32 %v1377, %v1381
        %1385 = vrot.lane.b32.xlu0 %v1378, 64
        %v1386 = vpop.permute.xlu0 %1385
        %v1388 = vmul.f32 %v1377, %v1386
        %1390 = vrot.lane.b32.xlu0 %v1388, 32
        %v1391 = vpop.permute.xlu0 %1390
        %v1393 = vadd.f32 %v1383, %v1391
        %v1394 = vtanh.pop %v1393
        %1396 = vrot.lane.b32.xlu0 %v1394, 64
        %v1397 = vpop.permute.xlu0 %1396
        %v1399 = vmul.f32 %v1377, %v1397
        %v1400 = vpack.c.bf16 %v1399, %v1399
        %v1401 = vld [vmem:[#allocation17] sm:$0xff]
        %v1402 = vld [vmem:[#allocation17 + $0x8] sm:$0xff]
        %v1403 = vld [vmem:[#allocation17 + $0x10] sm:$0xff]
        %v1404 = vld [vmem:[#allocation17 + $0x18] sm:$0xff]
        %v1405 = vld [vmem:[#allocation17 + $0x20] sm:$0xff]
        %v1406 = vld [vmem:[#allocation17 + $0x28] sm:$0xff]
        %v1407 = vld [vmem:[#allocation17 + $0x30] sm:$0xff]
        %v1408 = vld [vmem:[#allocation17 + $0x38] sm:$0xff]
        %v1409 = vld [vmem:[#allocation17 + $0x40] sm:$0xff]
        %v1410 = vld [vmem:[#allocation17 + $0x48] sm:$0xff]
        %v1411 = vld [vmem:[#allocation17 + $0x50] sm:$0xff]
        %v1412 = vld [vmem:[#allocation17 + $0x58] sm:$0xff]
        %v1413 = vld [vmem:[#allocation18] sm:$0xff]
        %v1414 = vld [vmem:[#allocation18 + $0x8] sm:$0xff]
        %v1415 = vld [vmem:[#allocation18 + $0x10] sm:$0xff]
        %v1416 = vld [vmem:[#allocation18 + $0x18] sm:$0xff]
        %v1417 = vld [vmem:[#allocation18 + $0x20] sm:$0xff]
        %v1418 = vld [vmem:[#allocation18 + $0x28] sm:$0xff]
        %v1425 = vunpack.c.l.b16 %v1413
        %v1426 = vunpack.c.h.b16 %v1413
        %v1427 = vunpack.c.l.b16 %v1414
        %v1428 = vunpack.c.h.b16 %v1414
        %v1429 = vunpack.c.l.b16 %v1415
        %v1430 = vunpack.c.h.b16 %v1415
        %v1431 = vunpack.c.l.b16 %v1416
        %v1432 = vunpack.c.h.b16 %v1416
        %v1433 = vunpack.c.l.b16 %v1417
        %v1434 = vunpack.c.h.b16 %v1417
        %v1435 = vunpack.c.l.b16 %v1418
        %v1436 = vunpack.c.h.b16 %v1418
        %v1437 = vpack.c.b16 %v1431, %v1425
        %v1438 = vpack.c.b16 %v1432, %v1426
        %v1439 = vpack.c.b16 %v1433, %v1427
        %v1440 = vpack.c.b16 %v1434, %v1428
        %v1441 = vpack.c.b16 %v1435, %v1429
        %v1442 = vpack.c.b16 %v1436, %v1430
        %1449 = vmatprep.subr.bf16.mxu0 0
        %1450 = vmatpush1.bf16.msra.mxu0 0
        %1451 = vmatprep.subr.bf16.mxu0 0
        %1452 = vmatpush1.bf16.msra.mxu0 0
        %1453 = vmatprep.subr.bf16.mxu0 0
        %1454 = vmatpush1.bf16.msra.mxu0 0
        %1455 = vmatprep.subr.bf16.mxu0 0
        %1456 = vmatpush1.bf16.msra.mxu0 0
        %1457 = vmatprep.subr.bf16.mxu0 0
        %1458 = vmatpush1.bf16.msra.mxu0 0
        %1459 = vmatprep.subr.bf16.mxu0 0
        %1460 = vmatpush1.bf16.msra.mxu0 0
        %1461 = vmatprep.subr.bf16.mxu0 0
        %1462 = vmatpush1.bf16.msra.mxu0 0
        %1463 = vmatprep.subr.bf16.mxu0 %v1438
        %1464 = vmatpush1.bf16.msra.mxu0 %v1437
        %1465 = vmatprep.subr.bf16.mxu0 0
        %1466 = vmatpush2.bf16.msra.mxu0 0
        %1467 = vmatprep.subr.bf16.mxu0 0
        %1468 = vmatpush2.bf16.msra.mxu0 0
        %1469 = vmatprep.subr.bf16.mxu0 0
        %1470 = vmatpush2.bf16.msra.mxu0 0
        %1471 = vmatprep.subr.bf16.mxu0 0
        %1472 = vmatpush2.bf16.msra.mxu0 0
        %1473 = vmatprep.subr.bf16.mxu0 0
        %1474 = vmatpush2.bf16.msra.mxu0 0
        %1475 = vmatprep.subr.bf16.mxu0 0
        %1476 = vmatpush2.bf16.msra.mxu0 0
        %1477 = vmatprep.subr.bf16.mxu0 0
        %1478 = vmatpush2.bf16.msra.mxu0 0
        %1479 = vmatprep.subr.bf16.mxu0 0
        %1480 = vmatpush2.bf16.msra.mxu0 0
        %1481 = vmatprep.mubr.bf16.mxu0 0
        %1482 = vmatmul.mubr.bf16.gmra.mxu0 %v1213
        %v1483 = vpop.f32.mrf.mxu0
        %v1484 = vadd.f32 0.0, %v1483
        %v1485 = vpop.f32.mrf.mxu0
        %v1486 = vadd.f32 0.0, %v1485
        %v1487 = vpop.f32.mrf.mxu0
        %v1488 = vpop.f32.mrf.mxu0
        %1489 = vdwg.mxu0
        %1490 = vmatprep.subr.bf16.mxu0 0
        %1491 = vmatpush1.bf16.msra.mxu0 0
        %1492 = vmatprep.subr.bf16.mxu0 0
        %1493 = vmatpush1.bf16.msra.mxu0 0
        %1494 = vmatprep.subr.bf16.mxu0 0
        %1495 = vmatpush1.bf16.msra.mxu0 0
        %1496 = vmatprep.subr.bf16.mxu0 0
        %1497 = vmatpush1.bf16.msra.mxu0 0
        %1498 = vmatprep.subr.bf16.mxu0 0
        %1499 = vmatpush1.bf16.msra.mxu0 0
        %1500 = vmatprep.subr.bf16.mxu0 0
        %1501 = vmatpush1.bf16.msra.mxu0 0
        %1502 = vmatprep.subr.bf16.mxu0 0
        %1503 = vmatpush1.bf16.msra.mxu0 0
        %1504 = vmatprep.subr.bf16.mxu0 %v1440
        %1505 = vmatpush1.bf16.msra.mxu0 %v1439
        %1506 = vmatprep.subr.bf16.mxu0 0
        %1507 = vmatpush2.bf16.msra.mxu0 0
        %1508 = vmatprep.subr.bf16.mxu0 0
        %1509 = vmatpush2.bf16.msra.mxu0 0
        %1510 = vmatprep.subr.bf16.mxu0 0
        %1511 = vmatpush2.bf16.msra.mxu0 0
        %1512 = vmatprep.subr.bf16.mxu0 0
        %1513 = vmatpush2.bf16.msra.mxu0 0
        %1514 = vmatprep.subr.bf16.mxu0 0
        %1515 = vmatpush2.bf16.msra.mxu0 0
        %1516 = vmatprep.subr.bf16.mxu0 0
        %1517 = vmatpush2.bf16.msra.mxu0 0
        %1518 = vmatprep.subr.bf16.mxu0 0
        %1519 = vmatpush2.bf16.msra.mxu0 0
        %1520 = vmatprep.subr.bf16.mxu0 0
        %1521 = vmatpush2.bf16.msra.mxu0 0
        %1522 = vmatprep.mubr.bf16.mxu0 0
        %1523 = vmatmul.mubr.bf16.gmra.mxu0 %v1213
        %v1524 = vpop.f32.mrf.mxu0
        %v1525 = vadd.f32 0.0, %v1524
        %v1526 = vpop.f32.mrf.mxu0
        %v1527 = vadd.f32 0.0, %v1526
        %v1528 = vpop.f32.mrf.mxu0
        %v1529 = vpop.f32.mrf.mxu0
        %1530 = vdwg.mxu0
        %1531 = vmatprep.subr.bf16.mxu0 0
        %1532 = vmatpush1.bf16.msra.mxu0 0
        %1533 = vmatprep.subr.bf16.mxu0 0
        %1534 = vmatpush1.bf16.msra.mxu0 0
        %1535 = vmatprep.subr.bf16.mxu0 0
        %1536 = vmatpush1.bf16.msra.mxu0 0
        %1537 = vmatprep.subr.bf16.mxu0 0
        %1538 = vmatpush1.bf16.msra.mxu0 0
        %1539 = vmatprep.subr.bf16.mxu0 0
        %1540 = vmatpush1.bf16.msra.mxu0 0
        %1541 = vmatprep.subr.bf16.mxu0 0
        %1542 = vmatpush1.bf16.msra.mxu0 0
        %1543 = vmatprep.subr.bf16.mxu0 0
        %1544 = vmatpush1.bf16.msra.mxu0 0
        %1545 = vmatprep.subr.bf16.mxu0 %v1442
        %1546 = vmatpush1.bf16.msra.mxu0 %v1441
        %1547 = vmatprep.subr.bf16.mxu0 0
        %1548 = vmatpush2.bf16.msra.mxu0 0
        %1549 = vmatprep.subr.bf16.mxu0 0
        %1550 = vmatpush2.bf16.msra.mxu0 0
        %1551 = vmatprep.subr.bf16.mxu0 0
        %1552 = vmatpush2.bf16.msra.mxu0 0
        %1553 = vmatprep.subr.bf16.mxu0 0
        %1554 = vmatpush2.bf16.msra.mxu0 0
        %1555 = vmatprep.subr.bf16.mxu0 0
        %1556 = vmatpush2.bf16.msra.mxu0 0
        %1557 = vmatprep.subr.bf16.mxu0 0
        %1558 = vmatpush2.bf16.msra.mxu0 0
        %1559 = vmatprep.subr.bf16.mxu0 0
        %1560 = vmatpush2.bf16.msra.mxu0 0
        %1561 = vmatprep.subr.bf16.mxu0 0
        %1562 = vmatpush2.bf16.msra.mxu0 0
        %1563 = vmatprep.mubr.bf16.mxu0 0
        %1564 = vmatmul.mubr.bf16.gmra.mxu0 %v1213
        %v1565 = vpop.f32.mrf.mxu0
        %v1566 = vadd.f32 0.0, %v1565
        %v1567 = vpop.f32.mrf.mxu0
        %v1568 = vadd.f32 0.0, %v1567
        %v1569 = vpop.f32.mrf.mxu0
        %v1570 = vpop.f32.mrf.mxu0
        %1571 = vdwg.mxu0
        %1573 = vrot.lane.b32.xlu0 %v1400, 32
        %v1574 = vpop.permute.xlu0 %1573
        %v1587 = vunpack.c.l.b16 %v1401
        %v1588 = vunpack.c.h.b16 %v1401
        %v1589 = vunpack.c.l.b16 %v1402
        %v1590 = vunpack.c.h.b16 %v1402
        %v1591 = vunpack.c.l.b16 %v1403
        %v1592 = vunpack.c.h.b16 %v1403
        %v1593 = vunpack.c.l.b16 %v1404
        %v1594 = vunpack.c.h.b16 %v1404
        %v1595 = vunpack.c.l.b16 %v1405
        %v1596 = vunpack.c.h.b16 %v1405
        %v1597 = vunpack.c.l.b16 %v1406
        %v1598 = vunpack.c.h.b16 %v1406
        %v1599 = vunpack.c.l.b16 %v1407
        %v1600 = vunpack.c.h.b16 %v1407
        %v1601 = vunpack.c.l.b16 %v1408
        %v1602 = vunpack.c.h.b16 %v1408
        %v1603 = vunpack.c.l.b16 %v1409
        %v1604 = vunpack.c.h.b16 %v1409
        %v1605 = vunpack.c.l.b16 %v1410
        %v1606 = vunpack.c.h.b16 %v1410
        %v1607 = vunpack.c.l.b16 %v1411
        %v1608 = vunpack.c.h.b16 %v1411
        %v1609 = vunpack.c.l.b16 %v1412
        %v1610 = vunpack.c.h.b16 %v1412
        %v1611 = vpack.c.b16 %v1593, %v1587
        %v1612 = vpack.c.b16 %v1594, %v1588
        %v1613 = vpack.c.b16 %v1595, %v1589
        %v1614 = vpack.c.b16 %v1596, %v1590
        %v1615 = vpack.c.b16 %v1597, %v1591
        %v1616 = vpack.c.b16 %v1598, %v1592
        %v1617 = vpack.c.b16 %v1605, %v1599
        %v1618 = vpack.c.b16 %v1606, %v1600
        %v1619 = vpack.c.b16 %v1607, %v1601
        %v1620 = vpack.c.b16 %v1608, %v1602
        %v1621 = vpack.c.b16 %v1609, %v1603
        %v1622 = vpack.c.b16 %v1610, %v1604
        %v1636 = vsel %vm955, %v1574, 0
        %1638 = vmatprep.subr.bf16.mxu0 0
        %1639 = vmatpush1.bf16.msra.mxu0 0
        %1640 = vmatprep.subr.bf16.mxu0 0
        %1641 = vmatpush1.bf16.msra.mxu0 0
        %1642 = vmatprep.subr.bf16.mxu0 0
        %1643 = vmatpush1.bf16.msra.mxu0 0
        %1644 = vmatprep.subr.bf16.mxu0 0
        %1645 = vmatpush1.bf16.msra.mxu0 0
        %1646 = vmatprep.subr.bf16.mxu0 0
        %1647 = vmatpush1.bf16.msra.mxu0 0
        %1648 = vmatprep.subr.bf16.mxu0 0
        %1649 = vmatpush1.bf16.msra.mxu0 0
        %1650 = vmatprep.subr.bf16.mxu0 %v1618
        %1651 = vmatpush1.bf16.msra.mxu0 %v1617
        %1652 = vmatprep.subr.bf16.mxu0 %v1612
        %1653 = vmatpush1.bf16.msra.mxu0 %v1611
        %1654 = vmatprep.subr.bf16.mxu0 0
        %1655 = vmatpush2.bf16.msra.mxu0 0
        %1656 = vmatprep.subr.bf16.mxu0 0
        %1657 = vmatpush2.bf16.msra.mxu0 0
        %1658 = vmatprep.subr.bf16.mxu0 0
        %1659 = vmatpush2.bf16.msra.mxu0 0
        %1660 = vmatprep.subr.bf16.mxu0 0
        %1661 = vmatpush2.bf16.msra.mxu0 0
        %1662 = vmatprep.subr.bf16.mxu0 0
        %1663 = vmatpush2.bf16.msra.mxu0 0
        %1664 = vmatprep.subr.bf16.mxu0 0
        %1665 = vmatpush2.bf16.msra.mxu0 0
        %1666 = vmatprep.subr.bf16.mxu0 0
        %1667 = vmatpush2.bf16.msra.mxu0 0
        %1668 = vmatprep.subr.bf16.mxu0 0
        %1669 = vmatpush2.bf16.msra.mxu0 0
        %1670 = vmatprep.mubr.bf16.mxu0 0
        %1671 = vmatmul.mubr.bf16.gmra.mxu0 %v1636
        %v1672 = vpop.f32.mrf.mxu0
        %v1673 = vadd.f32 %v1484, %v1672
        %v1674 = vpop.f32.mrf.mxu0
        %v1675 = vadd.f32 %v1486, %v1674
        %v1676 = vpop.f32.mrf.mxu0
        %v1677 = vpop.f32.mrf.mxu0
        %1678 = vdwg.mxu0
        %1679 = vmatprep.subr.bf16.mxu0 0
        %1680 = vmatpush1.bf16.msra.mxu0 0
        %1681 = vmatprep.subr.bf16.mxu0 0
        %1682 = vmatpush1.bf16.msra.mxu0 0
        %1683 = vmatprep.subr.bf16.mxu0 0
        %1684 = vmatpush1.bf16.msra.mxu0 0
        %1685 = vmatprep.subr.bf16.mxu0 0
        %1686 = vmatpush1.bf16.msra.mxu0 0
        %1687 = vmatprep.subr.bf16.mxu0 0
        %1688 = vmatpush1.bf16.msra.mxu0 0
        %1689 = vmatprep.subr.bf16.mxu0 0
        %1690 = vmatpush1.bf16.msra.mxu0 0
        %1691 = vmatprep.subr.bf16.mxu0 %v1620
        %1692 = vmatpush1.bf16.msra.mxu0 %v1619
        %1693 = vmatprep.subr.bf16.mxu0 %v1614
        %1694 = vmatpush1.bf16.msra.mxu0 %v1613
        %1695 = vmatprep.subr.bf16.mxu0 0
        %1696 = vmatpush2.bf16.msra.mxu0 0
        %1697 = vmatprep.subr.bf16.mxu0 0
        %1698 = vmatpush2.bf16.msra.mxu0 0
        %1699 = vmatprep.subr.bf16.mxu0 0
        %1700 = vmatpush2.bf16.msra.mxu0 0
        %1701 = vmatprep.subr.bf16.mxu0 0
        %1702 = vmatpush2.bf16.msra.mxu0 0
        %1703 = vmatprep.subr.bf16.mxu0 0
        %1704 = vmatpush2.bf16.msra.mxu0 0
        %1705 = vmatprep.subr.bf16.mxu0 0
        %1706 = vmatpush2.bf16.msra.mxu0 0
        %1707 = vmatprep.subr.bf16.mxu0 0
        %1708 = vmatpush2.bf16.msra.mxu0 0
        %1709 = vmatprep.subr.bf16.mxu0 0
        %1710 = vmatpush2.bf16.msra.mxu0 0
        %1711 = vmatprep.mubr.bf16.mxu0 0
        %1712 = vmatmul.mubr.bf16.gmra.mxu0 %v1636
        %v1713 = vpop.f32.mrf.mxu0
        %v1714 = vadd.f32 %v1525, %v1713
        %v1715 = vpop.f32.mrf.mxu0
        %v1716 = vadd.f32 %v1527, %v1715
        %v1717 = vpop.f32.mrf.mxu0
        %v1718 = vpop.f32.mrf.mxu0
        %1719 = vdwg.mxu0
        %1720 = vmatprep.subr.bf16.mxu0 0
        %1721 = vmatpush1.bf16.msra.mxu0 0
        %1722 = vmatprep.subr.bf16.mxu0 0
        %1723 = vmatpush1.bf16.msra.mxu0 0
        %1724 = vmatprep.subr.bf16.mxu0 0
        %1725 = vmatpush1.bf16.msra.mxu0 0
        %1726 = vmatprep.subr.bf16.mxu0 0
        %1727 = vmatpush1.bf16.msra.mxu0 0
        %1728 = vmatprep.subr.bf16.mxu0 0
        %1729 = vmatpush1.bf16.msra.mxu0 0
        %1730 = vmatprep.subr.bf16.mxu0 0
        %1731 = vmatpush1.bf16.msra.mxu0 0
        %1732 = vmatprep.subr.bf16.mxu0 %v1622
        %1733 = vmatpush1.bf16.msra.mxu0 %v1621
        %1734 = vmatprep.subr.bf16.mxu0 %v1616
        %1735 = vmatpush1.bf16.msra.mxu0 %v1615
        %1736 = vmatprep.subr.bf16.mxu0 0
        %1737 = vmatpush2.bf16.msra.mxu0 0
        %1738 = vmatprep.subr.bf16.mxu0 0
        %1739 = vmatpush2.bf16.msra.mxu0 0
        %1740 = vmatprep.subr.bf16.mxu0 0
        %1741 = vmatpush2.bf16.msra.mxu0 0
        %1742 = vmatprep.subr.bf16.mxu0 0
        %1743 = vmatpush2.bf16.msra.mxu0 0
        %1744 = vmatprep.subr.bf16.mxu0 0
        %1745 = vmatpush2.bf16.msra.mxu0 0
        %1746 = vmatprep.subr.bf16.mxu0 0
        %1747 = vmatpush2.bf16.msra.mxu0 0
        %1748 = vmatprep.subr.bf16.mxu0 0
        %1749 = vmatpush2.bf16.msra.mxu0 0
        %1750 = vmatprep.subr.bf16.mxu0 0
        %1751 = vmatpush2.bf16.msra.mxu0 0
        %1752 = vmatprep.mubr.bf16.mxu0 0
        %1753 = vmatmul.mubr.bf16.gmra.mxu0 %v1636
        %v1754 = vpop.f32.mrf.mxu0
        %v1755 = vadd.f32 %v1566, %v1754
        %v1756 = vpop.f32.mrf.mxu0
        %v1757 = vadd.f32 %v1568, %v1756
        %v1758 = vpop.f32.mrf.mxu0
        %v1759 = vpop.f32.mrf.mxu0
        %1760 = vdwg.mxu0
        %v1761 = vld [vmem:[#allocation20] sm:$0xff]
        %v1762 = vld [vmem:[#allocation20 + $0x8] sm:$0xff]
        %v1763 = vld [vmem:[#allocation20 + $0x10] sm:$0xff]
        %v1764 = vld [vmem:[#allocation20 + $0x18] sm:$0xff]
        %v1765 = vld [vmem:[#allocation20 + $0x20] sm:$0xff]
        %v1766 = vld [vmem:[#allocation20 + $0x28] sm:$0xff]
        %v1767 = vld [vmem:[#allocation20 + $0x30] sm:$0xff]
        %v1768 = vld [vmem:[#allocation20 + $0x38] sm:$0xff]
        %v1769 = vld [vmem:[#allocation20 + $0x40] sm:$0xff]
        %v1770 = vld [vmem:[#allocation20 + $0x48] sm:$0xff]
        %v1771 = vld [vmem:[#allocation20 + $0x50] sm:$0xff]
        %v1772 = vld [vmem:[#allocation20 + $0x58] sm:$0xff]
        %v1785 = vunpack.c.l.b16 %v1761
        %v1786 = vunpack.c.h.b16 %v1761
        %v1787 = vunpack.c.l.b16 %v1762
        %v1788 = vunpack.c.h.b16 %v1762
        %v1789 = vunpack.c.l.b16 %v1763
        %v1790 = vunpack.c.h.b16 %v1763
        %v1791 = vunpack.c.l.b16 %v1764
        %v1792 = vunpack.c.h.b16 %v1764
        %v1793 = vunpack.c.l.b16 %v1765
        %v1794 = vunpack.c.h.b16 %v1765
        %v1795 = vunpack.c.l.b16 %v1766
        %v1796 = vunpack.c.h.b16 %v1766
        %v1797 = vunpack.c.l.b16 %v1767
        %v1798 = vunpack.c.h.b16 %v1767
        %v1799 = vunpack.c.l.b16 %v1768
        %v1800 = vunpack.c.h.b16 %v1768
        %v1801 = vunpack.c.l.b16 %v1769
        %v1802 = vunpack.c.h.b16 %v1769
        %v1803 = vunpack.c.l.b16 %v1770
        %v1804 = vunpack.c.h.b16 %v1770
        %v1805 = vunpack.c.l.b16 %v1771
        %v1806 = vunpack.c.h.b16 %v1771
        %v1807 = vunpack.c.l.b16 %v1772
        %v1808 = vunpack.c.h.b16 %v1772
        %v1809 = vpack.c.b16 %v1791, %v1785
        %v1810 = vpack.c.b16 %v1792, %v1786
        %v1811 = vpack.c.b16 %v1793, %v1787
        %v1812 = vpack.c.b16 %v1794, %v1788
        %v1813 = vpack.c.b16 %v1795, %v1789
        %v1814 = vpack.c.b16 %v1796, %v1790
        %v1815 = vpack.c.b16 %v1803, %v1797
        %v1816 = vpack.c.b16 %v1804, %v1798
        %v1817 = vpack.c.b16 %v1805, %v1799
        %v1818 = vpack.c.b16 %v1806, %v1800
        %v1819 = vpack.c.b16 %v1807, %v1801
        %v1820 = vpack.c.b16 %v1808, %v1802
        %1833 = vmatprep.subr.bf16.mxu0 0
        %1834 = vmatpush1.bf16.msra.mxu0 0
        %1835 = vmatprep.subr.bf16.mxu0 0
        %1836 = vmatpush1.bf16.msra.mxu0 0
        %1837 = vmatprep.subr.bf16.mxu0 0
        %1838 = vmatpush1.bf16.msra.mxu0 0
        %1839 = vmatprep.subr.bf16.mxu0 0
        %1840 = vmatpush1.bf16.msra.mxu0 0
        %1841 = vmatprep.subr.bf16.mxu0 0
        %1842 = vmatpush1.bf16.msra.mxu0 0
        %1843 = vmatprep.subr.bf16.mxu0 0
        %1844 = vmatpush1.bf16.msra.mxu0 0
        %1845 = vmatprep.subr.bf16.mxu0 %v1816
        %1846 = vmatpush1.bf16.msra.mxu0 %v1815
        %1847 = vmatprep.subr.bf16.mxu0 %v1810
        %1848 = vmatpush1.bf16.msra.mxu0 %v1809
        %1849 = vmatprep.subr.bf16.mxu0 0
        %1850 = vmatpush2.bf16.msra.mxu0 0
        %1851 = vmatprep.subr.bf16.mxu0 0
        %1852 = vmatpush2.bf16.msra.mxu0 0
        %1853 = vmatprep.subr.bf16.mxu0 0
        %1854 = vmatpush2.bf16.msra.mxu0 0
        %1855 = vmatprep.subr.bf16.mxu0 0
        %1856 = vmatpush2.bf16.msra.mxu0 0
        %1857 = vmatprep.subr.bf16.mxu0 0
        %1858 = vmatpush2.bf16.msra.mxu0 0
        %1859 = vmatprep.subr.bf16.mxu0 0
        %1860 = vmatpush2.bf16.msra.mxu0 0
        %1861 = vmatprep.subr.bf16.mxu0 0
        %1862 = vmatpush2.bf16.msra.mxu0 0
        %1863 = vmatprep.subr.bf16.mxu0 0
        %1864 = vmatpush2.bf16.msra.mxu0 0
        %1865 = vmatprep.mubr.bf16.mxu0 0
        %1866 = vmatmul.mubr.bf16.gmra.mxu0 %v1163
        %v1867 = vpop.f32.mrf.mxu0
        %v1868 = vadd.f32 0.0, %v1867
        %v1869 = vpop.f32.mrf.mxu0
        %v1870 = vadd.f32 0.0, %v1869
        %v1871 = vpop.f32.mrf.mxu0
        %v1872 = vpop.f32.mrf.mxu0
        %1873 = vdwg.mxu0
        %1874 = vmatprep.subr.bf16.mxu0 0
        %1875 = vmatpush1.bf16.msra.mxu0 0
        %1876 = vmatprep.subr.bf16.mxu0 0
        %1877 = vmatpush1.bf16.msra.mxu0 0
        %1878 = vmatprep.subr.bf16.mxu0 0
        %1879 = vmatpush1.bf16.msra.mxu0 0
        %1880 = vmatprep.subr.bf16.mxu0 0
        %1881 = vmatpush1.bf16.msra.mxu0 0
        %1882 = vmatprep.subr.bf16.mxu0 0
        %1883 = vmatpush1.bf16.msra.mxu0 0
        %1884 = vmatprep.subr.bf16.mxu0 0
        %1885 = vmatpush1.bf16.msra.mxu0 0
        %1886 = vmatprep.subr.bf16.mxu0 %v1818
        %1887 = vmatpush1.bf16.msra.mxu0 %v1817
        %1888 = vmatprep.subr.bf16.mxu0 %v1812
        %1889 = vmatpush1.bf16.msra.mxu0 %v1811
        %1890 = vmatprep.subr.bf16.mxu0 0
        %1891 = vmatpush2.bf16.msra.mxu0 0
        %1892 = vmatprep.subr.bf16.mxu0 0
        %1893 = vmatpush2.bf16.msra.mxu0 0
        %1894 = vmatprep.subr.bf16.mxu0 0
        %1895 = vmatpush2.bf16.msra.mxu0 0
        %1896 = vmatprep.subr.bf16.mxu0 0
        %1897 = vmatpush2.bf16.msra.mxu0 0
        %1898 = vmatprep.subr.bf16.mxu0 0
        %1899 = vmatpush2.bf16.msra.mxu0 0
        %1900 = vmatprep.subr.bf16.mxu0 0
        %1901 = vmatpush2.bf16.msra.mxu0 0
        %1902 = vmatprep.subr.bf16.mxu0 0
        %1903 = vmatpush2.bf16.msra.mxu0 0
        %1904 = vmatprep.subr.bf16.mxu0 0
        %1905 = vmatpush2.bf16.msra.mxu0 0
        %1906 = vmatprep.mubr.bf16.mxu0 0
        %1907 = vmatmul.mubr.bf16.gmra.mxu0 %v1163
        %v1908 = vpop.f32.mrf.mxu0
        %v1909 = vadd.f32 0.0, %v1908
        %v1910 = vpop.f32.mrf.mxu0
        %v1911 = vadd.f32 0.0, %v1910
        %v1912 = vpop.f32.mrf.mxu0
        %v1913 = vpop.f32.mrf.mxu0
        %1914 = vdwg.mxu0
        %1915 = vmatprep.subr.bf16.mxu0 0
        %1916 = vmatpush1.bf16.msra.mxu0 0
        %1917 = vmatprep.subr.bf16.mxu0 0
        %1918 = vmatpush1.bf16.msra.mxu0 0
        %1919 = vmatprep.subr.bf16.mxu0 0
        %1920 = vmatpush1.bf16.msra.mxu0 0
        %1921 = vmatprep.subr.bf16.mxu0 0
        %1922 = vmatpush1.bf16.msra.mxu0 0
        %1923 = vmatprep.subr.bf16.mxu0 0
        %1924 = vmatpush1.bf16.msra.mxu0 0
        %1925 = vmatprep.subr.bf16.mxu0 0
        %1926 = vmatpush1.bf16.msra.mxu0 0
        %1927 = vmatprep.subr.bf16.mxu0 %v1820
        %1928 = vmatpush1.bf16.msra.mxu0 %v1819
        %1929 = vmatprep.subr.bf16.mxu0 %v1814
        %1930 = vmatpush1.bf16.msra.mxu0 %v1813
        %1931 = vmatprep.subr.bf16.mxu0 0
        %1932 = vmatpush2.bf16.msra.mxu0 0
        %1933 = vmatprep.subr.bf16.mxu0 0
        %1934 = vmatpush2.bf16.msra.mxu0 0
        %1935 = vmatprep.subr.bf16.mxu0 0
        %1936 = vmatpush2.bf16.msra.mxu0 0
        %1937 = vmatprep.subr.bf16.mxu0 0
        %1938 = vmatpush2.bf16.msra.mxu0 0
        %1939 = vmatprep.subr.bf16.mxu0 0
        %1940 = vmatpush2.bf16.msra.mxu0 0
        %1941 = vmatprep.subr.bf16.mxu0 0
        %1942 = vmatpush2.bf16.msra.mxu0 0
        %1943 = vmatprep.subr.bf16.mxu0 0
        %1944 = vmatpush2.bf16.msra.mxu0 0
        %1945 = vmatprep.subr.bf16.mxu0 0
        %1946 = vmatpush2.bf16.msra.mxu0 0
        %1947 = vmatprep.mubr.bf16.mxu0 0
        %1948 = vmatmul.mubr.bf16.gmra.mxu0 %v1163
        %v1949 = vpop.f32.mrf.mxu0
        %v1950 = vadd.f32 0.0, %v1949
        %v1951 = vpop.f32.mrf.mxu0
        %v1952 = vadd.f32 0.0, %v1951
        %v1953 = vpop.f32.mrf.mxu0
        %v1954 = vpop.f32.mrf.mxu0
        %1955 = vdwg.mxu0
        %v1956 = vadd.f32 %v1673, %v1868
        %v1957 = vadd.f32 %v1675, %v1870
        %v1958 = vadd.f32 %v1714, %v1909
        %v1959 = vadd.f32 %v1716, %v1911
        %v1960 = vadd.f32 %v1755, %v1950
        %v1961 = vadd.f32 %v1757, %v1952
        %v1962 = vld [vmem:[#allocation21] sm:$0xff]
        %v1963 = vld [vmem:[#allocation21 + $0x8] sm:$0xff]
        %v1964 = vld [vmem:[#allocation21 + $0x10] sm:$0xff]
        %v1965 = vld [vmem:[#allocation21 + $0x18] sm:$0xff]
        %v1966 = vld [vmem:[#allocation21 + $0x20] sm:$0xff]
        %v1967 = vld [vmem:[#allocation21 + $0x28] sm:$0xff]
        %v1974 = vunpack.c.l.b16 %v1962
        %v1975 = vunpack.c.h.b16 %v1962
        %v1976 = vunpack.c.l.b16 %v1963
        %v1977 = vunpack.c.h.b16 %v1963
        %v1978 = vunpack.c.l.b16 %v1964
        %v1979 = vunpack.c.h.b16 %v1964
        %v1980 = vunpack.c.l.b16 %v1965
        %v1981 = vunpack.c.h.b16 %v1965
        %v1982 = vunpack.c.l.b16 %v1966
        %v1983 = vunpack.c.h.b16 %v1966
        %v1984 = vunpack.c.l.b16 %v1967
        %v1985 = vunpack.c.h.b16 %v1967
        %v1986 = vpack.c.b16 %v1980, %v1974
        %v1987 = vpack.c.b16 %v1981, %v1975
        %v1988 = vpack.c.b16 %v1982, %v1976
        %v1989 = vpack.c.b16 %v1983, %v1977
        %v1990 = vpack.c.b16 %v1984, %v1978
        %v1991 = vpack.c.b16 %v1985, %v1979
        %1998 = vmatprep.subr.bf16.mxu0 0
        %1999 = vmatpush1.bf16.msra.mxu0 0
        %2000 = vmatprep.subr.bf16.mxu0 0
        %2001 = vmatpush1.bf16.msra.mxu0 0
        %2002 = vmatprep.subr.bf16.mxu0 0
        %2003 = vmatpush1.bf16.msra.mxu0 0
        %2004 = vmatprep.subr.bf16.mxu0 0
        %2005 = vmatpush1.bf16.msra.mxu0 0
        %2006 = vmatprep.subr.bf16.mxu0 0
        %2007 = vmatpush1.bf16.msra.mxu0 0
        %2008 = vmatprep.subr.bf16.mxu0 0
        %2009 = vmatpush1.bf16.msra.mxu0 0
        %2010 = vmatprep.subr.bf16.mxu0 0
        %2011 = vmatpush1.bf16.msra.mxu0 0
        %2012 = vmatprep.subr.bf16.mxu0 %v1987
        %2013 = vmatpush1.bf16.msra.mxu0 %v1986
        %2014 = vmatprep.subr.bf16.mxu0 0
        %2015 = vmatpush2.bf16.msra.mxu0 0
        %2016 = vmatprep.subr.bf16.mxu0 0
        %2017 = vmatpush2.bf16.msra.mxu0 0
        %2018 = vmatprep.subr.bf16.mxu0 0
        %2019 = vmatpush2.bf16.msra.mxu0 0
        %2020 = vmatprep.subr.bf16.mxu0 0
        %2021 = vmatpush2.bf16.msra.mxu0 0
        %2022 = vmatprep.subr.bf16.mxu0 0
        %2023 = vmatpush2.bf16.msra.mxu0 0
        %2024 = vmatprep.subr.bf16.mxu0 0
        %2025 = vmatpush2.bf16.msra.mxu0 0
        %2026 = vmatprep.subr.bf16.mxu0 0
        %2027 = vmatpush2.bf16.msra.mxu0 0
        %2028 = vmatprep.subr.bf16.mxu0 0
        %2029 = vmatpush2.bf16.msra.mxu0 0
        %2030 = vmatprep.mubr.bf16.mxu0 0
        %2031 = vmatmul.mubr.bf16.gmra.mxu0 %v1264
        %v2032 = vpop.f32.mrf.mxu0
        %v2033 = vadd.f32 0.0, %v2032
        %v2034 = vpop.f32.mrf.mxu0
        %v2035 = vadd.f32 0.0, %v2034
        %v2036 = vpop.f32.mrf.mxu0
        %v2037 = vpop.f32.mrf.mxu0
        %2038 = vdwg.mxu0
        %2039 = vmatprep.subr.bf16.mxu0 0
        %2040 = vmatpush1.bf16.msra.mxu0 0
        %2041 = vmatprep.subr.bf16.mxu0 0
        %2042 = vmatpush1.bf16.msra.mxu0 0
        %2043 = vmatprep.subr.bf16.mxu0 0
        %2044 = vmatpush1.bf16.msra.mxu0 0
        %2045 = vmatprep.subr.bf16.mxu0 0
        %2046 = vmatpush1.bf16.msra.mxu0 0
        %2047 = vmatprep.subr.bf16.mxu0 0
        %2048 = vmatpush1.bf16.msra.mxu0 0
        %2049 = vmatprep.subr.bf16.mxu0 0
        %2050 = vmatpush1.bf16.msra.mxu0 0
        %2051 = vmatprep.subr.bf16.mxu0 0
        %2052 = vmatpush1.bf16.msra.mxu0 0
        %2053 = vmatprep.subr.bf16.mxu0 %v1989
        %2054 = vmatpush1.bf16.msra.mxu0 %v1988
        %2055 = vmatprep.subr.bf16.mxu0 0
        %2056 = vmatpush2.bf16.msra.mxu0 0
        %2057 = vmatprep.subr.bf16.mxu0 0
        %2058 = vmatpush2.bf16.msra.mxu0 0
        %2059 = vmatprep.subr.bf16.mxu0 0
        %2060 = vmatpush2.bf16.msra.mxu0 0
        %2061 = vmatprep.subr.bf16.mxu0 0
        %2062 = vmatpush2.bf16.msra.mxu0 0
        %2063 = vmatprep.subr.bf16.mxu0 0
        %2064 = vmatpush2.bf16.msra.mxu0 0
        %2065 = vmatprep.subr.bf16.mxu0 0
        %2066 = vmatpush2.bf16.msra.mxu0 0
        %2067 = vmatprep.subr.bf16.mxu0 0
        %2068 = vmatpush2.bf16.msra.mxu0 0
        %2069 = vmatprep.subr.bf16.mxu0 0
        %2070 = vmatpush2.bf16.msra.mxu0 0
        %2071 = vmatprep.mubr.bf16.mxu0 0
        %2072 = vmatmul.mubr.bf16.gmra.mxu0 %v1264
        %v2073 = vpop.f32.mrf.mxu0
        %v2074 = vadd.f32 0.0, %v2073
        %v2075 = vpop.f32.mrf.mxu0
        %v2076 = vadd.f32 0.0, %v2075
        %v2077 = vpop.f32.mrf.mxu0
        %v2078 = vpop.f32.mrf.mxu0
        %2079 = vdwg.mxu0
        %2080 = vmatprep.subr.bf16.mxu0 0
        %2081 = vmatpush1.bf16.msra.mxu0 0
        %2082 = vmatprep.subr.bf16.mxu0 0
        %2083 = vmatpush1.bf16.msra.mxu0 0
        %2084 = vmatprep.subr.bf16.mxu0 0
        %2085 = vmatpush1.bf16.msra.mxu0 0
        %2086 = vmatprep.subr.bf16.mxu0 0
        %2087 = vmatpush1.bf16.msra.mxu0 0
        %2088 = vmatprep.subr.bf16.mxu0 0
        %2089 = vmatpush1.bf16.msra.mxu0 0
        %2090 = vmatprep.subr.bf16.mxu0 0
        %2091 = vmatpush1.bf16.msra.mxu0 0
        %2092 = vmatprep.subr.bf16.mxu0 0
        %2093 = vmatpush1.bf16.msra.mxu0 0
        %2094 = vmatprep.subr.bf16.mxu0 %v1991
        %2095 = vmatpush1.bf16.msra.mxu0 %v1990
        %2096 = vmatprep.subr.bf16.mxu0 0
        %2097 = vmatpush2.bf16.msra.mxu0 0
        %2098 = vmatprep.subr.bf16.mxu0 0
        %2099 = vmatpush2.bf16.msra.mxu0 0
        %2100 = vmatprep.subr.bf16.mxu0 0
        %2101 = vmatpush2.bf16.msra.mxu0 0
        %2102 = vmatprep.subr.bf16.mxu0 0
        %2103 = vmatpush2.bf16.msra.mxu0 0
        %2104 = vmatprep.subr.bf16.mxu0 0
        %2105 = vmatpush2.bf16.msra.mxu0 0
        %2106 = vmatprep.subr.bf16.mxu0 0
        %2107 = vmatpush2.bf16.msra.mxu0 0
        %2108 = vmatprep.subr.bf16.mxu0 0
        %2109 = vmatpush2.bf16.msra.mxu0 0
        %2110 = vmatprep.subr.bf16.mxu0 0
        %2111 = vmatpush2.bf16.msra.mxu0 0
        %2112 = vmatprep.mubr.bf16.mxu0 0
        %2113 = vmatmul.mubr.bf16.gmra.mxu0 %v1264
        %v2114 = vpop.f32.mrf.mxu0
        %v2115 = vadd.f32 0.0, %v2114
        %v2116 = vpop.f32.mrf.mxu0
        %v2117 = vadd.f32 0.0, %v2116
        %v2118 = vpop.f32.mrf.mxu0
        %v2119 = vpop.f32.mrf.mxu0
        %2120 = vdwg.mxu0
        %v2121 = vadd.f32 %v1956, %v2033
        %v2122 = vadd.f32 %v1957, %v2035
        %v2123 = vadd.f32 %v1958, %v2074
        %v2124 = vadd.f32 %v1959, %v2076
        %v2125 = vadd.f32 %v1960, %v2115
        %v2126 = vadd.f32 %v1961, %v2117
        %v2127 = vld [vmem:[#allocation23] sm:$0x3f]
        %v2129 = vlaneseq
        %v2130 = vshrl.u32 %v2129, 7
        %v2131 = vsub.s32 0, %v2130
        %v2132 = vrot.slane %v2127, %v2131
        %v2133 = vlaneseq
        %v2134 = vshrl.u32 %v2133, 7
        %v2135 = vsub.s32 1, %v2134
        %v2136 = vrot.slane %v2127, %v2135
        %v2137 = vlaneseq
        %v2138 = vshrl.u32 %v2137, 7
        %v2139 = vsub.s32 2, %v2138
        %v2140 = vrot.slane %v2127, %v2139
        %v2141 = vlaneseq
        %v2142 = vshrl.u32 %v2141, 7
        %v2143 = vsub.s32 3, %v2142
        %v2144 = vrot.slane %v2127, %v2143
        %v2145 = vlaneseq
        %v2146 = vshrl.u32 %v2145, 7
        %v2147 = vsub.s32 4, %v2146
        %v2148 = vrot.slane %v2127, %v2147
        %v2149 = vlaneseq
        %v2150 = vshrl.u32 %v2149, 7
        %v2151 = vsub.s32 5, %v2150
        %v2152 = vrot.slane %v2127, %v2151
        %v2159 = vadd.f32 %v2121, %v2132
        %v2160 = vadd.f32 %v2122, %v2136
        %v2161 = vadd.f32 %v2123, %v2140
        %v2162 = vadd.f32 %v2124, %v2144
        %v2163 = vadd.f32 %v2125, %v2148
        %v2164 = vadd.f32 %v2126, %v2152
        %v2165 = vxor.u32 %v2159, 2147483648
        %v2166 = vmul.f32 %v2165, 1.442695
        %v2167 = vpow.pop %v2166
        %v2168 = vadd.f32 %v2167, 1.0
        %v2169 = vrcp.pop %v2168
        %v2170 = vmul.f32 1.0, %v2169
        %2171 = vst [vmem:[%s896] sm:$0x3] %v2170
        %2172 = vst [vmem:[%s896 + $0x2] sm:$0x3] %v2160
        %v2173 = vmax.f32 %v2161, 0.0
        %v2174 = vmax.f32 %v2162, 0.0
        %v2175 = vmax.f32 %v2163, 0.0
        %v2176 = vmax.f32 %v2164, 0.0
        %v2181 = vcombine.low %v2173, %v2174
        %v2182 = vcombine.low %v2175, %v2176
        %v2184 = vunpack.c.l.s4 1983009808
        %v2185 = vunpack.c.0.s8 %v2184
        %v2186 = vlaneseq
        %v2187 = vshrl.u32 %v2186, 7
        %v2188 = vsub.s32 %v2185, %v2187
        %v2189 = vrot.slane %v2181, %v2188
        %v2191 = vunpack.c.l.s4 1983009808
        %v2192 = vunpack.c.0.s8 %v2191
        %v2193 = vlaneseq
        %v2194 = vshrl.u32 %v2193, 7
        %v2195 = vsub.s32 %v2192, %v2194
        %v2196 = vrot.slane %v2182, %v2195
        %v2197 = vcombine.low %v2189, %v2196
        %2199 = vst [vmem:[%s896 + $0x4] sm:$0xff] %v2197
        %v2200 = vlaneseq
        %v2201 = vshrl.u32 %v2200, 7
        %v2202 = vsub.s32 %v926, %v2201
        %v2203 = vrot.slane %v1112, %v2202
        %v2204 = vlaneseq
        %v2205 = vshrl.u32 %v2204, 7
        %v2206 = vsub.s32 %v926, %v2205
        %v2207 = vrot.slane %v1117, %v2206
        %v2208 = vsel %vm1050, %v2207, %v2203
        %2210 = vst.msk [vmem:[%s902] sm:$0x3] %vm1053, %v2208
        %vm2211 = vcmask 91136
        %v2212 = vsel %vm2211, %v2160, -inf
        %2213 = vmax.xlane.f32.xlu0 %v2212
        %v2214 = vpop.xlane.xlu0 %2213
        %vm2215 = vcmp.eq.f32.partialorder %v2160, %v2214
        %v2216 = vsel %vm2215, %v926, 12
        %v2217 = vsel %vm2211, %v2216, 2147483647
        %v2218 = vand.u32 %v2217, 65535
        %v2219 = vshra.s32 %v2217, 16
        %v2220 = vcvt.s32.f32 %v2218
        %v2221 = vcvt.s32.f32 %v2219
        %2222 = vmin.xlane.f32.xlu0 %v2221
        %v2223 = vpop.xlane.xlu0 %2222
        %vm2224 = vcmp.eq.f32.partialorder %v2221, %v2223
        %v2225 = vsel %vm2224, %v2220, inf
        %2226 = vmin.xlane.f32.xlu0 %v2225
        %v2227 = vpop.xlane.xlu0 %2226
        %v2228 = vcvt.f32.s32 %v2227
        %v2229 = vcvt.f32.s32 %v2223
        %v2230 = vshll.u32 %v2229, 16
        %v2231 = vadd.s32 %v2230, %v2228
        %vm2232 = vcmp.eq.s32.totalorder %v926, %v2231
        %v2233 = vsel %vm2232, 1, 0
        %v2234 = vcvt.s32.f32 %v2233
        %v2235 = vpack.c.bf16 %v2234, %v2234
        %v2236 = vld [vmem:[#allocation24] sm:$0xf]
        %v2237 = vld [vmem:[#allocation24 + $0x4] sm:$0x3]
        %v2240 = vunpack.c.l.b16 %v2236
        %v2241 = vunpack.c.l.b16 %v2237
        %v2242 = vpack.c.b16 %v2241, %v2240
        %vm2243 = vcmask 97280
        %v2245 = vsel %vm2243, %v2235, 0
        %vm2247 = vcmask 1045504
        %v2249 = vsel %vm2247, %v2242, 0
        %2251 = vmatprep.subr.bf16.mxu0 0
        %2252 = vmatpush1.bf16.msra.mxu0 0
        %2253 = vmatprep.subr.bf16.mxu0 0
        %2254 = vmatpush1.bf16.msra.mxu0 0
        %2255 = vmatprep.subr.bf16.mxu0 0
        %2256 = vmatpush1.bf16.msra.mxu0 0
        %2257 = vmatprep.subr.bf16.mxu0 0
        %2258 = vmatpush1.bf16.msra.mxu0 0
        %2259 = vmatprep.subr.bf16.mxu0 0
        %2260 = vmatpush1.bf16.msra.mxu0 0
        %2261 = vmatprep.subr.bf16.mxu0 0
        %2262 = vmatpush1.bf16.msra.mxu0 0
        %2263 = vmatprep.subr.bf16.mxu0 0
        %2264 = vmatpush1.bf16.msra.mxu0 0
        %2265 = vmatprep.subr.bf16.mxu0 0
        %2266 = vmatpush1.bf16.msra.mxu0 %v2249
        %2267 = vmatprep.subr.bf16.mxu0 0
        %2268 = vmatpush2.bf16.msra.mxu0 0
        %2269 = vmatprep.subr.bf16.mxu0 0
        %2270 = vmatpush2.bf16.msra.mxu0 0
        %2271 = vmatprep.subr.bf16.mxu0 0
        %2272 = vmatpush2.bf16.msra.mxu0 0
        %2273 = vmatprep.subr.bf16.mxu0 0
        %2274 = vmatpush2.bf16.msra.mxu0 0
        %2275 = vmatprep.subr.bf16.mxu0 0
        %2276 = vmatpush2.bf16.msra.mxu0 0
        %2277 = vmatprep.subr.bf16.mxu0 0
        %2278 = vmatpush2.bf16.msra.mxu0 0
        %2279 = vmatprep.subr.bf16.mxu0 0
        %2280 = vmatpush2.bf16.msra.mxu0 0
        %2281 = vmatprep.subr.bf16.mxu0 0
        %2282 = vmatpush2.bf16.msra.mxu0 0
        %2283 = vmatprep.mubr.bf16.mxu0 0
        %2284 = vmatmul.mubr.bf16.gmra.mxu0 %v2245
        %v2285 = vpop.f32.mrf.mxu0
        %v2286 = vadd.f32 0.0, %v2285
        %v2287 = vpop.f32.mrf.mxu0
        %v2288 = vpop.f32.mrf.mxu0
        %v2289 = vpop.f32.mrf.mxu0
        %2290 = vdwg.mxu0
        %s2291 = scalar_lea.vmem %s889, 1
        %v2292 = vld [vmem:[%s2291] sm:$0x1]
        %v2293 = vld [vmem:[#allocation6] sm:$0xf]
        %v2294 = vld [vmem:[#allocation6 + $0x4] sm:$0xf]
        %v2295 = vld [vmem:[#allocation6 + $0x8] sm:$0xf]
        %v2296 = vld [vmem:[#allocation6 + $0xc] sm:$0xf]
        %v2297 = vld [vmem:[#allocation8] sm:$0x1]
        %v2299 = vlaneseq
        %v2300 = vshrl.u32 %v2299, 7
        %v2301 = vsub.s32 0, %v2300
        %v2302 = vrot.slane %v2297, %v2301
        %v2308 = vunpack.c.l.b16 %v2293
        %v2309 = vunpack.c.l.b16 %v2294
        %v2310 = vunpack.c.l.b16 %v2295
        %v2311 = vunpack.c.l.b16 %v2296
        %v2312 = vpack.c.b16 %v2309, %v2308
        %v2313 = vpack.c.b16 %v2311, %v2310
        %2316 = vmatprep.subr.bf16.mxu0 0
        %2317 = vmatpush1.bf16.msra.mxu0 0
        %2318 = vmatprep.subr.bf16.mxu0 0
        %2319 = vmatpush1.bf16.msra.mxu0 0
        %2320 = vmatprep.subr.bf16.mxu0 0
        %2321 = vmatpush1.bf16.msra.mxu0 0
        %2322 = vmatprep.subr.bf16.mxu0 0
        %2323 = vmatpush1.bf16.msra.mxu0 0
        %2324 = vmatprep.subr.bf16.mxu0 0
        %2325 = vmatpush1.bf16.msra.mxu0 0
        %2326 = vmatprep.subr.bf16.mxu0 0
        %2327 = vmatpush1.bf16.msra.mxu0 0
        %2328 = vmatprep.subr.bf16.mxu0 0
        %2329 = vmatpush1.bf16.msra.mxu0 %v2313
        %2330 = vmatprep.subr.bf16.mxu0 0
        %2331 = vmatpush1.bf16.msra.mxu0 %v2312
        %2332 = vmatprep.subr.bf16.mxu0 0
        %2333 = vmatpush2.bf16.msra.mxu0 0
        %2334 = vmatprep.subr.bf16.mxu0 0
        %2335 = vmatpush2.bf16.msra.mxu0 0
        %2336 = vmatprep.subr.bf16.mxu0 0
        %2337 = vmatpush2.bf16.msra.mxu0 0
        %2338 = vmatprep.subr.bf16.mxu0 0
        %2339 = vmatpush2.bf16.msra.mxu0 0
        %2340 = vmatprep.subr.bf16.mxu0 0
        %2341 = vmatpush2.bf16.msra.mxu0 0
        %2342 = vmatprep.subr.bf16.mxu0 0
        %2343 = vmatpush2.bf16.msra.mxu0 0
        %2344 = vmatprep.subr.bf16.mxu0 0
        %2345 = vmatpush2.bf16.msra.mxu0 0
        %2346 = vmatprep.subr.bf16.mxu0 0
        %2347 = vmatpush2.bf16.msra.mxu0 0
        %2348 = vmatprep.mubr.bf16.mxu0 0
        %2349 = vmatmul.mubr.bf16.gmra.mxu0 %v1636
        %v2350 = vpop.f32.mrf.mxu0
        %v2351 = vadd.f32 %v2302, %v2350
        %v2352 = vpop.f32.mrf.mxu0
        %v2353 = vpop.f32.mrf.mxu0
        %v2354 = vpop.f32.mrf.mxu0
        %2355 = vdwg.mxu0
        %v2358 = vunpack.c.l.s4 1966171168
        %v2359 = vunpack.c.0.s8 %v2358
        %v2360 = vlaneseq
        %v2361 = vshrl.u32 %v2360, 7
        %v2362 = vsub.s32 %v2359, %v2361
        %v2363 = vrot.slane %v2351, %v2362
        %v2364 = vcombine.high %v2363, %v2363
        %v2366 = vunpack.c.l.s4 1966171168
        %v2367 = vunpack.c.0.s8 %v2366
        %v2368 = vlaneseq
        %v2369 = vshrl.u32 %v2368, 7
        %v2370 = vsub.s32 %v2367, %v2369
        %v2371 = vrot.slane %v2363, %v2370
        %v2373 = vunpack.c.l.s4 1966171168
        %v2374 = vunpack.c.0.s8 %v2373
        %v2375 = vlaneseq
        %v2376 = vshrl.u32 %v2375, 7
        %v2377 = vsub.s32 %v2374, %v2376
        %v2378 = vrot.slane %v2364, %v2377
        %v2379 = vlaneseq
        %v2380 = vshrl.u32 %v2379, 7
        %v2381 = vsub.s32 0, %v2380
        %v2382 = vrot.slane %v2371, %v2381
        %v2383 = vlaneseq
        %v2384 = vshrl.u32 %v2383, 7
        %v2385 = vsub.s32 0, %v2384
        %v2386 = vrot.slane %v2378, %v2385
        %v2389 = vmul.f32 %v923, %v2382
        %v2390 = vmul.f32 %v924, %v2386
        %v2391 = vsel %vm955, %v2389, 0.0
        %2392 = vadd.xlane.f32.xlu0 %v2391
        %v2393 = vpop.xlane.xlu0 %2392
        %v2394 = vsel %vm955, %v2390, 0.0
        %2395 = vadd.xlane.f32.xlu0 %v2394
        %v2396 = vpop.xlane.xlu0 %2395
        %v2399 = vlaneseq
        %v2400 = vshrl.u32 %v2399, 7
        %v2401 = vsub.s32 %v926, %v2400
        %v2402 = vrot.slane %v2393, %v2401
        %v2403 = vlaneseq
        %v2404 = vshrl.u32 %v2403, 7
        %v2405 = vsub.s32 %v926, %v2404
        %v2406 = vrot.slane %v2396, %v2405
        %v2407 = vsel %vm1050, %v2406, %v2402
        %v2409 = vsel %vm1053, %v2407, -inf
        %2410 = vmax.xlane.f32.xlu0 %v2409
        %v2411 = vpop.xlane.xlu0 %2410
        %v2413 = vlaneseq
        %v2414 = vshrl.u32 %v2413, 7
        %v2415 = vsub.s32 0, %v2414
        %v2416 = vrot.slane %v2411, %v2415
        %v2417 = vlaneseq
        %v2418 = vshrl.u32 %v2417, 7
        %v2419 = vsub.s32 1, %v2418
        %v2420 = vrot.slane %v2411, %v2419
        %v2423 = vsub.f32 %v2393, %v2416
        %v2424 = vsub.f32 %v2396, %v2420
        %v2425 = vmul.f32 %v2423, 1.442695
        %v2426 = vpow.pop %v2425
        %v2427 = vmul.f32 %v2424, 1.442695
        %v2428 = vpow.pop %v2427
        %2431 = vset.pattern.permute.xlu0 0
        %2432 = vperm.xlu0 %2431, %v2426
        %v2433 = vpop.permute.xlu0 %2432
        %2434 = vset.pattern.permute.xlu0 0
        %2435 = vperm.xlu0 %2434, %v2428
        %v2436 = vpop.permute.xlu0 %2435
        %v2437 = vlaneseq
        %v2438 = vshrl.u32 %v2437, 7
        %v2439 = vsub.s32 %v926, %v2438
        %v2440 = vrot.slane %v2433, %v2439
        %v2441 = vlaneseq
        %v2442 = vshrl.u32 %v2441, 7
        %v2443 = vsub.s32 %v926, %v2442
        %v2444 = vrot.slane %v2436, %v2443
        %v2445 = vsel %vm1050, %v2444, %v2440
        %v2447 = vsel %vm1053, %v2445, 0.0
        %2448 = vadd.xlane.f32.xlu0 %v2447
        %v2449 = vpop.xlane.xlu0 %2448
        %v2450 = vrcp.pop %v2449
        %v2452 = vlaneseq
        %v2453 = vshrl.u32 %v2452, 7
        %v2454 = vsub.s32 0, %v2453
        %v2455 = vrot.slane %v2450, %v2454
        %v2456 = vlaneseq
        %v2457 = vshrl.u32 %v2456, 7
        %v2458 = vsub.s32 1, %v2457
        %v2459 = vrot.slane %v2450, %v2458
        %v2462 = vmul.f32 %v2426, %v2455
        %v2463 = vmul.f32 %v2428, %v2459
        %2465 = vset.pattern.permute.xlu0 0
        %2466 = vperm.xlu0 %2465, %v2462
        %v2467 = vpop.permute.xlu0 %2466
        %2470 = vset.pattern.permute.xlu0 0
        %2471 = vperm.xlu0 %2470, %v2463
        %v2472 = vpop.permute.xlu0 %2471
        %v2474 = vmul.f32 %v923, %v2467
        %v2475 = vmul.f32 %v924, %v2472
        %v2476 = vsel %vm955, %v2474, 0.0
        %v2477 = vrot.slane %v2476, 4
        %v2478 = vadd.f32 %v2476, %v2477
        %v2479 = vrot.slane %v2478, 2
        %v2480 = vadd.f32 %v2478, %v2479
        %v2481 = vrot.slane %v2480, 1
        %v2482 = vadd.f32 %v2480, %v2481
        %v2483 = vsel %vm955, %v2475, 0.0
        %v2484 = vrot.slane %v2483, 4
        %v2485 = vadd.f32 %v2483, %v2484
        %v2486 = vrot.slane %v2485, 2
        %v2487 = vadd.f32 %v2485, %v2486
        %v2488 = vrot.slane %v2487, 1
        %v2489 = vadd.f32 %v2487, %v2488
        %v2490 = vpack.c.bf16 %v2482, %v2482
        %v2491 = vpack.c.bf16 %v2489, %v2489
        %v2492 = vpack.c.bf16 %v2286, %v2286
        %v2493 = vld [vmem:[#allocation9] sm:$0xf]
        %v2494 = vld [vmem:[#allocation9 + $0x4] sm:$0xf]
        %v2495 = vld [vmem:[#allocation11] sm:$0xf]
        %v2496 = vld [vmem:[#allocation11 + $0x4] sm:$0xf]
        %v2497 = vld [vmem:[#allocation11 + $0x8] sm:$0xf]
        %v2498 = vld [vmem:[#allocation11 + $0xc] sm:$0xf]
        %v2501 = vunpack.c.l.b16 %v2490
        %v2502 = vunpack.c.l.b16 %v2491
        %v2503 = vsel %vm1050, %v2502, %v2501
        %v2504 = vpack.c.b16 %v2503, %v2503
        %v2509 = vunpack.c.l.b16 %v2495
        %v2510 = vunpack.c.l.b16 %v2496
        %v2511 = vunpack.c.l.b16 %v2497
        %v2512 = vunpack.c.l.b16 %v2498
        %v2513 = vpack.c.b16 %v2510, %v2509
        %v2514 = vpack.c.b16 %v2512, %v2511
        %v2518 = vsel %vm955, %v2504, 0
        %2520 = vmatprep.subr.bf16.mxu0 0
        %2521 = vmatpush1.bf16.msra.mxu0 0
        %2522 = vmatprep.subr.bf16.mxu0 0
        %2523 = vmatpush1.bf16.msra.mxu0 0
        %2524 = vmatprep.subr.bf16.mxu0 0
        %2525 = vmatpush1.bf16.msra.mxu0 0
        %2526 = vmatprep.subr.bf16.mxu0 0
        %2527 = vmatpush1.bf16.msra.mxu0 0
        %2528 = vmatprep.subr.bf16.mxu0 0
        %2529 = vmatpush1.bf16.msra.mxu0 0
        %2530 = vmatprep.subr.bf16.mxu0 0
        %2531 = vmatpush1.bf16.msra.mxu0 0
        %2532 = vmatprep.subr.bf16.mxu0 0
        %2533 = vmatpush1.bf16.msra.mxu0 %v2514
        %2534 = vmatprep.subr.bf16.mxu0 0
        %2535 = vmatpush1.bf16.msra.mxu0 %v2513
        %2536 = vmatprep.subr.bf16.mxu0 0
        %2537 = vmatpush2.bf16.msra.mxu0 0
        %2538 = vmatprep.subr.bf16.mxu0 0
        %2539 = vmatpush2.bf16.msra.mxu0 0
        %2540 = vmatprep.subr.bf16.mxu0 0
        %2541 = vmatpush2.bf16.msra.mxu0 0
        %2542 = vmatprep.subr.bf16.mxu0 0
        %2543 = vmatpush2.bf16.msra.mxu0 0
        %2544 = vmatprep.subr.bf16.mxu0 0
        %2545 = vmatpush2.bf16.msra.mxu0 0
        %2546 = vmatprep.subr.bf16.mxu0 0
        %2547 = vmatpush2.bf16.msra.mxu0 0
        %2548 = vmatprep.subr.bf16.mxu0 0
        %2549 = vmatpush2.bf16.msra.mxu0 0
        %2550 = vmatprep.subr.bf16.mxu0 0
        %2551 = vmatpush2.bf16.msra.mxu0 0
        %2552 = vmatprep.mubr.bf16.mxu0 0
        %2553 = vmatmul.mubr.bf16.gmra.mxu0 %v2518
        %v2554 = vpop.f32.mrf.mxu0
        %v2555 = vadd.f32 0.0, %v2554
        %v2556 = vpop.f32.mrf.mxu0
        %v2557 = vpop.f32.mrf.mxu0
        %v2558 = vpop.f32.mrf.mxu0
        %2559 = vdwg.mxu0
        %v2562 = vunpack.c.l.b16 %v2493
        %v2563 = vunpack.c.l.b16 %v2494
        %v2564 = vpack.c.b16 %v2563, %v2562
        %v2567 = vsel %vm1211, %v2292, 0
        %2569 = vmatprep.subr.bf16.mxu0 0
        %2570 = vmatpush1.bf16.msra.mxu0 0
        %2571 = vmatprep.subr.bf16.mxu0 0
        %2572 = vmatpush1.bf16.msra.mxu0 0
        %2573 = vmatprep.subr.bf16.mxu0 0
        %2574 = vmatpush1.bf16.msra.mxu0 0
        %2575 = vmatprep.subr.bf16.mxu0 0
        %2576 = vmatpush1.bf16.msra.mxu0 0
        %2577 = vmatprep.subr.bf16.mxu0 0
        %2578 = vmatpush1.bf16.msra.mxu0 0
        %2579 = vmatprep.subr.bf16.mxu0 0
        %2580 = vmatpush1.bf16.msra.mxu0 0
        %2581 = vmatprep.subr.bf16.mxu0 0
        %2582 = vmatpush1.bf16.msra.mxu0 0
        %2583 = vmatprep.subr.bf16.mxu0 0
        %2584 = vmatpush1.bf16.msra.mxu0 %v2564
        %2585 = vmatprep.subr.bf16.mxu0 0
        %2586 = vmatpush2.bf16.msra.mxu0 0
        %2587 = vmatprep.subr.bf16.mxu0 0
        %2588 = vmatpush2.bf16.msra.mxu0 0
        %2589 = vmatprep.subr.bf16.mxu0 0
        %2590 = vmatpush2.bf16.msra.mxu0 0
        %2591 = vmatprep.subr.bf16.mxu0 0
        %2592 = vmatpush2.bf16.msra.mxu0 0
        %2593 = vmatprep.subr.bf16.mxu0 0
        %2594 = vmatpush2.bf16.msra.mxu0 0
        %2595 = vmatprep.subr.bf16.mxu0 0
        %2596 = vmatpush2.bf16.msra.mxu0 0
        %2597 = vmatprep.subr.bf16.mxu0 0
        %2598 = vmatpush2.bf16.msra.mxu0 0
        %2599 = vmatprep.subr.bf16.mxu0 0
        %2600 = vmatpush2.bf16.msra.mxu0 0
        %2601 = vmatprep.mubr.bf16.mxu0 0
        %2602 = vmatmul.mubr.bf16.gmra.mxu0 %v2567
        %v2603 = vpop.f32.mrf.mxu0
        %v2604 = vadd.f32 %v2555, %v2603
        %v2605 = vpop.f32.mrf.mxu0
        %v2606 = vpop.f32.mrf.mxu0
        %v2607 = vpop.f32.mrf.mxu0
        %2608 = vdwg.mxu0
        %v2609 = vld [vmem:[#allocation12] sm:$0xf]
        %v2610 = vld [vmem:[#allocation12 + $0x4] sm:$0xf]
        %v2613 = vunpack.c.l.b16 %v2609
        %v2614 = vunpack.c.l.b16 %v2610
        %v2615 = vpack.c.b16 %v2614, %v2613
        %v2618 = vsel %vm1211, %v2492, 0
        %2620 = vmatprep.subr.bf16.mxu0 0
        %2621 = vmatpush1.bf16.msra.mxu0 0
        %2622 = vmatprep.subr.bf16.mxu0 0
        %2623 = vmatpush1.bf16.msra.mxu0 0
        %2624 = vmatprep.subr.bf16.mxu0 0
        %2625 = vmatpush1.bf16.msra.mxu0 0
        %2626 = vmatprep.subr.bf16.mxu0 0
        %2627 = vmatpush1.bf16.msra.mxu0 0
        %2628 = vmatprep.subr.bf16.mxu0 0
        %2629 = vmatpush1.bf16.msra.mxu0 0
        %2630 = vmatprep.subr.bf16.mxu0 0
        %2631 = vmatpush1.bf16.msra.mxu0 0
        %2632 = vmatprep.subr.bf16.mxu0 0
        %2633 = vmatpush1.bf16.msra.mxu0 0
        %2634 = vmatprep.subr.bf16.mxu0 0
        %2635 = vmatpush1.bf16.msra.mxu0 %v2615
        %2636 = vmatprep.subr.bf16.mxu0 0
        %2637 = vmatpush2.bf16.msra.mxu0 0
        %2638 = vmatprep.subr.bf16.mxu0 0
        %2639 = vmatpush2.bf16.msra.mxu0 0
        %2640 = vmatprep.subr.bf16.mxu0 0
        %2641 = vmatpush2.bf16.msra.mxu0 0
        %2642 = vmatprep.subr.bf16.mxu0 0
        %2643 = vmatpush2.bf16.msra.mxu0 0
        %2644 = vmatprep.subr.bf16.mxu0 0
        %2645 = vmatpush2.bf16.msra.mxu0 0
        %2646 = vmatprep.subr.bf16.mxu0 0
        %2647 = vmatpush2.bf16.msra.mxu0 0
        %2648 = vmatprep.subr.bf16.mxu0 0
        %2649 = vmatpush2.bf16.msra.mxu0 0
        %2650 = vmatprep.subr.bf16.mxu0 0
        %2651 = vmatpush2.bf16.msra.mxu0 0
        %2652 = vmatprep.mubr.bf16.mxu0 0
        %2653 = vmatmul.mubr.bf16.gmra.mxu0 %v2618
        %v2654 = vpop.f32.mrf.mxu0
        %v2655 = vadd.f32 0.0, %v2654
        %v2656 = vpop.f32.mrf.mxu0
        %v2657 = vpop.f32.mrf.mxu0
        %v2658 = vpop.f32.mrf.mxu0
        %2659 = vdwg.mxu0
        %v2660 = vadd.f32 %v2604, %v2655
        %v2661 = vld [vmem:[#allocation14] sm:$0xf]
        %v2662 = vld [vmem:[#allocation14 + $0x4] sm:$0xf]
        %v2663 = vld [vmem:[#allocation14 + $0x8] sm:$0xf]
        %v2664 = vld [vmem:[#allocation14 + $0xc] sm:$0xf]
        %v2669 = vunpack.c.l.b16 %v2661
        %v2670 = vunpack.c.l.b16 %v2662
        %v2671 = vunpack.c.l.b16 %v2663
        %v2672 = vunpack.c.l.b16 %v2664
        %v2673 = vpack.c.b16 %v2670, %v2669
        %v2674 = vpack.c.b16 %v2672, %v2671
        %2677 = vmatprep.subr.bf16.mxu0 0
        %2678 = vmatpush1.bf16.msra.mxu0 0
        %2679 = vmatprep.subr.bf16.mxu0 0
        %2680 = vmatpush1.bf16.msra.mxu0 0
        %2681 = vmatprep.subr.bf16.mxu0 0
        %2682 = vmatpush1.bf16.msra.mxu0 0
        %2683 = vmatprep.subr.bf16.mxu0 0
        %2684 = vmatpush1.bf16.msra.mxu0 0
        %2685 = vmatprep.subr.bf16.mxu0 0
        %2686 = vmatpush1.bf16.msra.mxu0 0
        %2687 = vmatprep.subr.bf16.mxu0 0
        %2688 = vmatpush1.bf16.msra.mxu0 0
        %2689 = vmatprep.subr.bf16.mxu0 0
        %2690 = vmatpush1.bf16.msra.mxu0 %v2674
        %2691 = vmatprep.subr.bf16.mxu0 0
        %2692 = vmatpush1.bf16.msra.mxu0 %v2673
        %2693 = vmatprep.subr.bf16.mxu0 0
        %2694 = vmatpush2.bf16.msra.mxu0 0
        %2695 = vmatprep.subr.bf16.mxu0 0
        %2696 = vmatpush2.bf16.msra.mxu0 0
        %2697 = vmatprep.subr.bf16.mxu0 0
        %2698 = vmatpush2.bf16.msra.mxu0 0
        %2699 = vmatprep.subr.bf16.mxu0 0
        %2700 = vmatpush2.bf16.msra.mxu0 0
        %2701 = vmatprep.subr.bf16.mxu0 0
        %2702 = vmatpush2.bf16.msra.mxu0 0
        %2703 = vmatprep.subr.bf16.mxu0 0
        %2704 = vmatpush2.bf16.msra.mxu0 0
        %2705 = vmatprep.subr.bf16.mxu0 0
        %2706 = vmatpush2.bf16.msra.mxu0 0
        %2707 = vmatprep.subr.bf16.mxu0 0
        %2708 = vmatpush2.bf16.msra.mxu0 0
        %2709 = vmatprep.mubr.bf16.mxu0 0
        %2710 = vmatmul.mubr.bf16.gmra.mxu0 %v1636
        %v2711 = vpop.f32.mrf.mxu0
        %v2712 = vadd.f32 0.0, %v2711
        %v2713 = vpop.f32.mrf.mxu0
        %v2714 = vpop.f32.mrf.mxu0
        %v2715 = vpop.f32.mrf.mxu0
        %2716 = vdwg.mxu0
        %v2717 = vadd.f32 %v2660, %v2712
        %v2718 = vld [vmem:[#allocation15] sm:$0x1]
        %v2720 = vlaneseq
        %v2721 = vshrl.u32 %v2720, 7
        %v2722 = vsub.s32 0, %v2721
        %v2723 = vrot.slane %v2718, %v2722
        %v2725 = vadd.f32 %v2717, %v2723
        %v2726 = vxor.u32 %v2725, 2147483648
        %v2727 = vmul.f32 %v2726, 1.442695
        %v2728 = vpow.pop %v2727
        %v2729 = vadd.f32 %v2728, 1.0
        %v2730 = vrcp.pop %v2729
        %v2731 = vmul.f32 1.0, %v2730
        %v2732 = vtanh.pop %v2725
        %v2733 = vmul.f32 %v2731, %v1393
        %2735 = vrot.lane.b32.xlu0 %v2732, 64
        %v2736 = vpop.permute.xlu0 %2735
        %v2738 = vmul.f32 %v2731, %v2736
        %2740 = vrot.lane.b32.xlu0 %v2738, 32
        %v2741 = vpop.permute.xlu0 %2740
        %v2743 = vadd.f32 %v2733, %v2741
        %v2744 = vtanh.pop %v2743
        %2746 = vrot.lane.b32.xlu0 %v2744, 64
        %v2747 = vpop.permute.xlu0 %2746
        %v2749 = vmul.f32 %v2731, %v2747
        %v2750 = vpack.c.bf16 %v2749, %v2749
        %v2751 = vld [vmem:[#allocation17] sm:$0xff]
        %v2752 = vld [vmem:[#allocation17 + $0x8] sm:$0xff]
        %v2753 = vld [vmem:[#allocation17 + $0x10] sm:$0xff]
        %v2754 = vld [vmem:[#allocation17 + $0x18] sm:$0xff]
        %v2755 = vld [vmem:[#allocation17 + $0x20] sm:$0xff]
        %v2756 = vld [vmem:[#allocation17 + $0x28] sm:$0xff]
        %v2757 = vld [vmem:[#allocation17 + $0x30] sm:$0xff]
        %v2758 = vld [vmem:[#allocation17 + $0x38] sm:$0xff]
        %v2759 = vld [vmem:[#allocation17 + $0x40] sm:$0xff]
        %v2760 = vld [vmem:[#allocation17 + $0x48] sm:$0xff]
        %v2761 = vld [vmem:[#allocation17 + $0x50] sm:$0xff]
        %v2762 = vld [vmem:[#allocation17 + $0x58] sm:$0xff]
        %v2763 = vld [vmem:[#allocation18] sm:$0xff]
        %v2764 = vld [vmem:[#allocation18 + $0x8] sm:$0xff]
        %v2765 = vld [vmem:[#allocation18 + $0x10] sm:$0xff]
        %v2766 = vld [vmem:[#allocation18 + $0x18] sm:$0xff]
        %v2767 = vld [vmem:[#allocation18 + $0x20] sm:$0xff]
        %v2768 = vld [vmem:[#allocation18 + $0x28] sm:$0xff]
        %v2775 = vunpack.c.l.b16 %v2763
        %v2776 = vunpack.c.h.b16 %v2763
        %v2777 = vunpack.c.l.b16 %v2764
        %v2778 = vunpack.c.h.b16 %v2764
        %v2779 = vunpack.c.l.b16 %v2765
        %v2780 = vunpack.c.h.b16 %v2765
        %v2781 = vunpack.c.l.b16 %v2766
        %v2782 = vunpack.c.h.b16 %v2766
        %v2783 = vunpack.c.l.b16 %v2767
        %v2784 = vunpack.c.h.b16 %v2767
        %v2785 = vunpack.c.l.b16 %v2768
        %v2786 = vunpack.c.h.b16 %v2768
        %v2787 = vpack.c.b16 %v2781, %v2775
        %v2788 = vpack.c.b16 %v2782, %v2776
        %v2789 = vpack.c.b16 %v2783, %v2777
        %v2790 = vpack.c.b16 %v2784, %v2778
        %v2791 = vpack.c.b16 %v2785, %v2779
        %v2792 = vpack.c.b16 %v2786, %v2780
        %2799 = vmatprep.subr.bf16.mxu0 0
        %2800 = vmatpush1.bf16.msra.mxu0 0
        %2801 = vmatprep.subr.bf16.mxu0 0
        %2802 = vmatpush1.bf16.msra.mxu0 0
        %2803 = vmatprep.subr.bf16.mxu0 0
        %2804 = vmatpush1.bf16.msra.mxu0 0
        %2805 = vmatprep.subr.bf16.mxu0 0
        %2806 = vmatpush1.bf16.msra.mxu0 0
        %2807 = vmatprep.subr.bf16.mxu0 0
        %2808 = vmatpush1.bf16.msra.mxu0 0
        %2809 = vmatprep.subr.bf16.mxu0 0
        %2810 = vmatpush1.bf16.msra.mxu0 0
        %2811 = vmatprep.subr.bf16.mxu0 0
        %2812 = vmatpush1.bf16.msra.mxu0 0
        %2813 = vmatprep.subr.bf16.mxu0 %v2788
        %2814 = vmatpush1.bf16.msra.mxu0 %v2787
        %2815 = vmatprep.subr.bf16.mxu0 0
        %2816 = vmatpush2.bf16.msra.mxu0 0
        %2817 = vmatprep.subr.bf16.mxu0 0
        %2818 = vmatpush2.bf16.msra.mxu0 0
        %2819 = vmatprep.subr.bf16.mxu0 0
        %2820 = vmatpush2.bf16.msra.mxu0 0
        %2821 = vmatprep.subr.bf16.mxu0 0
        %2822 = vmatpush2.bf16.msra.mxu0 0
        %2823 = vmatprep.subr.bf16.mxu0 0
        %2824 = vmatpush2.bf16.msra.mxu0 0
        %2825 = vmatprep.subr.bf16.mxu0 0
        %2826 = vmatpush2.bf16.msra.mxu0 0
        %2827 = vmatprep.subr.bf16.mxu0 0
        %2828 = vmatpush2.bf16.msra.mxu0 0
        %2829 = vmatprep.subr.bf16.mxu0 0
        %2830 = vmatpush2.bf16.msra.mxu0 0
        %2831 = vmatprep.mubr.bf16.mxu0 0
        %2832 = vmatmul.mubr.bf16.gmra.mxu0 %v2567
        %v2833 = vpop.f32.mrf.mxu0
        %v2834 = vadd.f32 0.0, %v2833
        %v2835 = vpop.f32.mrf.mxu0
        %v2836 = vadd.f32 0.0, %v2835
        %v2837 = vpop.f32.mrf.mxu0
        %v2838 = vpop.f32.mrf.mxu0
        %2839 = vdwg.mxu0
        %2840 = vmatprep.subr.bf16.mxu0 0
        %2841 = vmatpush1.bf16.msra.mxu0 0
        %2842 = vmatprep.subr.bf16.mxu0 0
        %2843 = vmatpush1.bf16.msra.mxu0 0
        %2844 = vmatprep.subr.bf16.mxu0 0
        %2845 = vmatpush1.bf16.msra.mxu0 0
        %2846 = vmatprep.subr.bf16.mxu0 0
        %2847 = vmatpush1.bf16.msra.mxu0 0
        %2848 = vmatprep.subr.bf16.mxu0 0
        %2849 = vmatpush1.bf16.msra.mxu0 0
        %2850 = vmatprep.subr.bf16.mxu0 0
        %2851 = vmatpush1.bf16.msra.mxu0 0
        %2852 = vmatprep.subr.bf16.mxu0 0
        %2853 = vmatpush1.bf16.msra.mxu0 0
        %2854 = vmatprep.subr.bf16.mxu0 %v2790
        %2855 = vmatpush1.bf16.msra.mxu0 %v2789
        %2856 = vmatprep.subr.bf16.mxu0 0
        %2857 = vmatpush2.bf16.msra.mxu0 0
        %2858 = vmatprep.subr.bf16.mxu0 0
        %2859 = vmatpush2.bf16.msra.mxu0 0
        %2860 = vmatprep.subr.bf16.mxu0 0
        %2861 = vmatpush2.bf16.msra.mxu0 0
        %2862 = vmatprep.subr.bf16.mxu0 0
        %2863 = vmatpush2.bf16.msra.mxu0 0
        %2864 = vmatprep.subr.bf16.mxu0 0
        %2865 = vmatpush2.bf16.msra.mxu0 0
        %2866 = vmatprep.subr.bf16.mxu0 0
        %2867 = vmatpush2.bf16.msra.mxu0 0
        %2868 = vmatprep.subr.bf16.mxu0 0
        %2869 = vmatpush2.bf16.msra.mxu0 0
        %2870 = vmatprep.subr.bf16.mxu0 0
        %2871 = vmatpush2.bf16.msra.mxu0 0
        %2872 = vmatprep.mubr.bf16.mxu0 0
        %2873 = vmatmul.mubr.bf16.gmra.mxu0 %v2567
        %v2874 = vpop.f32.mrf.mxu0
        %v2875 = vadd.f32 0.0, %v2874
        %v2876 = vpop.f32.mrf.mxu0
        %v2877 = vadd.f32 0.0, %v2876
        %v2878 = vpop.f32.mrf.mxu0
        %v2879 = vpop.f32.mrf.mxu0
        %2880 = vdwg.mxu0
        %2881 = vmatprep.subr.bf16.mxu0 0
        %2882 = vmatpush1.bf16.msra.mxu0 0
        %2883 = vmatprep.subr.bf16.mxu0 0
        %2884 = vmatpush1.bf16.msra.mxu0 0
        %2885 = vmatprep.subr.bf16.mxu0 0
        %2886 = vmatpush1.bf16.msra.mxu0 0
        %2887 = vmatprep.subr.bf16.mxu0 0
        %2888 = vmatpush1.bf16.msra.mxu0 0
        %2889 = vmatprep.subr.bf16.mxu0 0
        %2890 = vmatpush1.bf16.msra.mxu0 0
        %2891 = vmatprep.subr.bf16.mxu0 0
        %2892 = vmatpush1.bf16.msra.mxu0 0
        %2893 = vmatprep.subr.bf16.mxu0 0
        %2894 = vmatpush1.bf16.msra.mxu0 0
        %2895 = vmatprep.subr.bf16.mxu0 %v2792
        %2896 = vmatpush1.bf16.msra.mxu0 %v2791
        %2897 = vmatprep.subr.bf16.mxu0 0
        %2898 = vmatpush2.bf16.msra.mxu0 0
        %2899 = vmatprep.subr.bf16.mxu0 0
        %2900 = vmatpush2.bf16.msra.mxu0 0
        %2901 = vmatprep.subr.bf16.mxu0 0
        %2902 = vmatpush2.bf16.msra.mxu0 0
        %2903 = vmatprep.subr.bf16.mxu0 0
        %2904 = vmatpush2.bf16.msra.mxu0 0
        %2905 = vmatprep.subr.bf16.mxu0 0
        %2906 = vmatpush2.bf16.msra.mxu0 0
        %2907 = vmatprep.subr.bf16.mxu0 0
        %2908 = vmatpush2.bf16.msra.mxu0 0
        %2909 = vmatprep.subr.bf16.mxu0 0
        %2910 = vmatpush2.bf16.msra.mxu0 0
        %2911 = vmatprep.subr.bf16.mxu0 0
        %2912 = vmatpush2.bf16.msra.mxu0 0
        %2913 = vmatprep.mubr.bf16.mxu0 0
        %2914 = vmatmul.mubr.bf16.gmra.mxu0 %v2567
        %v2915 = vpop.f32.mrf.mxu0
        %v2916 = vadd.f32 0.0, %v2915
        %v2917 = vpop.f32.mrf.mxu0
        %v2918 = vadd.f32 0.0, %v2917
        %v2919 = vpop.f32.mrf.mxu0
        %v2920 = vpop.f32.mrf.mxu0
        %2921 = vdwg.mxu0
        %2923 = vrot.lane.b32.xlu0 %v2750, 32
        %v2924 = vpop.permute.xlu0 %2923
        %v2937 = vunpack.c.l.b16 %v2751
        %v2938 = vunpack.c.h.b16 %v2751
        %v2939 = vunpack.c.l.b16 %v2752
        %v2940 = vunpack.c.h.b16 %v2752
        %v2941 = vunpack.c.l.b16 %v2753
        %v2942 = vunpack.c.h.b16 %v2753
        %v2943 = vunpack.c.l.b16 %v2754
        %v2944 = vunpack.c.h.b16 %v2754
        %v2945 = vunpack.c.l.b16 %v2755
        %v2946 = vunpack.c.h.b16 %v2755
        %v2947 = vunpack.c.l.b16 %v2756
        %v2948 = vunpack.c.h.b16 %v2756
        %v2949 = vunpack.c.l.b16 %v2757
        %v2950 = vunpack.c.h.b16 %v2757
        %v2951 = vunpack.c.l.b16 %v2758
        %v2952 = vunpack.c.h.b16 %v2758
        %v2953 = vunpack.c.l.b16 %v2759
        %v2954 = vunpack.c.h.b16 %v2759
        %v2955 = vunpack.c.l.b16 %v2760
        %v2956 = vunpack.c.h.b16 %v2760
        %v2957 = vunpack.c.l.b16 %v2761
        %v2958 = vunpack.c.h.b16 %v2761
        %v2959 = vunpack.c.l.b16 %v2762
        %v2960 = vunpack.c.h.b16 %v2762
        %v2961 = vpack.c.b16 %v2943, %v2937
        %v2962 = vpack.c.b16 %v2944, %v2938
        %v2963 = vpack.c.b16 %v2945, %v2939
        %v2964 = vpack.c.b16 %v2946, %v2940
        %v2965 = vpack.c.b16 %v2947, %v2941
        %v2966 = vpack.c.b16 %v2948, %v2942
        %v2967 = vpack.c.b16 %v2955, %v2949
        %v2968 = vpack.c.b16 %v2956, %v2950
        %v2969 = vpack.c.b16 %v2957, %v2951
        %v2970 = vpack.c.b16 %v2958, %v2952
        %v2971 = vpack.c.b16 %v2959, %v2953
        %v2972 = vpack.c.b16 %v2960, %v2954
        %v2986 = vsel %vm955, %v2924, 0
        %2988 = vmatprep.subr.bf16.mxu0 0
        %2989 = vmatpush1.bf16.msra.mxu0 0
        %2990 = vmatprep.subr.bf16.mxu0 0
        %2991 = vmatpush1.bf16.msra.mxu0 0
        %2992 = vmatprep.subr.bf16.mxu0 0
        %2993 = vmatpush1.bf16.msra.mxu0 0
        %2994 = vmatprep.subr.bf16.mxu0 0
        %2995 = vmatpush1.bf16.msra.mxu0 0
        %2996 = vmatprep.subr.bf16.mxu0 0
        %2997 = vmatpush1.bf16.msra.mxu0 0
        %2998 = vmatprep.subr.bf16.mxu0 0
        %2999 = vmatpush1.bf16.msra.mxu0 0
        %3000 = vmatprep.subr.bf16.mxu0 %v2968
        %3001 = vmatpush1.bf16.msra.mxu0 %v2967
        %3002 = vmatprep.subr.bf16.mxu0 %v2962
        %3003 = vmatpush1.bf16.msra.mxu0 %v2961
        %3004 = vmatprep.subr.bf16.mxu0 0
        %3005 = vmatpush2.bf16.msra.mxu0 0
        %3006 = vmatprep.subr.bf16.mxu0 0
        %3007 = vmatpush2.bf16.msra.mxu0 0
        %3008 = vmatprep.subr.bf16.mxu0 0
        %3009 = vmatpush2.bf16.msra.mxu0 0
        %3010 = vmatprep.subr.bf16.mxu0 0
        %3011 = vmatpush2.bf16.msra.mxu0 0
        %3012 = vmatprep.subr.bf16.mxu0 0
        %3013 = vmatpush2.bf16.msra.mxu0 0
        %3014 = vmatprep.subr.bf16.mxu0 0
        %3015 = vmatpush2.bf16.msra.mxu0 0
        %3016 = vmatprep.subr.bf16.mxu0 0
        %3017 = vmatpush2.bf16.msra.mxu0 0
        %3018 = vmatprep.subr.bf16.mxu0 0
        %3019 = vmatpush2.bf16.msra.mxu0 0
        %3020 = vmatprep.mubr.bf16.mxu0 0
        %3021 = vmatmul.mubr.bf16.gmra.mxu0 %v2986
        %v3022 = vpop.f32.mrf.mxu0
        %v3023 = vadd.f32 %v2834, %v3022
        %v3024 = vpop.f32.mrf.mxu0
        %v3025 = vadd.f32 %v2836, %v3024
        %v3026 = vpop.f32.mrf.mxu0
        %v3027 = vpop.f32.mrf.mxu0
        %3028 = vdwg.mxu0
        %3029 = vmatprep.subr.bf16.mxu0 0
        %3030 = vmatpush1.bf16.msra.mxu0 0
        %3031 = vmatprep.subr.bf16.mxu0 0
        %3032 = vmatpush1.bf16.msra.mxu0 0
        %3033 = vmatprep.subr.bf16.mxu0 0
        %3034 = vmatpush1.bf16.msra.mxu0 0
        %3035 = vmatprep.subr.bf16.mxu0 0
        %3036 = vmatpush1.bf16.msra.mxu0 0
        %3037 = vmatprep.subr.bf16.mxu0 0
        %3038 = vmatpush1.bf16.msra.mxu0 0
        %3039 = vmatprep.subr.bf16.mxu0 0
        %3040 = vmatpush1.bf16.msra.mxu0 0
        %3041 = vmatprep.subr.bf16.mxu0 %v2970
        %3042 = vmatpush1.bf16.msra.mxu0 %v2969
        %3043 = vmatprep.subr.bf16.mxu0 %v2964
        %3044 = vmatpush1.bf16.msra.mxu0 %v2963
        %3045 = vmatprep.subr.bf16.mxu0 0
        %3046 = vmatpush2.bf16.msra.mxu0 0
        %3047 = vmatprep.subr.bf16.mxu0 0
        %3048 = vmatpush2.bf16.msra.mxu0 0
        %3049 = vmatprep.subr.bf16.mxu0 0
        %3050 = vmatpush2.bf16.msra.mxu0 0
        %3051 = vmatprep.subr.bf16.mxu0 0
        %3052 = vmatpush2.bf16.msra.mxu0 0
        %3053 = vmatprep.subr.bf16.mxu0 0
        %3054 = vmatpush2.bf16.msra.mxu0 0
        %3055 = vmatprep.subr.bf16.mxu0 0
        %3056 = vmatpush2.bf16.msra.mxu0 0
        %3057 = vmatprep.subr.bf16.mxu0 0
        %3058 = vmatpush2.bf16.msra.mxu0 0
        %3059 = vmatprep.subr.bf16.mxu0 0
        %3060 = vmatpush2.bf16.msra.mxu0 0
        %3061 = vmatprep.mubr.bf16.mxu0 0
        %3062 = vmatmul.mubr.bf16.gmra.mxu0 %v2986
        %v3063 = vpop.f32.mrf.mxu0
        %v3064 = vadd.f32 %v2875, %v3063
        %v3065 = vpop.f32.mrf.mxu0
        %v3066 = vadd.f32 %v2877, %v3065
        %v3067 = vpop.f32.mrf.mxu0
        %v3068 = vpop.f32.mrf.mxu0
        %3069 = vdwg.mxu0
        %3070 = vmatprep.subr.bf16.mxu0 0
        %3071 = vmatpush1.bf16.msra.mxu0 0
        %3072 = vmatprep.subr.bf16.mxu0 0
        %3073 = vmatpush1.bf16.msra.mxu0 0
        %3074 = vmatprep.subr.bf16.mxu0 0
        %3075 = vmatpush1.bf16.msra.mxu0 0
        %3076 = vmatprep.subr.bf16.mxu0 0
        %3077 = vmatpush1.bf16.msra.mxu0 0
        %3078 = vmatprep.subr.bf16.mxu0 0
        %3079 = vmatpush1.bf16.msra.mxu0 0
        %3080 = vmatprep.subr.bf16.mxu0 0
        %3081 = vmatpush1.bf16.msra.mxu0 0
        %3082 = vmatprep.subr.bf16.mxu0 %v2972
        %3083 = vmatpush1.bf16.msra.mxu0 %v2971
        %3084 = vmatprep.subr.bf16.mxu0 %v2966
        %3085 = vmatpush1.bf16.msra.mxu0 %v2965
        %3086 = vmatprep.subr.bf16.mxu0 0
        %3087 = vmatpush2.bf16.msra.mxu0 0
        %3088 = vmatprep.subr.bf16.mxu0 0
        %3089 = vmatpush2.bf16.msra.mxu0 0
        %3090 = vmatprep.subr.bf16.mxu0 0
        %3091 = vmatpush2.bf16.msra.mxu0 0
        %3092 = vmatprep.subr.bf16.mxu0 0
        %3093 = vmatpush2.bf16.msra.mxu0 0
        %3094 = vmatprep.subr.bf16.mxu0 0
        %3095 = vmatpush2.bf16.msra.mxu0 0
        %3096 = vmatprep.subr.bf16.mxu0 0
        %3097 = vmatpush2.bf16.msra.mxu0 0
        %3098 = vmatprep.subr.bf16.mxu0 0
        %3099 = vmatpush2.bf16.msra.mxu0 0
        %3100 = vmatprep.subr.bf16.mxu0 0
        %3101 = vmatpush2.bf16.msra.mxu0 0
        %3102 = vmatprep.mubr.bf16.mxu0 0
        %3103 = vmatmul.mubr.bf16.gmra.mxu0 %v2986
        %v3104 = vpop.f32.mrf.mxu0
        %v3105 = vadd.f32 %v2916, %v3104
        %v3106 = vpop.f32.mrf.mxu0
        %v3107 = vadd.f32 %v2918, %v3106
        %v3108 = vpop.f32.mrf.mxu0
        %v3109 = vpop.f32.mrf.mxu0
        %3110 = vdwg.mxu0
        %v3111 = vld [vmem:[#allocation20] sm:$0xff]
        %v3112 = vld [vmem:[#allocation20 + $0x8] sm:$0xff]
        %v3113 = vld [vmem:[#allocation20 + $0x10] sm:$0xff]
        %v3114 = vld [vmem:[#allocation20 + $0x18] sm:$0xff]
        %v3115 = vld [vmem:[#allocation20 + $0x20] sm:$0xff]
        %v3116 = vld [vmem:[#allocation20 + $0x28] sm:$0xff]
        %v3117 = vld [vmem:[#allocation20 + $0x30] sm:$0xff]
        %v3118 = vld [vmem:[#allocation20 + $0x38] sm:$0xff]
        %v3119 = vld [vmem:[#allocation20 + $0x40] sm:$0xff]
        %v3120 = vld [vmem:[#allocation20 + $0x48] sm:$0xff]
        %v3121 = vld [vmem:[#allocation20 + $0x50] sm:$0xff]
        %v3122 = vld [vmem:[#allocation20 + $0x58] sm:$0xff]
        %v3135 = vunpack.c.l.b16 %v3111
        %v3136 = vunpack.c.h.b16 %v3111
        %v3137 = vunpack.c.l.b16 %v3112
        %v3138 = vunpack.c.h.b16 %v3112
        %v3139 = vunpack.c.l.b16 %v3113
        %v3140 = vunpack.c.h.b16 %v3113
        %v3141 = vunpack.c.l.b16 %v3114
        %v3142 = vunpack.c.h.b16 %v3114
        %v3143 = vunpack.c.l.b16 %v3115
        %v3144 = vunpack.c.h.b16 %v3115
        %v3145 = vunpack.c.l.b16 %v3116
        %v3146 = vunpack.c.h.b16 %v3116
        %v3147 = vunpack.c.l.b16 %v3117
        %v3148 = vunpack.c.h.b16 %v3117
        %v3149 = vunpack.c.l.b16 %v3118
        %v3150 = vunpack.c.h.b16 %v3118
        %v3151 = vunpack.c.l.b16 %v3119
        %v3152 = vunpack.c.h.b16 %v3119
        %v3153 = vunpack.c.l.b16 %v3120
        %v3154 = vunpack.c.h.b16 %v3120
        %v3155 = vunpack.c.l.b16 %v3121
        %v3156 = vunpack.c.h.b16 %v3121
        %v3157 = vunpack.c.l.b16 %v3122
        %v3158 = vunpack.c.h.b16 %v3122
        %v3159 = vpack.c.b16 %v3141, %v3135
        %v3160 = vpack.c.b16 %v3142, %v3136
        %v3161 = vpack.c.b16 %v3143, %v3137
        %v3162 = vpack.c.b16 %v3144, %v3138
        %v3163 = vpack.c.b16 %v3145, %v3139
        %v3164 = vpack.c.b16 %v3146, %v3140
        %v3165 = vpack.c.b16 %v3153, %v3147
        %v3166 = vpack.c.b16 %v3154, %v3148
        %v3167 = vpack.c.b16 %v3155, %v3149
        %v3168 = vpack.c.b16 %v3156, %v3150
        %v3169 = vpack.c.b16 %v3157, %v3151
        %v3170 = vpack.c.b16 %v3158, %v3152
        %3183 = vmatprep.subr.bf16.mxu0 0
        %3184 = vmatpush1.bf16.msra.mxu0 0
        %3185 = vmatprep.subr.bf16.mxu0 0
        %3186 = vmatpush1.bf16.msra.mxu0 0
        %3187 = vmatprep.subr.bf16.mxu0 0
        %3188 = vmatpush1.bf16.msra.mxu0 0
        %3189 = vmatprep.subr.bf16.mxu0 0
        %3190 = vmatpush1.bf16.msra.mxu0 0
        %3191 = vmatprep.subr.bf16.mxu0 0
        %3192 = vmatpush1.bf16.msra.mxu0 0
        %3193 = vmatprep.subr.bf16.mxu0 0
        %3194 = vmatpush1.bf16.msra.mxu0 0
        %3195 = vmatprep.subr.bf16.mxu0 %v3166
        %3196 = vmatpush1.bf16.msra.mxu0 %v3165
        %3197 = vmatprep.subr.bf16.mxu0 %v3160
        %3198 = vmatpush1.bf16.msra.mxu0 %v3159
        %3199 = vmatprep.subr.bf16.mxu0 0
        %3200 = vmatpush2.bf16.msra.mxu0 0
        %3201 = vmatprep.subr.bf16.mxu0 0
        %3202 = vmatpush2.bf16.msra.mxu0 0
        %3203 = vmatprep.subr.bf16.mxu0 0
        %3204 = vmatpush2.bf16.msra.mxu0 0
        %3205 = vmatprep.subr.bf16.mxu0 0
        %3206 = vmatpush2.bf16.msra.mxu0 0
        %3207 = vmatprep.subr.bf16.mxu0 0
        %3208 = vmatpush2.bf16.msra.mxu0 0
        %3209 = vmatprep.subr.bf16.mxu0 0
        %3210 = vmatpush2.bf16.msra.mxu0 0
        %3211 = vmatprep.subr.bf16.mxu0 0
        %3212 = vmatpush2.bf16.msra.mxu0 0
        %3213 = vmatprep.subr.bf16.mxu0 0
        %3214 = vmatpush2.bf16.msra.mxu0 0
        %3215 = vmatprep.mubr.bf16.mxu0 0
        %3216 = vmatmul.mubr.bf16.gmra.mxu0 %v2518
        %v3217 = vpop.f32.mrf.mxu0
        %v3218 = vadd.f32 0.0, %v3217
        %v3219 = vpop.f32.mrf.mxu0
        %v3220 = vadd.f32 0.0, %v3219
        %v3221 = vpop.f32.mrf.mxu0
        %v3222 = vpop.f32.mrf.mxu0
        %3223 = vdwg.mxu0
        %3224 = vmatprep.subr.bf16.mxu0 0
        %3225 = vmatpush1.bf16.msra.mxu0 0
        %3226 = vmatprep.subr.bf16.mxu0 0
        %3227 = vmatpush1.bf16.msra.mxu0 0
        %3228 = vmatprep.subr.bf16.mxu0 0
        %3229 = vmatpush1.bf16.msra.mxu0 0
        %3230 = vmatprep.subr.bf16.mxu0 0
        %3231 = vmatpush1.bf16.msra.mxu0 0
        %3232 = vmatprep.subr.bf16.mxu0 0
        %3233 = vmatpush1.bf16.msra.mxu0 0
        %3234 = vmatprep.subr.bf16.mxu0 0
        %3235 = vmatpush1.bf16.msra.mxu0 0
        %3236 = vmatprep.subr.bf16.mxu0 %v3168
        %3237 = vmatpush1.bf16.msra.mxu0 %v3167
        %3238 = vmatprep.subr.bf16.mxu0 %v3162
        %3239 = vmatpush1.bf16.msra.mxu0 %v3161
        %3240 = vmatprep.subr.bf16.mxu0 0
        %3241 = vmatpush2.bf16.msra.mxu0 0
        %3242 = vmatprep.subr.bf16.mxu0 0
        %3243 = vmatpush2.bf16.msra.mxu0 0
        %3244 = vmatprep.subr.bf16.mxu0 0
        %3245 = vmatpush2.bf16.msra.mxu0 0
        %3246 = vmatprep.subr.bf16.mxu0 0
        %3247 = vmatpush2.bf16.msra.mxu0 0
        %3248 = vmatprep.subr.bf16.mxu0 0
        %3249 = vmatpush2.bf16.msra.mxu0 0
        %3250 = vmatprep.subr.bf16.mxu0 0
        %3251 = vmatpush2.bf16.msra.mxu0 0
        %3252 = vmatprep.subr.bf16.mxu0 0
        %3253 = vmatpush2.bf16.msra.mxu0 0
        %3254 = vmatprep.subr.bf16.mxu0 0
        %3255 = vmatpush2.bf16.msra.mxu0 0
        %3256 = vmatprep.mubr.bf16.mxu0 0
        %3257 = vmatmul.mubr.bf16.gmra.mxu0 %v2518
        %v3258 = vpop.f32.mrf.mxu0
        %v3259 = vadd.f32 0.0, %v3258
        %v3260 = vpop.f32.mrf.mxu0
        %v3261 = vadd.f32 0.0, %v3260
        %v3262 = vpop.f32.mrf.mxu0
        %v3263 = vpop.f32.mrf.mxu0
        %3264 = vdwg.mxu0
        %3265 = vmatprep.subr.bf16.mxu0 0
        %3266 = vmatpush1.bf16.msra.mxu0 0
        %3267 = vmatprep.subr.bf16.mxu0 0
        %3268 = vmatpush1.bf16.msra.mxu0 0
        %3269 = vmatprep.subr.bf16.mxu0 0
        %3270 = vmatpush1.bf16.msra.mxu0 0
        %3271 = vmatprep.subr.bf16.mxu0 0
        %3272 = vmatpush1.bf16.msra.mxu0 0
        %3273 = vmatprep.subr.bf16.mxu0 0
        %3274 = vmatpush1.bf16.msra.mxu0 0
        %3275 = vmatprep.subr.bf16.mxu0 0
        %3276 = vmatpush1.bf16.msra.mxu0 0
        %3277 = vmatprep.subr.bf16.mxu0 %v3170
        %3278 = vmatpush1.bf16.msra.mxu0 %v3169
        %3279 = vmatprep.subr.bf16.mxu0 %v3164
        %3280 = vmatpush1.bf16.msra.mxu0 %v3163
        %3281 = vmatprep.subr.bf16.mxu0 0
        %3282 = vmatpush2.bf16.msra.mxu0 0
        %3283 = vmatprep.subr.bf16.mxu0 0
        %3284 = vmatpush2.bf16.msra.mxu0 0
        %3285 = vmatprep.subr.bf16.mxu0 0
        %3286 = vmatpush2.bf16.msra.mxu0 0
        %3287 = vmatprep.subr.bf16.mxu0 0
        %3288 = vmatpush2.bf16.msra.mxu0 0
        %3289 = vmatprep.subr.bf16.mxu0 0
        %3290 = vmatpush2.bf16.msra.mxu0 0
        %3291 = vmatprep.subr.bf16.mxu0 0
        %3292 = vmatpush2.bf16.msra.mxu0 0
        %3293 = vmatprep.subr.bf16.mxu0 0
        %3294 = vmatpush2.bf16.msra.mxu0 0
        %3295 = vmatprep.subr.bf16.mxu0 0
        %3296 = vmatpush2.bf16.msra.mxu0 0
        %3297 = vmatprep.mubr.bf16.mxu0 0
        %3298 = vmatmul.mubr.bf16.gmra.mxu0 %v2518
        %v3299 = vpop.f32.mrf.mxu0
        %v3300 = vadd.f32 0.0, %v3299
        %v3301 = vpop.f32.mrf.mxu0
        %v3302 = vadd.f32 0.0, %v3301
        %v3303 = vpop.f32.mrf.mxu0
        %v3304 = vpop.f32.mrf.mxu0
        %3305 = vdwg.mxu0
        %v3306 = vadd.f32 %v3023, %v3218
        %v3307 = vadd.f32 %v3025, %v3220
        %v3308 = vadd.f32 %v3064, %v3259
        %v3309 = vadd.f32 %v3066, %v3261
        %v3310 = vadd.f32 %v3105, %v3300
        %v3311 = vadd.f32 %v3107, %v3302
        %v3312 = vld [vmem:[#allocation21] sm:$0xff]
        %v3313 = vld [vmem:[#allocation21 + $0x8] sm:$0xff]
        %v3314 = vld [vmem:[#allocation21 + $0x10] sm:$0xff]
        %v3315 = vld [vmem:[#allocation21 + $0x18] sm:$0xff]
        %v3316 = vld [vmem:[#allocation21 + $0x20] sm:$0xff]
        %v3317 = vld [vmem:[#allocation21 + $0x28] sm:$0xff]
        %v3324 = vunpack.c.l.b16 %v3312
        %v3325 = vunpack.c.h.b16 %v3312
        %v3326 = vunpack.c.l.b16 %v3313
        %v3327 = vunpack.c.h.b16 %v3313
        %v3328 = vunpack.c.l.b16 %v3314
        %v3329 = vunpack.c.h.b16 %v3314
        %v3330 = vunpack.c.l.b16 %v3315
        %v3331 = vunpack.c.h.b16 %v3315
        %v3332 = vunpack.c.l.b16 %v3316
        %v3333 = vunpack.c.h.b16 %v3316
        %v3334 = vunpack.c.l.b16 %v3317
        %v3335 = vunpack.c.h.b16 %v3317
        %v3336 = vpack.c.b16 %v3330, %v3324
        %v3337 = vpack.c.b16 %v3331, %v3325
        %v3338 = vpack.c.b16 %v3332, %v3326
        %v3339 = vpack.c.b16 %v3333, %v3327
        %v3340 = vpack.c.b16 %v3334, %v3328
        %v3341 = vpack.c.b16 %v3335, %v3329
        %3348 = vmatprep.subr.bf16.mxu0 0
        %3349 = vmatpush1.bf16.msra.mxu0 0
        %3350 = vmatprep.subr.bf16.mxu0 0
        %3351 = vmatpush1.bf16.msra.mxu0 0
        %3352 = vmatprep.subr.bf16.mxu0 0
        %3353 = vmatpush1.bf16.msra.mxu0 0
        %3354 = vmatprep.subr.bf16.mxu0 0
        %3355 = vmatpush1.bf16.msra.mxu0 0
        %3356 = vmatprep.subr.bf16.mxu0 0
        %3357 = vmatpush1.bf16.msra.mxu0 0
        %3358 = vmatprep.subr.bf16.mxu0 0
        %3359 = vmatpush1.bf16.msra.mxu0 0
        %3360 = vmatprep.subr.bf16.mxu0 0
        %3361 = vmatpush1.bf16.msra.mxu0 0
        %3362 = vmatprep.subr.bf16.mxu0 %v3337
        %3363 = vmatpush1.bf16.msra.mxu0 %v3336
        %3364 = vmatprep.subr.bf16.mxu0 0
        %3365 = vmatpush2.bf16.msra.mxu0 0
        %3366 = vmatprep.subr.bf16.mxu0 0
        %3367 = vmatpush2.bf16.msra.mxu0 0
        %3368 = vmatprep.subr.bf16.mxu0 0
        %3369 = vmatpush2.bf16.msra.mxu0 0
        %3370 = vmatprep.subr.bf16.mxu0 0
        %3371 = vmatpush2.bf16.msra.mxu0 0
        %3372 = vmatprep.subr.bf16.mxu0 0
        %3373 = vmatpush2.bf16.msra.mxu0 0
        %3374 = vmatprep.subr.bf16.mxu0 0
        %3375 = vmatpush2.bf16.msra.mxu0 0
        %3376 = vmatprep.subr.bf16.mxu0 0
        %3377 = vmatpush2.bf16.msra.mxu0 0
        %3378 = vmatprep.subr.bf16.mxu0 0
        %3379 = vmatpush2.bf16.msra.mxu0 0
        %3380 = vmatprep.mubr.bf16.mxu0 0
        %3381 = vmatmul.mubr.bf16.gmra.mxu0 %v2618
        %v3382 = vpop.f32.mrf.mxu0
        %v3383 = vadd.f32 0.0, %v3382
        %v3384 = vpop.f32.mrf.mxu0
        %v3385 = vadd.f32 0.0, %v3384
        %v3386 = vpop.f32.mrf.mxu0
        %v3387 = vpop.f32.mrf.mxu0
        %3388 = vdwg.mxu0
        %3389 = vmatprep.subr.bf16.mxu0 0
        %3390 = vmatpush1.bf16.msra.mxu0 0
        %3391 = vmatprep.subr.bf16.mxu0 0
        %3392 = vmatpush1.bf16.msra.mxu0 0
        %3393 = vmatprep.subr.bf16.mxu0 0
        %3394 = vmatpush1.bf16.msra.mxu0 0
        %3395 = vmatprep.subr.bf16.mxu0 0
        %3396 = vmatpush1.bf16.msra.mxu0 0
        %3397 = vmatprep.subr.bf16.mxu0 0
        %3398 = vmatpush1.bf16.msra.mxu0 0
        %3399 = vmatprep.subr.bf16.mxu0 0
        %3400 = vmatpush1.bf16.msra.mxu0 0
        %3401 = vmatprep.subr.bf16.mxu0 0
        %3402 = vmatpush1.bf16.msra.mxu0 0
        %3403 = vmatprep.subr.bf16.mxu0 %v3339
        %3404 = vmatpush1.bf16.msra.mxu0 %v3338
        %3405 = vmatprep.subr.bf16.mxu0 0
        %3406 = vmatpush2.bf16.msra.mxu0 0
        %3407 = vmatprep.subr.bf16.mxu0 0
        %3408 = vmatpush2.bf16.msra.mxu0 0
        %3409 = vmatprep.subr.bf16.mxu0 0
        %3410 = vmatpush2.bf16.msra.mxu0 0
        %3411 = vmatprep.subr.bf16.mxu0 0
        %3412 = vmatpush2.bf16.msra.mxu0 0
        %3413 = vmatprep.subr.bf16.mxu0 0
        %3414 = vmatpush2.bf16.msra.mxu0 0
        %3415 = vmatprep.subr.bf16.mxu0 0
        %3416 = vmatpush2.bf16.msra.mxu0 0
        %3417 = vmatprep.subr.bf16.mxu0 0
        %3418 = vmatpush2.bf16.msra.mxu0 0
        %3419 = vmatprep.subr.bf16.mxu0 0
        %3420 = vmatpush2.bf16.msra.mxu0 0
        %3421 = vmatprep.mubr.bf16.mxu0 0
        %3422 = vmatmul.mubr.bf16.gmra.mxu0 %v2618
        %v3423 = vpop.f32.mrf.mxu0
        %v3424 = vadd.f32 0.0, %v3423
        %v3425 = vpop.f32.mrf.mxu0
        %v3426 = vadd.f32 0.0, %v3425
        %v3427 = vpop.f32.mrf.mxu0
        %v3428 = vpop.f32.mrf.mxu0
        %3429 = vdwg.mxu0
        %3430 = vmatprep.subr.bf16.mxu0 0
        %3431 = vmatpush1.bf16.msra.mxu0 0
        %3432 = vmatprep.subr.bf16.mxu0 0
        %3433 = vmatpush1.bf16.msra.mxu0 0
        %3434 = vmatprep.subr.bf16.mxu0 0
        %3435 = vmatpush1.bf16.msra.mxu0 0
        %3436 = vmatprep.subr.bf16.mxu0 0
        %3437 = vmatpush1.bf16.msra.mxu0 0
        %3438 = vmatprep.subr.bf16.mxu0 0
        %3439 = vmatpush1.bf16.msra.mxu0 0
        %3440 = vmatprep.subr.bf16.mxu0 0
        %3441 = vmatpush1.bf16.msra.mxu0 0
        %3442 = vmatprep.subr.bf16.mxu0 0
        %3443 = vmatpush1.bf16.msra.mxu0 0
        %3444 = vmatprep.subr.bf16.mxu0 %v3341
        %3445 = vmatpush1.bf16.msra.mxu0 %v3340
        %3446 = vmatprep.subr.bf16.mxu0 0
        %3447 = vmatpush2.bf16.msra.mxu0 0
        %3448 = vmatprep.subr.bf16.mxu0 0
        %3449 = vmatpush2.bf16.msra.mxu0 0
        %3450 = vmatprep.subr.bf16.mxu0 0
        %3451 = vmatpush2.bf16.msra.mxu0 0
        %3452 = vmatprep.subr.bf16.mxu0 0
        %3453 = vmatpush2.bf16.msra.mxu0 0
        %3454 = vmatprep.subr.bf16.mxu0 0
        %3455 = vmatpush2.bf16.msra.mxu0 0
        %3456 = vmatprep.subr.bf16.mxu0 0
        %3457 = vmatpush2.bf16.msra.mxu0 0
        %3458 = vmatprep.subr.bf16.mxu0 0
        %3459 = vmatpush2.bf16.msra.mxu0 0
        %3460 = vmatprep.subr.bf16.mxu0 0
        %3461 = vmatpush2.bf16.msra.mxu0 0
        %3462 = vmatprep.mubr.bf16.mxu0 0
        %3463 = vmatmul.mubr.bf16.gmra.mxu0 %v2618
        %v3464 = vpop.f32.mrf.mxu0
        %v3465 = vadd.f32 0.0, %v3464
        %v3466 = vpop.f32.mrf.mxu0
        %v3467 = vadd.f32 0.0, %v3466
        %v3468 = vpop.f32.mrf.mxu0
        %v3469 = vpop.f32.mrf.mxu0
        %3470 = vdwg.mxu0
        %v3471 = vadd.f32 %v3306, %v3383
        %v3472 = vadd.f32 %v3307, %v3385
        %v3473 = vadd.f32 %v3308, %v3424
        %v3474 = vadd.f32 %v3309, %v3426
        %v3475 = vadd.f32 %v3310, %v3465
        %v3476 = vadd.f32 %v3311, %v3467
        %v3477 = vld [vmem:[#allocation23] sm:$0x3f]
        %v3479 = vlaneseq
        %v3480 = vshrl.u32 %v3479, 7
        %v3481 = vsub.s32 0, %v3480
        %v3482 = vrot.slane %v3477, %v3481
        %v3483 = vlaneseq
        %v3484 = vshrl.u32 %v3483, 7
        %v3485 = vsub.s32 1, %v3484
        %v3486 = vrot.slane %v3477, %v3485
        %v3487 = vlaneseq
        %v3488 = vshrl.u32 %v3487, 7
        %v3489 = vsub.s32 2, %v3488
        %v3490 = vrot.slane %v3477, %v3489
        %v3491 = vlaneseq
        %v3492 = vshrl.u32 %v3491, 7
        %v3493 = vsub.s32 3, %v3492
        %v3494 = vrot.slane %v3477, %v3493
        %v3495 = vlaneseq
        %v3496 = vshrl.u32 %v3495, 7
        %v3497 = vsub.s32 4, %v3496
        %v3498 = vrot.slane %v3477, %v3497
        %v3499 = vlaneseq
        %v3500 = vshrl.u32 %v3499, 7
        %v3501 = vsub.s32 5, %v3500
        %v3502 = vrot.slane %v3477, %v3501
        %v3509 = vadd.f32 %v3471, %v3482
        %v3510 = vadd.f32 %v3472, %v3486
        %v3511 = vadd.f32 %v3473, %v3490
        %v3512 = vadd.f32 %v3474, %v3494
        %v3513 = vadd.f32 %v3475, %v3498
        %v3514 = vadd.f32 %v3476, %v3502
        %v3515 = vxor.u32 %v3509, 2147483648
        %v3516 = vmul.f32 %v3515, 1.442695
        %v3517 = vpow.pop %v3516
        %v3518 = vadd.f32 %v3517, 1.0
        %v3519 = vrcp.pop %v3518
        %v3520 = vmul.f32 1.0, %v3519
        %s3521 = scalar_lea.vmem %s896, 12
        %3522 = vst [vmem:[%s3521] sm:$0x3] %v3520
        %3523 = vst [vmem:[%s3521 + $0x2] sm:$0x3] %v3510
        %v3524 = vmax.f32 %v3511, 0.0
        %v3525 = vmax.f32 %v3512, 0.0
        %v3526 = vmax.f32 %v3513, 0.0
        %v3527 = vmax.f32 %v3514, 0.0
        %v3532 = vcombine.low %v3524, %v3525
        %v3533 = vcombine.low %v3526, %v3527
        %v3535 = vunpack.c.l.s4 1983009808
        %v3536 = vunpack.c.0.s8 %v3535
        %v3537 = vlaneseq
        %v3538 = vshrl.u32 %v3537, 7
        %v3539 = vsub.s32 %v3536, %v3538
        %v3540 = vrot.slane %v3532, %v3539
        %v3542 = vunpack.c.l.s4 1983009808
        %v3543 = vunpack.c.0.s8 %v3542
        %v3544 = vlaneseq
        %v3545 = vshrl.u32 %v3544, 7
        %v3546 = vsub.s32 %v3543, %v3545
        %v3547 = vrot.slane %v3533, %v3546
        %v3548 = vcombine.low %v3540, %v3547
        %3550 = vst [vmem:[%s3521 + $0x4] sm:$0xff] %v3548
        %v3551 = vlaneseq
        %v3552 = vshrl.u32 %v3551, 7
        %v3553 = vsub.s32 %v926, %v3552
        %v3554 = vrot.slane %v2467, %v3553
        %v3555 = vlaneseq
        %v3556 = vshrl.u32 %v3555, 7
        %v3557 = vsub.s32 %v926, %v3556
        %v3558 = vrot.slane %v2472, %v3557
        %v3559 = vsel %vm1050, %v3558, %v3554
        %s3561 = scalar_lea.vmem %s902, 2
        %3562 = vst.msk [vmem:[%s3561] sm:$0x3] %vm1053, %v3559
        %v3563 = vsel %vm2211, %v3510, -inf
        %3564 = vmax.xlane.f32.xlu0 %v3563
        %v3565 = vpop.xlane.xlu0 %3564
        %vm3566 = vcmp.eq.f32.partialorder %v3510, %v3565
        %v3567 = vsel %vm3566, %v926, 12
        %v3568 = vsel %vm2211, %v3567, 2147483647
        %v3569 = vand.u32 %v3568, 65535
        %v3570 = vshra.s32 %v3568, 16
        %v3571 = vcvt.s32.f32 %v3569
        %v3572 = vcvt.s32.f32 %v3570
        %3573 = vmin.xlane.f32.xlu0 %v3572
        %v3574 = vpop.xlane.xlu0 %3573
        %vm3575 = vcmp.eq.f32.partialorder %v3572, %v3574
        %v3576 = vsel %vm3575, %v3571, inf
        %3577 = vmin.xlane.f32.xlu0 %v3576
        %v3578 = vpop.xlane.xlu0 %3577
        %v3579 = vcvt.f32.s32 %v3578
        %v3580 = vcvt.f32.s32 %v3574
        %v3581 = vshll.u32 %v3580, 16
        %v3582 = vadd.s32 %v3581, %v3579
        %vm3583 = vcmp.eq.s32.totalorder %v926, %v3582
        %v3584 = vsel %vm3583, 1, 0
        %v3585 = vcvt.s32.f32 %v3584
        %v3586 = vpack.c.bf16 %v3585, %v3585
        %v3587 = vld [vmem:[#allocation24] sm:$0xf]
        %v3588 = vld [vmem:[#allocation24 + $0x4] sm:$0x3]
        %v3591 = vunpack.c.l.b16 %v3587
        %v3592 = vunpack.c.l.b16 %v3588
        %v3593 = vpack.c.b16 %v3592, %v3591
        %v3595 = vsel %vm2243, %v3586, 0
        %v3598 = vsel %vm2247, %v3593, 0
        %3600 = vmatprep.subr.bf16.mxu0 0
        %3601 = vmatpush1.bf16.msra.mxu0 0
        %3602 = vmatprep.subr.bf16.mxu0 0
        %3603 = vmatpush1.bf16.msra.mxu0 0
        %3604 = vmatprep.subr.bf16.mxu0 0
        %3605 = vmatpush1.bf16.msra.mxu0 0
        %3606 = vmatprep.subr.bf16.mxu0 0
        %3607 = vmatpush1.bf16.msra.mxu0 0
        %3608 = vmatprep.subr.bf16.mxu0 0
        %3609 = vmatpush1.bf16.msra.mxu0 0
        %3610 = vmatprep.subr.bf16.mxu0 0
        %3611 = vmatpush1.bf16.msra.mxu0 0
        %3612 = vmatprep.subr.bf16.mxu0 0
        %3613 = vmatpush1.bf16.msra.mxu0 0
        %3614 = vmatprep.subr.bf16.mxu0 0
        %3615 = vmatpush1.bf16.msra.mxu0 %v3598
        %3616 = vmatprep.subr.bf16.mxu0 0
        %3617 = vmatpush2.bf16.msra.mxu0 0
        %3618 = vmatprep.subr.bf16.mxu0 0
        %3619 = vmatpush2.bf16.msra.mxu0 0
        %3620 = vmatprep.subr.bf16.mxu0 0
        %3621 = vmatpush2.bf16.msra.mxu0 0
        %3622 = vmatprep.subr.bf16.mxu0 0
        %3623 = vmatpush2.bf16.msra.mxu0 0
        %3624 = vmatprep.subr.bf16.mxu0 0
        %3625 = vmatpush2.bf16.msra.mxu0 0
        %3626 = vmatprep.subr.bf16.mxu0 0
        %3627 = vmatpush2.bf16.msra.mxu0 0
        %3628 = vmatprep.subr.bf16.mxu0 0
        %3629 = vmatpush2.bf16.msra.mxu0 0
        %3630 = vmatprep.subr.bf16.mxu0 0
        %3631 = vmatpush2.bf16.msra.mxu0 0
        %3632 = vmatprep.mubr.bf16.mxu0 0
        %3633 = vmatmul.mubr.bf16.gmra.mxu0 %v3595
        %v3634 = vpop.f32.mrf.mxu0
        %v3635 = vadd.f32 0.0, %v3634
        %v3636 = vpop.f32.mrf.mxu0
        %v3637 = vpop.f32.mrf.mxu0
        %v3638 = vpop.f32.mrf.mxu0
        %3639 = vdwg.mxu0
        %3641 = vrot.lane.b32.xlu0 %v2749, 32
        %v3642 = vpop.permute.xlu0 %3641
        %vm3644 = vcmask 254976
        %3645 = vst.msk [vmem:[#allocation30] sm:$0x3] %vm3644, %v3642
        %3647 = vrot.lane.b32.xlu0 %v2743, 96
        %v3648 = vpop.permute.xlu0 %3647
        %3650 = vst.msk [vmem:[#allocation31] sm:$0x3] %vm3644, %v3648
        %vm3651 = vcmask 123904
        %3652 = vst.msk [vmem:[#allocation2] sm:$0x3] %vm3651, %v3635
        %s3653 = smul.u32 2, %s44
        %p3654 = scmp.lt.s32.totalorder %s3653, 3
        %s3655 = scalar_select %p3654, %s3653, 3
        %s3656 = smul.addr %s3655, 6
        %s3657 = smul.addr %s3656, 2
        %s3658 = scalar_lea.vmem %s18, %s3657
        %s3659 = smul.u32 2, %s44
        %p3660 = scmp.lt.s32.totalorder %s3659, 3
        %s3661 = scalar_select %p3660, %s3659, 3
        %s3662 = smul.addr %s3661, 2
        %s3663 = scalar_lea.vmem %s19, %s3662
        // Predicated region
        $region165: #{forward.5} parent=91 // pred_check
          %p3664 = pneg %p445
        $region166: #{forward.5} parent=91 // pred_check_branch
          %3666 = sbr.rel (%p3664) target = $region168
        $region167: #{forward.5} parent=91 // pred_region
          %s3667 = smul.u32 2, %s44
        $region168: #{forward.5} parent=91 // pred_fallthru
          _
        // Predicated region
        $region169: #{forward.5} parent=91 // pred_check
          %p3668 = pneg %p471
        $region170: #{forward.5} parent=91 // pred_check_branch
          %3670 = sbr.rel (%p3668) target = $region172
        $region171: #{forward.5} parent=91 // pred_region
          %s3671 = smul.u32 2, %s44
        $region172: #{forward.5} parent=91 // pred_fallthru
          _
        // Predicated region
        $region173: #{forward.5} parent=91 // pred_check
          %p3672 = pneg %p492
        $region174: #{forward.5} parent=91 // pred_check_branch
          %3674 = sbr.rel (%p3672) target = $region176
        $region175: #{forward.5} parent=91 // pred_region
          %s3676 = ssub.s32 32, 32
          %3677 = vsyncadd [#allocation5], %s3676
          %s3679 = sshll.u32 [#allocation30], 4
          %s3680 = int_to_ptr.vmem [resolvable:$true] %s3679
          %3682 = dma.vmem_to_hbm [thread:$0]  %s3680, 32, %s20, [#allocation5]
        $region176: #{forward.5} parent=91 // pred_fallthru
          _
        // Predicated region
        $region177: #{forward.5} parent=91 // pred_check
          %p3683 = pneg %p513
        $region178: #{forward.5} parent=91 // pred_check_branch
          %3685 = sbr.rel (%p3683) target = $region180
        $region179: #{forward.5} parent=91 // pred_region
          %s3687 = ssub.s32 32, 32
          %3688 = vsyncadd [#allocation32], %s3687
          %s3690 = sshll.u32 [#allocation31], 4
          %s3691 = int_to_ptr.vmem [resolvable:$true] %s3690
          %3693 = dma.vmem_to_hbm [thread:$0]  %s3691, 32, %s21, [#allocation32]
        $region180: #{forward.5} parent=91 // pred_fallthru
          _
        // Predicated region
        $region181: #{forward.5} parent=91 // pred_check
          %p3694 = pneg %p492
        $region182: #{forward.5} parent=91 // pred_check_branch
          %3696 = sbr.rel (%p3694) target = $region184
        $region183: #{forward.5} parent=91 // pred_region
          %3697 = dma.done [#allocation5], 32
        $region184: #{forward.5} parent=91 // pred_fallthru
          _
        // Predicated region
        $region185: #{forward.5} parent=91 // pred_check
          %p3698 = pneg %p513
        $region186: #{forward.5} parent=91 // pred_check_branch
          %3700 = sbr.rel (%p3698) target = $region188
        $region187: #{forward.5} parent=91 // pred_region
          %3701 = dma.done [#allocation32], 32
        $region188: #{forward.5} parent=91 // pred_fallthru
          _
      $region92: #{forward.5} parent=5 // pred_fallthru
        _
      %p3702 = scmp.le.s32.totalorder 2, %s39
      // Predicated region
      $region189: #{forward.5} parent=5 // pred_check
        %p3703 = pneg %p3702
      $region190: #{forward.5} parent=5 // pred_check_branch
        %3705 = sbr.rel (%p3703) target = $region192
      $region191: #{forward.5} parent=5 // pred_region
        %s3706 = ssub.s32 %s39, 2
        // Predicated region
        $region193: #{forward.5} parent=191 // pred_check
          %p3707 = pneg %p451
        $region194: #{forward.5} parent=191 // pred_check_branch
          %3709 = sbr.rel (%p3707) target = $region196
        $region195: #{forward.5} parent=191 // pred_region
          %s3710 = smul.u32 2, %s45
          %p3711 = scmp.lt.s32.totalorder %s3710, 3
          %s3712 = scalar_select %p3711, %s3710, 3
          %s3713 = smul.addr %s3712, 6
          %s3714 = smul.addr %s3713, 2
          %s3715 = scalar_lea.vmem %s18, %s3714
        $region196: #{forward.5} parent=191 // pred_fallthru
          _
        // Predicated region
        $region197: #{forward.5} parent=191 // pred_check
          %p3716 = pneg %p477
        $region198: #{forward.5} parent=191 // pred_check_branch
          %3718 = sbr.rel (%p3716) target = $region200
        $region199: #{forward.5} parent=191 // pred_region
          %s3719 = smul.u32 2, %s45
          %p3720 = scmp.lt.s32.totalorder %s3719, 3
          %s3721 = scalar_select %p3720, %s3719, 3
          %s3722 = smul.addr %s3721, 2
          %s3723 = scalar_lea.vmem %s19, %s3722
        $region200: #{forward.5} parent=191 // pred_fallthru
          _
      $region192: #{forward.5} parent=5 // pred_fallthru
        _
    $region6: #{forward.5} parent=1 // loop_footer
      %s43 = sadd.s32 1, %s39
    $region7: #{forward.5} parent=1 // loop_footer_branch
      %38 = sbr.rel target = $region3
    $region8: #{forward.5} parent=1 // loop_exit
      _
    %3724 = vsyncpa [#allocation4], 1
    %s3725 = scalar_lea.sflag [#allocation4], 1
    %3726 = vsyncpa %s3725, 1
    %3727 = vsyncpa [#allocation7], 1
    %3728 = vsyncpa [#allocation10], 1
    %3729 = vsyncpa [#allocation13], 1
    %3730 = vsyncpa [#allocation16], 1
    %3731 = vsyncpa [#allocation19], 1
    %3732 = vsyncpa [#allocation22], 1
    %3733 = vsyncpa [#allocation25], 1
    %3734 = vsyncpa [#allocation28], 1
    %3735 = vsyncpa [#allocation5], 1
    %s3736 = scalar_lea.sflag [#allocation5], 1
    %3737 = vsyncpa %s3736, 1
    %3738 = vsyncpa [#allocation32], 1

</llo_original>
